<compile_context>
chip_gen: v5e
topology: v5e:2x2
jax: 0.10.0
libtpu: 0.0.40
codegen_flags: <defaults>
</compile_context>

<pallas_src>
import math

import jax
import jax.numpy as jnp
from jax.experimental import pallas as pl
from jax.experimental.pallas import tpu as pltpu

_EPS = 1e-5        # torch LayerNorm default
_ROW = 128         # node/edge rows padded to a multiple of this (row tile)
_OUT_DIM = 2       # decoder output size (module spec)


def _round_up(x, m):
    return (x + m - 1) // m * m


# -----------------------------------------------------------------------------
# Kernels
# -----------------------------------------------------------------------------
def _mlp_ln_kernel(x_ref, w1_ref, b1_ref, w2_ref, b2_ref, g_ref, be_ref, o_ref):
    """Encoder embedding: LayerNorm(ReLU(x @ W1 + b1) @ W2 + b2), row tile."""
    x = x_ref[...].astype(jnp.bfloat16)
    h = jnp.dot(x, w1_ref[...], preferred_element_type=jnp.float32) + b1_ref[...]
    h = jnp.maximum(h, 0.0).astype(jnp.bfloat16)
    y = jnp.dot(h, w2_ref[...], preferred_element_type=jnp.float32) + b2_ref[...]
    mu = jnp.mean(y, axis=-1, keepdims=True)
    var = jnp.mean(jnp.square(y - mu), axis=-1, keepdims=True)
    o_ref[...] = (y - mu) * jax.lax.rsqrt(var + _EPS) * g_ref[...] + be_ref[...]


def _processor_kernel(hn0_ref, he0_ref, gs_ref, gd_ref, w_ref, v_ref,
                      eb_ref, nb_ref, hn_ref, he_ref):
    """All MeshGraphNetsConv layers; grid axis 0 = layer (state stays in VMEM).

    w_ref : (1, 7, H, H) bf16  [We_hs, We_hd, We_he, We2, Wn_h, Wn_a, Wn2]
    v_ref : (1, 6, H)    f32   [be2_e, e_gain, e_beta, bn2, n_gain, n_beta]
    eb_ref: (1, E, H)    f32   per-layer edge pre-act bias (FV terms folded in)
    nb_ref: (1, N, H)    f32   per-layer node pre-act bias (FV terms folded in)
    """
    l = pl.program_id(0)

    @pl.when(l == 0)
    def _():
        hn_ref[...] = hn0_ref[...]
        he_ref[...] = he0_ref[...]

    hn = hn_ref[...]                       # (N, H) f32 resident state
    he = he_ref[...]                       # (E, H) f32 resident state
    hn_b = hn.astype(jnp.bfloat16)
    he_b = he.astype(jnp.bfloat16)
    gs = gs_ref[...]                       # (E, N) bf16 one-hot of senders
    gd = gd_ref[...]                       # (E, N) bf16 one-hot of receivers

    we_hs = w_ref[0, 0]
    we_hd = w_ref[0, 1]
    we_he = w_ref[0, 2]
    we_2 = w_ref[0, 3]
    wn_h = w_ref[0, 4]
    wn_a = w_ref[0, 5]
    wn_2 = w_ref[0, 6]

    # ---- edge update --------------------------------------------------------
    # cat(h_src, fv_src, h_dst, fv_dst, h_edge, fv_edge) @ We1 + be1, with the
    # FV / bias terms pre-folded into eb_ref.  Gather re-associated:
    # gs @ (h_node @ W) — cheaper than (gs @ h_node) @ W when E > N.
    p_s = jnp.dot(hn_b, we_hs, preferred_element_type=jnp.float32).astype(jnp.bfloat16)
    p_d = jnp.dot(hn_b, we_hd, preferred_element_type=jnp.float32).astype(jnp.bfloat16)
    t = (jnp.dot(gs, p_s, preferred_element_type=jnp.float32)
         + jnp.dot(gd, p_d, preferred_element_type=jnp.float32)
         + jnp.dot(he_b, we_he, preferred_element_type=jnp.float32)
         + eb_ref[0])
    t = jnp.maximum(t, 0.0).astype(jnp.bfloat16)
    y = jnp.dot(t, we_2, preferred_element_type=jnp.float32) + v_ref[0, 0:1]
    mu = jnp.mean(y, axis=-1, keepdims=True)
    var = jnp.mean(jnp.square(y - mu), axis=-1, keepdims=True)
    e_new = ((y - mu) * jax.lax.rsqrt(var + _EPS) * v_ref[0, 1:2]
             + v_ref[0, 2:3] + he)                                  # residual
    he_ref[...] = e_new

    # ---- node update --------------------------------------------------------
    # scatter-add over receivers: gd^T @ e_new (transpose never materialized).
    agg = jax.lax.dot_general(gd, e_new.astype(jnp.bfloat16),
                              (((0,), (0,)), ((), ())),
                              preferred_element_type=jnp.float32)   # (N, H)
    u = (jnp.dot(hn_b, wn_h, preferred_element_type=jnp.float32)
         + jnp.dot(agg.astype(jnp.bfloat16), wn_a, preferred_element_type=jnp.float32)
         + nb_ref[0])
    u = jnp.maximum(u, 0.0).astype(jnp.bfloat16)
    z = jnp.dot(u, wn_2, preferred_element_type=jnp.float32) + v_ref[0, 3:4]
    mu2 = jnp.mean(z, axis=-1, keepdims=True)
    var2 = jnp.mean(jnp.square(z - mu2), axis=-1, keepdims=True)
    hn_ref[...] = ((z - mu2) * jax.lax.rsqrt(var2 + _EPS) * v_ref[0, 4:5]
                   + v_ref[0, 5:6] + hn)                            # residual


def _decoder_kernel(hn_ref, nfv_ref, w1h_ref, w1f_ref, b1_ref, w2_ref, b2_ref, o_ref):
    """MLP([H+1, H+1, out]) on cat(h_node, node_FV); widths zero-padded to lanes."""
    hn = hn_ref[...].astype(jnp.bfloat16)
    t = (jnp.dot(hn, w1h_ref[...], preferred_element_type=jnp.float32)
         + nfv_ref[...] * w1f_ref[...]
         + b1_ref[...])
    t = jnp.maximum(t, 0.0).astype(jnp.bfloat16)
    o_ref[...] = jnp.dot(t, w2_ref[...], preferred_element_type=jnp.float32) + b2_ref[...]


# -----------------------------------------------------------------------------
# pallas_call wrappers
# -----------------------------------------------------------------------------
def _mlp_ln(x, p, *, tile_rows=_ROW):
    rows, d_in = x.shape
    h = p["w2"].shape[1]
    return pl.pallas_call(
        _mlp_ln_kernel,
        out_shape=jax.ShapeDtypeStruct((rows, h), jnp.float32),
        grid=(rows // tile_rows,),
        in_specs=[
            pl.BlockSpec((tile_rows, d_in), lambda i: (i, 0)),
            pl.BlockSpec((d_in, h), lambda i: (0, 0)),
            pl.BlockSpec((1, h), lambda i: (0, 0)),
            pl.BlockSpec((h, h), lambda i: (0, 0)),
            pl.BlockSpec((1, h), lambda i: (0, 0)),
            pl.BlockSpec((1, h), lambda i: (0, 0)),
            pl.BlockSpec((1, h), lambda i: (0, 0)),
        ],
        out_specs=pl.BlockSpec((tile_rows, h), lambda i: (i, 0)),
        compiler_params=pltpu.CompilerParams(
            dimension_semantics=("parallel",)),
    )(x, p["w1"], p["b1"], p["w2"], p["b2"], p["g"], p["b"])


def _processor(h_node0, h_edge0, gs, gd, w_all, v_all, ebias, nbias):
    n, h = h_node0.shape
    e = h_edge0.shape[0]
    num_layers = w_all.shape[0]
    return pl.pallas_call(
        _processor_kernel,
        out_shape=(jax.ShapeDtypeStruct((n, h), jnp.float32),
                   jax.ShapeDtypeStruct((e, h), jnp.float32)),
        grid=(num_layers,),
        in_specs=[
            pl.BlockSpec((n, h), lambda l: (0, 0)),        # initial h_node (loaded once)
            pl.BlockSpec((e, h), lambda l: (0, 0)),        # initial h_edge (loaded once)
            pl.BlockSpec((e, n), lambda l: (0, 0)),        # gs (resident across layers)
            pl.BlockSpec((e, n), lambda l: (0, 0)),        # gd (resident across layers)
            pl.BlockSpec((1, 7, h, h), lambda l: (l, 0, 0, 0)),   # per-layer weights
            pl.BlockSpec((1, 6, h), lambda l: (l, 0, 0)),         # per-layer LN/bias vecs
            pl.BlockSpec((1, e, h), lambda l: (l, 0, 0)),         # per-layer edge bias
            pl.BlockSpec((1, n, h), lambda l: (l, 0, 0)),         # per-layer node bias
        ],
        out_specs=(pl.BlockSpec((n, h), lambda l: (0, 0)),        # resident state
                   pl.BlockSpec((e, h), lambda l: (0, 0))),
        compiler_params=pltpu.CompilerParams(
            dimension_semantics=("arbitrary",),
            vmem_limit_bytes=64 * 1024 * 1024),
    )(h_node0, h_edge0, gs, gd, w_all, v_all, ebias, nbias)


def _decode(h_node, nfv, p, *, tile_rows=_ROW):
    rows, h = h_node.shape
    hd = p["w1_h"].shape[1]
    outp = p["w2"].shape[1]
    return pl.pallas_call(
        _decoder_kernel,
        out_shape=jax.ShapeDtypeStruct((rows, outp), jnp.float32),
        grid=(rows // tile_rows,),
        in_specs=[
            pl.BlockSpec((tile_rows, h), lambda i: (i, 0)),
            pl.BlockSpec((tile_rows, 1), lambda i: (i, 0)),
            pl.BlockSpec((h, hd), lambda i: (0, 0)),
            pl.BlockSpec((1, hd), lambda i: (0, 0)),
            pl.BlockSpec((1, hd), lambda i: (0, 0)),
            pl.BlockSpec((hd, outp), lambda i: (0, 0)),
            pl.BlockSpec((1, outp), lambda i: (0, 0)),
        ],
        out_specs=pl.BlockSpec((tile_rows, outp), lambda i: (i, 0)),
        compiler_params=pltpu.CompilerParams(
            dimension_semantics=("parallel",)),
    )(h_node, nfv, p["w1_h"], p["w1_f"], p["b1"], p["w2"], p["b2"])


# -----------------------------------------------------------------------------
# Forward pass
# -----------------------------------------------------------------------------
def fv_mgn_forward(params, x, edge_attr, node_FV, edge_FV, edge_index):
    f32 = jnp.float32
    n, _ = x.shape
    e, _ = edge_attr.shape
    np_ = _round_up(n, _ROW)
    ep_ = _round_up(e, _ROW)

    # --- pad rows (padded edges are masked out of the scatter; padded nodes
    #     are never referenced by real edges; outputs are sliced at the end) --
    xp = jnp.pad(x.astype(f32), ((0, np_ - n), (0, 0)))
    nfvp = jnp.pad(node_FV.astype(f32), ((0, np_ - n), (0, 0)))
    eap = jnp.pad(edge_attr.astype(f32), ((0, ep_ - e), (0, 0)))
    efvp = jnp.pad(edge_FV.astype(f32), ((0, ep_ - e), (0, 0)))

    src = jnp.pad(edge_index[0], (0, ep_ - e))
    dst = jnp.pad(edge_index[1], (0, ep_ - e))
    valid = (jnp.arange(ep_) < e).astype(f32)[:, None]

    # one-hot gather/scatter operators in bf16 (0/1 exact); built once, kept
    # resident in VMEM for all processor layers.  No transposed copy is made.
    gs = (jax.nn.one_hot(src, np_, dtype=f32) * valid).astype(jnp.bfloat16)
    gd = (jax.nn.one_hot(dst, np_, dtype=f32) * valid).astype(jnp.bfloat16)

    # endpoint FV scalars (constant across layers) — hoisted out of the kernel.
    fs = jnp.take(nfvp, src, axis=0) * valid          # (E, 1)
    fd = jnp.take(nfvp, dst, axis=0) * valid          # (E, 1)

    # fold every per-layer constant tiny-K contraction into dense bias slabs.
    pp = params["proc"]
    ebias = (jnp.einsum("ef,lfh->leh", efvp, pp["we_fe"])
             + fs[None] * pp["we_fs"] + fd[None] * pp["we_fd"] + pp["be1"])
    nbias = nfvp[None] * pp["wn_f"] + pp["bn1"]

    # --- encoder -------------------------------------------------------------
    x_cat = jnp.concatenate([xp, nfvp], axis=1)       # (N, node_in + 1)
    e_cat = jnp.concatenate([eap, efvp], axis=1)      # (E, edge_in + 6)
    h_node0 = _mlp_ln(x_cat, params["enc_node"])
    h_edge0 = _mlp_ln(e_cat, params["enc_edge"])

    # --- processor: all conv layers fused in a single pallas_call ------------
    h_node, _ = _processor(h_node0, h_edge0, gs, gd,
                           pp["W"], pp["V"], ebias, nbias)

    # --- decoder -------------------------------------------------------------
    out = _decode(h_node, nfvp, params["dec"])
    return out[:n, :_OUT_DIM]


# -----------------------------------------------------------------------------
# Deterministic parameter init (PyTorch Linear default-style uniform)
# -----------------------------------------------------------------------------
def _linear(key, fan_in, fan_out):
    kw, kb = jax.random.split(key)
    bound = 1.0 / math.sqrt(fan_in)
    w = jax.random.uniform(kw, (fan_in, fan_out), jnp.float32, -bound, bound)
    b = jax.random.uniform(kb, (fan_out,), jnp.float32, -bound, bound)
    return w, b


def init_params(key, node_in, edge_in, hidden, num_convs=15, out_dim=_OUT_DIM):
    assert hidden % 128 == 0, "hidden size must be a multiple of 128 (lane width)"
    h = hidden
    f32, bf16 = jnp.float32, jnp.bfloat16
    keys = jax.random.split(key, 3 + num_convs)

    def mlp_ln_params(k, d_in):
        k1, k2 = jax.random.split(k)
        w1, b1 = _linear(k1, d_in, h)
        w2, b2 = _linear(k2, h, h)
        return dict(w1=w1.astype(bf16), b1=b1[None, :],
                    w2=w2.astype(bf16), b2=b2[None, :],
                    g=jnp.ones((1, h), f32), b=jnp.zeros((1, h), f32))

    enc_node = mlp_ln_params(keys[0], node_in + 1)
    enc_edge = mlp_ln_params(keys[1], edge_in + 6)

    # --- processor: stacked per-layer params ---------------------------------
    w_l, v_l = [], []
    we_fe_l, we_fs_l, we_fd_l, be1_l, wn_f_l, bn1_l = [], [], [], [], [], []
    ones, zeros = jnp.ones((h,), f32), jnp.zeros((h,), f32)
    for i in range(num_convs):
        k1, k2, k3, k4 = jax.random.split(keys[3 + i], 4)
        we1, be1 = _linear(k1, 3 * h + 8, h)      # edge MLP layer 1 (in = 3H + 8)
        we2, be2 = _linear(k2, h, h)              # edge MLP layer 2
        wn1, bn1 = _linear(k3, 2 * h + 1, h)      # node MLP layer 1 (in = 2H + 1)
        wn2, bn2 = _linear(k4, h, h)              # node MLP layer 2
        # split We1 along cat(h_src, fv_src, h_dst, fv_dst, h_edge, fv_edge)
        we_hs, we_fs = we1[0:h], we1[h:h + 1]
        we_hd, we_fd = we1[h + 1:2 * h + 1], we1[2 * h + 1:2 * h + 2]
        we_he, we_fe = we1[2 * h + 2:3 * h + 2], we1[3 * h + 2:3 * h + 8]
        # split Wn1 along cat(h_node, fv_node, agg)
        wn_h, wn_f, wn_a = wn1[0:h], wn1[h:h + 1], wn1[h + 1:2 * h + 1]

        w_l.append(jnp.stack([we_hs, we_hd, we_he, we2, wn_h, wn_a, wn2]))
        v_l.append(jnp.stack([be2, ones, zeros, bn2, ones, zeros]))  # [be2,eg,eb,bn2,ng,nb]
        we_fe_l.append(we_fe)
        we_fs_l.append(we_fs)
        we_fd_l.append(we_fd)
        be1_l.append(be1[None, :])
        wn_f_l.append(wn_f)
        bn1_l.append(bn1[None, :])

    proc = dict(
        W=jnp.stack(w_l).astype(bf16),     # (L, 7, H, H)
        V=jnp.stack(v_l).astype(f32),      # (L, 6, H)
        we_fe=jnp.stack(we_fe_l),          # (L, 6, H)   (folded into ebias in fwd)
        we_fs=jnp.stack(we_fs_l),          # (L, 1, H)
        we_fd=jnp.stack(we_fd_l),          # (L, 1, H)
        be1=jnp.stack(be1_l),              # (L, 1, H)
        wn_f=jnp.stack(wn_f_l),            # (L, 1, H)   (folded into nbias in fwd)
        bn1=jnp.stack(bn1_l),              # (L, 1, H)
    )

    # --- decoder: MLP([H+1, H+1, out]); widths zero-padded to lane multiples --
    kd1, kd2 = jax.random.split(keys[2])
    w1, b1 = _linear(kd1, h + 1, h + 1)
    w2, b2 = _linear(kd2, h + 1, out_dim)
    hd = _round_up(h + 1, 128)
    outp = _round_up(out_dim, 128)
    dec = dict(
        w1_h=jnp.pad(w1[:h], ((0, 0), (0, hd - (h + 1)))).astype(bf16),       # (H, HD)
        w1_f=jnp.pad(w1[h:h + 1], ((0, 0), (0, hd - (h + 1)))),               # (1, HD)
        b1=jnp.pad(b1[None, :], ((0, 0), (0, hd - (h + 1)))),                 # (1, HD)
        w2=jnp.pad(w2, ((0, hd - (h + 1)), (0, outp - out_dim))).astype(bf16),  # (HD, OUTP)
        b2=jnp.pad(b2[None, :], ((0, 0), (0, outp - out_dim))),               # (1, OUTP)
    )

    return dict(enc_node=enc_node, enc_edge=enc_edge, proc=proc, dec=dec)


# -----------------------------------------------------------------------------
if __name__ == "__main__":
    key = jax.random.PRNGKey(0)
    N, E = 16, 32                 # small graph: 16 nodes, 32 edges
    NODE_IN, EDGE_IN = 3, 3
    HIDDEN = 128                  # module default hidden_size (lane-aligned)
    NUM_CONVS = 15

    ks = jax.random.split(key, 6)
    x = jax.random.normal(ks[0], (N, NODE_IN), jnp.float32)
    edge_attr = jax.random.normal(ks[1], (E, EDGE_IN), jnp.float32)
    node_FV = jax.random.normal(ks[2], (N, 1), jnp.float32)
    edge_FV = jax.random.normal(ks[3], (E, 6), jnp.float32)
    edge_index = jax.random.randint(ks[4], (2, E), 0, N)

    params = init_params(ks[5], NODE_IN, EDGE_IN, HIDDEN, num_convs=NUM_CONVS)

    fwd = jax.jit(fv_mgn_forward)
    out = fwd(params, x, edge_attr, node_FV, edge_FV, edge_index)
    out = jax.block_until_ready(out)
    assert out.shape == (N, _OUT_DIM) and out.dtype == jnp.float32
    print("KERNEL_OK")
</pallas_src>

<mosaic_0001>
module attributes {stable_mosaic.version = 11 : i64} {
  func.func @_mlp_ln_kernel(%arg0: i32, %arg1: memref<128x4xf32, #tpu.memory_space<vmem>>, %arg2: memref<4x128xbf16, #tpu.memory_space<vmem>>, %arg3: memref<1x128xf32, #tpu.memory_space<vmem>>, %arg4: memref<128x128xbf16, #tpu.memory_space<vmem>>, %arg5: memref<1x128xf32, #tpu.memory_space<vmem>>, %arg6: memref<1x128xf32, #tpu.memory_space<vmem>>, %arg7: memref<1x128xf32, #tpu.memory_space<vmem>>, %arg8: memref<128x128xf32, #tpu.memory_space<vmem>>) attributes {dimension_semantics = [#tpu.dimension_semantics<parallel>], iteration_bounds = array<i64: 1>, scalar_prefetch = 0 : i64, scratch_operands = 0 : i64, tpu.core_type = #tpu.core_type<tc>, window_params = [{transform_indices = @transform_0, window_bounds = array<i64: 128, 4>}, {pipeline_mode = #tpu.pipeline_mode<synchronous>, transform_indices = @transform_1, window_bounds = array<i64: 4, 128>}, {pipeline_mode = #tpu.pipeline_mode<synchronous>, transform_indices = @transform_2, window_bounds = array<i64: 1, 128>}, {pipeline_mode = #tpu.pipeline_mode<synchronous>, transform_indices = @transform_3, window_bounds = array<i64: 128, 128>}, {pipeline_mode = #tpu.pipeline_mode<synchronous>, transform_indices = @transform_4, window_bounds = array<i64: 1, 128>}, {pipeline_mode = #tpu.pipeline_mode<synchronous>, transform_indices = @transform_5, window_bounds = array<i64: 1, 128>}, {pipeline_mode = #tpu.pipeline_mode<synchronous>, transform_indices = @transform_6, window_bounds = array<i64: 1, 128>}, {transform_indices = @transform_7, window_bounds = array<i64: 128, 128>}]} {
    %c0 = arith.constant 0 : index
    %c0_0 = arith.constant 0 : index
    %0 = vector.load %arg1[%c0, %c0_0] : memref<128x4xf32, #tpu.memory_space<vmem>>, vector<128x4xf32>
    %1 = arith.truncf %0 : vector<128x4xf32> to vector<128x4xbf16>
    %c0_1 = arith.constant 0 : index
    %c0_2 = arith.constant 0 : index
    %2 = vector.load %arg2[%c0_1, %c0_2] : memref<4x128xbf16, #tpu.memory_space<vmem>>, vector<4x128xbf16>
    %cst = arith.constant dense<0.000000e+00> : vector<128x128xf32>
    %3 = tpu.matmul %1, %2, %cst {dimension_numbers = #tpu.dot_dimension_numbers<[1], [0], [0], [1], [0, 0, 1, 1], [], []>} : vector<128x4xbf16>, vector<4x128xbf16>, vector<128x128xf32> -> vector<128x128xf32>
    %c0_3 = arith.constant 0 : index
    %c0_4 = arith.constant 0 : index
    %4 = vector.load %arg3[%c0_3, %c0_4] : memref<1x128xf32, #tpu.memory_space<vmem>>, vector<1x128xf32>
    %5 = vector.broadcast %4 : vector<1x128xf32> to vector<128x128xf32>
    %6 = arith.addf %3, %5 : vector<128x128xf32>
    %cst_5 = arith.constant 0.000000e+00 : f32
    %7 = vector.broadcast %cst_5 : f32 to vector<128x128xf32>
    %8 = arith.maximumf %6, %7 : vector<128x128xf32>
    %9 = arith.truncf %8 : vector<128x128xf32> to vector<128x128xbf16>
    %c0_6 = arith.constant 0 : index
    %c0_7 = arith.constant 0 : index
    %10 = vector.load %arg4[%c0_6, %c0_7] : memref<128x128xbf16, #tpu.memory_space<vmem>>, vector<128x128xbf16>
    %cst_8 = arith.constant dense<0.000000e+00> : vector<128x128xf32>
    %11 = tpu.matmul %9, %10, %cst_8 {dimension_numbers = #tpu.dot_dimension_numbers<[1], [0], [0], [1], [0, 0, 1, 1], [], []>} : vector<128x128xbf16>, vector<128x128xbf16>, vector<128x128xf32> -> vector<128x128xf32>
    %c0_9 = arith.constant 0 : index
    %c0_10 = arith.constant 0 : index
    %12 = vector.load %arg5[%c0_9, %c0_10] : memref<1x128xf32, #tpu.memory_space<vmem>>, vector<1x128xf32>
    %13 = vector.broadcast %12 : vector<1x128xf32> to vector<128x128xf32>
    %14 = arith.addf %11, %13 : vector<128x128xf32>
    %cst_11 = arith.constant dense<0.000000e+00> : vector<128xf32>
    %15 = vector.multi_reduction <add>, %14, %cst_11 [1] : vector<128x128xf32> to vector<128xf32>
    %16 = vector.shape_cast %15 : vector<128xf32> to vector<128x1xf32>
    %cst_12 = arith.constant 1.280000e+02 : f32
    %17 = vector.broadcast %cst_12 : f32 to vector<128x1xf32>
    %18 = arith.divf %16, %17 : vector<128x1xf32>
    %19 = vector.broadcast %18 : vector<128x1xf32> to vector<128x128xf32>
    %20 = arith.subf %14, %19 : vector<128x128xf32>
    %21 = arith.mulf %20, %20 : vector<128x128xf32>
    %cst_13 = arith.constant dense<0.000000e+00> : vector<128xf32>
    %22 = vector.multi_reduction <add>, %21, %cst_13 [1] : vector<128x128xf32> to vector<128xf32>
    %23 = vector.shape_cast %22 : vector<128xf32> to vector<128x1xf32>
    %cst_14 = arith.constant 1.280000e+02 : f32
    %24 = vector.broadcast %cst_14 : f32 to vector<128x1xf32>
    %25 = arith.divf %23, %24 : vector<128x1xf32>
    %26 = vector.broadcast %18 : vector<128x1xf32> to vector<128x128xf32>
    %27 = arith.subf %14, %26 : vector<128x128xf32>
    %cst_15 = arith.constant 9.99999974E-6 : f32
    %28 = vector.broadcast %cst_15 : f32 to vector<128x1xf32>
    %29 = arith.addf %25, %28 : vector<128x1xf32>
    %30 = math.rsqrt %29 : vector<128x1xf32>
    %31 = vector.broadcast %30 : vector<128x1xf32> to vector<128x128xf32>
    %32 = arith.mulf %27, %31 : vector<128x128xf32>
    %c0_16 = arith.constant 0 : index
    %c0_17 = arith.constant 0 : index
    %33 = vector.load %arg6[%c0_16, %c0_17] : memref<1x128xf32, #tpu.memory_space<vmem>>, vector<1x128xf32>
    %34 = vector.broadcast %33 : vector<1x128xf32> to vector<128x128xf32>
    %35 = arith.mulf %32, %34 : vector<128x128xf32>
    %c0_18 = arith.constant 0 : index
    %c0_19 = arith.constant 0 : index
    %36 = vector.load %arg7[%c0_18, %c0_19] : memref<1x128xf32, #tpu.memory_space<vmem>>, vector<1x128xf32>
    %37 = vector.broadcast %36 : vector<1x128xf32> to vector<128x128xf32>
    %38 = arith.addf %35, %37 : vector<128x128xf32>
    %c0_20 = arith.constant 0 : index
    %c0_21 = arith.constant 0 : index
    %39 = vector.load %arg8[%c0_20, %c0_21] : memref<128x128xf32, #tpu.memory_space<vmem>>, vector<128x128xf32>
    tpu.vector_store %arg8[%c0_20, %c0_21], %38 {strides = array<i32>} : memref<128x128xf32, #tpu.memory_space<vmem>>, vector<128x128xf32>,
    return
  }
  func.func @transform_0(%arg0: i32) -> (i32, i32) {
    %c0_i32 = arith.constant 0 : i32
    %c0_i32_0 = arith.constant 0 : i32
    return %arg0, %c0_i32 : i32, i32
  }
  func.func @transform_1(%arg0: i32) -> (i32, i32) {
    %c0_i32 = arith.constant 0 : i32
    %c0_i32_0 = arith.constant 0 : i32
    %c0_i32_1 = arith.constant 0 : i32
    return %c0_i32, %c0_i32_0 : i32, i32
  }
  func.func @transform_2(%arg0: i32) -> (i32, i32) {
    %c0_i32 = arith.constant 0 : i32
    %c0_i32_0 = arith.constant 0 : i32
    %c0_i32_1 = arith.constant 0 : i32
    return %c0_i32, %c0_i32_0 : i32, i32
  }
  func.func @transform_3(%arg0: i32) -> (i32, i32) {
    %c0_i32 = arith.constant 0 : i32
    %c0_i32_0 = arith.constant 0 : i32
    %c0_i32_1 = arith.constant 0 : i32
    return %c0_i32, %c0_i32_0 : i32, i32
  }
  func.func @transform_4(%arg0: i32) -> (i32, i32) {
    %c0_i32 = arith.constant 0 : i32
    %c0_i32_0 = arith.constant 0 : i32
    %c0_i32_1 = arith.constant 0 : i32
    return %c0_i32, %c0_i32_0 : i32, i32
  }
  func.func @transform_5(%arg0: i32) -> (i32, i32) {
    %c0_i32 = arith.constant 0 : i32
    %c0_i32_0 = arith.constant 0 : i32
    %c0_i32_1 = arith.constant 0 : i32
    return %c0_i32, %c0_i32_0 : i32, i32
  }
  func.func @transform_6(%arg0: i32) -> (i32, i32) {
    %c0_i32 = arith.constant 0 : i32
    %c0_i32_0 = arith.constant 0 : i32
    %c0_i32_1 = arith.constant 0 : i32
    return %c0_i32, %c0_i32_0 : i32, i32
  }
  func.func @transform_7(%arg0: i32) -> (i32, i32) {
    %c0_i32 = arith.constant 0 : i32
    %c0_i32_0 = arith.constant 0 : i32
    return %arg0, %c0_i32 : i32, i32
  }
}

module attributes {stable_mosaic.version = 11 : i64} {
  func.func @_mlp_ln_kernel(%arg0: i32, %arg1: memref<128x9xf32, #tpu.memory_space<vmem>>, %arg2: memref<9x128xbf16, #tpu.memory_space<vmem>>, %arg3: memref<1x128xf32, #tpu.memory_space<vmem>>, %arg4: memref<128x128xbf16, #tpu.memory_space<vmem>>, %arg5: memref<1x128xf32, #tpu.memory_space<vmem>>, %arg6: memref<1x128xf32, #tpu.memory_space<vmem>>, %arg7: memref<1x128xf32, #tpu.memory_space<vmem>>, %arg8: memref<128x128xf32, #tpu.memory_space<vmem>>) attributes {dimension_semantics = [#tpu.dimension_semantics<parallel>], iteration_bounds = array<i64: 1>, scalar_prefetch = 0 : i64, scratch_operands = 0 : i64, tpu.core_type = #tpu.core_type<tc>, window_params = [{transform_indices = @transform_0, window_bounds = array<i64: 128, 9>}, {pipeline_mode = #tpu.pipeline_mode<synchronous>, transform_indices = @transform_1, window_bounds = array<i64: 9, 128>}, {pipeline_mode = #tpu.pipeline_mode<synchronous>, transform_indices = @transform_2, window_bounds = array<i64: 1, 128>}, {pipeline_mode = #tpu.pipeline_mode<synchronous>, transform_indices = @transform_3, window_bounds = array<i64: 128, 128>}, {pipeline_mode = #tpu.pipeline_mode<synchronous>, transform_indices = @transform_4, window_bounds = array<i64: 1, 128>}, {pipeline_mode = #tpu.pipeline_mode<synchronous>, transform_indices = @transform_5, window_bounds = array<i64: 1, 128>}, {pipeline_mode = #tpu.pipeline_mode<synchronous>, transform_indices = @transform_6, window_bounds = array<i64: 1, 128>}, {transform_indices = @transform_7, window_bounds = array<i64: 128, 128>}]} {
    %c0 = arith.constant 0 : index
    %c0_0 = arith.constant 0 : index
    %0 = vector.load %arg1[%c0, %c0_0] : memref<128x9xf32, #tpu.memory_space<vmem>>, vector<128x9xf32>
    %1 = arith.truncf %0 : vector<128x9xf32> to vector<128x9xbf16>
    %c0_1 = arith.constant 0 : index
    %c0_2 = arith.constant 0 : index
    %2 = vector.load %arg2[%c0_1, %c0_2] : memref<9x128xbf16, #tpu.memory_space<vmem>>, vector<9x128xbf16>
    %cst = arith.constant dense<0.000000e+00> : vector<128x128xf32>
    %3 = tpu.matmul %1, %2, %cst {dimension_numbers = #tpu.dot_dimension_numbers<[1], [0], [0], [1], [0, 0, 1, 1], [], []>} : vector<128x9xbf16>, vector<9x128xbf16>, vector<128x128xf32> -> vector<128x128xf32>
    %c0_3 = arith.constant 0 : index
    %c0_4 = arith.constant 0 : index
    %4 = vector.load %arg3[%c0_3, %c0_4] : memref<1x128xf32, #tpu.memory_space<vmem>>, vector<1x128xf32>
    %5 = vector.broadcast %4 : vector<1x128xf32> to vector<128x128xf32>
    %6 = arith.addf %3, %5 : vector<128x128xf32>
    %cst_5 = arith.constant 0.000000e+00 : f32
    %7 = vector.broadcast %cst_5 : f32 to vector<128x128xf32>
    %8 = arith.maximumf %6, %7 : vector<128x128xf32>
    %9 = arith.truncf %8 : vector<128x128xf32> to vector<128x128xbf16>
    %c0_6 = arith.constant 0 : index
    %c0_7 = arith.constant 0 : index
    %10 = vector.load %arg4[%c0_6, %c0_7] : memref<128x128xbf16, #tpu.memory_space<vmem>>, vector<128x128xbf16>
    %cst_8 = arith.constant dense<0.000000e+00> : vector<128x128xf32>
    %11 = tpu.matmul %9, %10, %cst_8 {dimension_numbers = #tpu.dot_dimension_numbers<[1], [0], [0], [1], [0, 0, 1, 1], [], []>} : vector<128x128xbf16>, vector<128x128xbf16>, vector<128x128xf32> -> vector<128x128xf32>
    %c0_9 = arith.constant 0 : index
    %c0_10 = arith.constant 0 : index
    %12 = vector.load %arg5[%c0_9, %c0_10] : memref<1x128xf32, #tpu.memory_space<vmem>>, vector<1x128xf32>
    %13 = vector.broadcast %12 : vector<1x128xf32> to vector<128x128xf32>
    %14 = arith.addf %11, %13 : vector<128x128xf32>
    %cst_11 = arith.constant dense<0.000000e+00> : vector<128xf32>
    %15 = vector.multi_reduction <add>, %14, %cst_11 [1] : vector<128x128xf32> to vector<128xf32>
    %16 = vector.shape_cast %15 : vector<128xf32> to vector<128x1xf32>
    %cst_12 = arith.constant 1.280000e+02 : f32
    %17 = vector.broadcast %cst_12 : f32 to vector<128x1xf32>
    %18 = arith.divf %16, %17 : vector<128x1xf32>
    %19 = vector.broadcast %18 : vector<128x1xf32> to vector<128x128xf32>
    %20 = arith.subf %14, %19 : vector<128x128xf32>
    %21 = arith.mulf %20, %20 : vector<128x128xf32>
    %cst_13 = arith.constant dense<0.000000e+00> : vector<128xf32>
    %22 = vector.multi_reduction <add>, %21, %cst_13 [1] : vector<128x128xf32> to vector<128xf32>
    %23 = vector.shape_cast %22 : vector<128xf32> to vector<128x1xf32>
    %cst_14 = arith.constant 1.280000e+02 : f32
    %24 = vector.broadcast %cst_14 : f32 to vector<128x1xf32>
    %25 = arith.divf %23, %24 : vector<128x1xf32>
    %26 = vector.broadcast %18 : vector<128x1xf32> to vector<128x128xf32>
    %27 = arith.subf %14, %26 : vector<128x128xf32>
    %cst_15 = arith.constant 9.99999974E-6 : f32
    %28 = vector.broadcast %cst_15 : f32 to vector<128x1xf32>
    %29 = arith.addf %25, %28 : vector<128x1xf32>
    %30 = math.rsqrt %29 : vector<128x1xf32>
    %31 = vector.broadcast %30 : vector<128x1xf32> to vector<128x128xf32>
    %32 = arith.mulf %27, %31 : vector<128x128xf32>
    %c0_16 = arith.constant 0 : index
    %c0_17 = arith.constant 0 : index
    %33 = vector.load %arg6[%c0_16, %c0_17] : memref<1x128xf32, #tpu.memory_space<vmem>>, vector<1x128xf32>
    %34 = vector.broadcast %33 : vector<1x128xf32> to vector<128x128xf32>
    %35 = arith.mulf %32, %34 : vector<128x128xf32>
    %c0_18 = arith.constant 0 : index
    %c0_19 = arith.constant 0 : index
    %36 = vector.load %arg7[%c0_18, %c0_19] : memref<1x128xf32, #tpu.memory_space<vmem>>, vector<1x128xf32>
    %37 = vector.broadcast %36 : vector<1x128xf32> to vector<128x128xf32>
    %38 = arith.addf %35, %37 : vector<128x128xf32>
    %c0_20 = arith.constant 0 : index
    %c0_21 = arith.constant 0 : index
    %39 = vector.load %arg8[%c0_20, %c0_21] : memref<128x128xf32, #tpu.memory_space<vmem>>, vector<128x128xf32>
    tpu.vector_store %arg8[%c0_20, %c0_21], %38 {strides = array<i32>} : memref<128x128xf32, #tpu.memory_space<vmem>>, vector<128x128xf32>,
    return
  }
  func.func @transform_0(%arg0: i32) -> (i32, i32) {
    %c0_i32 = arith.constant 0 : i32
    %c0_i32_0 = arith.constant 0 : i32
    return %arg0, %c0_i32 : i32, i32
  }
  func.func @transform_1(%arg0: i32) -> (i32, i32) {
    %c0_i32 = arith.constant 0 : i32
    %c0_i32_0 = arith.constant 0 : i32
    %c0_i32_1 = arith.constant 0 : i32
    return %c0_i32, %c0_i32_0 : i32, i32
  }
  func.func @transform_2(%arg0: i32) -> (i32, i32) {
    %c0_i32 = arith.constant 0 : i32
    %c0_i32_0 = arith.constant 0 : i32
    %c0_i32_1 = arith.constant 0 : i32
    return %c0_i32, %c0_i32_0 : i32, i32
  }
  func.func @transform_3(%arg0: i32) -> (i32, i32) {
    %c0_i32 = arith.constant 0 : i32
    %c0_i32_0 = arith.constant 0 : i32
    %c0_i32_1 = arith.constant 0 : i32
    return %c0_i32, %c0_i32_0 : i32, i32
  }
  func.func @transform_4(%arg0: i32) -> (i32, i32) {
    %c0_i32 = arith.constant 0 : i32
    %c0_i32_0 = arith.constant 0 : i32
    %c0_i32_1 = arith.constant 0 : i32
    return %c0_i32, %c0_i32_0 : i32, i32
  }
  func.func @transform_5(%arg0: i32) -> (i32, i32) {
    %c0_i32 = arith.constant 0 : i32
    %c0_i32_0 = arith.constant 0 : i32
    %c0_i32_1 = arith.constant 0 : i32
    return %c0_i32, %c0_i32_0 : i32, i32
  }
  func.func @transform_6(%arg0: i32) -> (i32, i32) {
    %c0_i32 = arith.constant 0 : i32
    %c0_i32_0 = arith.constant 0 : i32
    %c0_i32_1 = arith.constant 0 : i32
    return %c0_i32, %c0_i32_0 : i32, i32
  }
  func.func @transform_7(%arg0: i32) -> (i32, i32) {
    %c0_i32 = arith.constant 0 : i32
    %c0_i32_0 = arith.constant 0 : i32
    return %arg0, %c0_i32 : i32, i32
  }
}

module attributes {stable_mosaic.version = 11 : i64} {
  func.func @_processor_kernel(%arg0: i32, %arg1: memref<128x128xf32, #tpu.memory_space<vmem>>, %arg2: memref<128x128xf32, #tpu.memory_space<vmem>>, %arg3: memref<128x128xbf16, #tpu.memory_space<vmem>>, %arg4: memref<128x128xbf16, #tpu.memory_space<vmem>>, %arg5: memref<1x7x128x128xbf16, #tpu.memory_space<vmem>>, %arg6: memref<1x6x128xf32, #tpu.memory_space<vmem>>, %arg7: memref<1x128x128xf32, #tpu.memory_space<vmem>>, %arg8: memref<1x128x128xf32, #tpu.memory_space<vmem>>, %arg9: memref<128x128xf32, #tpu.memory_space<vmem>>, %arg10: memref<128x128xf32, #tpu.memory_space<vmem>>) attributes {dimension_semantics = [#tpu.dimension_semantics<arbitrary>], iteration_bounds = array<i64: 15>, scalar_prefetch = 0 : i64, scratch_operands = 0 : i64, tpu.core_type = #tpu.core_type<tc>, window_params = [{pipeline_mode = #tpu.pipeline_mode<synchronous>, transform_indices = @transform_0, window_bounds = array<i64: 128, 128>}, {pipeline_mode = #tpu.pipeline_mode<synchronous>, transform_indices = @transform_1, window_bounds = array<i64: 128, 128>}, {pipeline_mode = #tpu.pipeline_mode<synchronous>, transform_indices = @transform_2, window_bounds = array<i64: 128, 128>}, {pipeline_mode = #tpu.pipeline_mode<synchronous>, transform_indices = @transform_3, window_bounds = array<i64: 128, 128>}, {transform_indices = @transform_4, window_bounds = array<i64: 1, 7, 128, 128>}, {transform_indices = @transform_5, window_bounds = array<i64: 1, 6, 128>}, {transform_indices = @transform_6, window_bounds = array<i64: 1, 128, 128>}, {transform_indices = @transform_7, window_bounds = array<i64: 1, 128, 128>}, {pipeline_mode = #tpu.pipeline_mode<synchronous>, transform_indices = @transform_8, window_bounds = array<i64: 128, 128>}, {pipeline_mode = #tpu.pipeline_mode<synchronous>, transform_indices = @transform_9, window_bounds = array<i64: 128, 128>}]} {
    %c0_i32 = arith.constant 0 : i32
    %0 = arith.cmpi eq, %arg0, %c0_i32 : i32
    %1 = arith.extui %0 : i1 to i32
    %c0_i32_0 = arith.constant 0 : i32
    %2 = arith.cmpi ne, %1, %c0_i32_0 : i32
    scf.if %2 {
      %c0_79 = arith.constant 0 : index
      %c0_80 = arith.constant 0 : index
      %116 = vector.load %arg1[%c0_79, %c0_80] : memref<128x128xf32, #tpu.memory_space<vmem>>, vector<128x128xf32>
      %c0_81 = arith.constant 0 : index
      %c0_82 = arith.constant 0 : index
      %117 = vector.load %arg9[%c0_81, %c0_82] : memref<128x128xf32, #tpu.memory_space<vmem>>, vector<128x128xf32>
      tpu.vector_store %arg9[%c0_81, %c0_82], %116 {strides = array<i32>} : memref<128x128xf32, #tpu.memory_space<vmem>>, vector<128x128xf32>,
      %c0_83 = arith.constant 0 : index
      %c0_84 = arith.constant 0 : index
      %118 = vector.load %arg2[%c0_83, %c0_84] : memref<128x128xf32, #tpu.memory_space<vmem>>, vector<128x128xf32>
      %c0_85 = arith.constant 0 : index
      %c0_86 = arith.constant 0 : index
      %119 = vector.load %arg10[%c0_85, %c0_86] : memref<128x128xf32, #tpu.memory_space<vmem>>, vector<128x128xf32>
      tpu.vector_store %arg10[%c0_85, %c0_86], %118 {strides = array<i32>} : memref<128x128xf32, #tpu.memory_space<vmem>>, vector<128x128xf32>,
    } else {
    }
    %c0 = arith.constant 0 : index
    %c0_1 = arith.constant 0 : index
    %3 = vector.load %arg9[%c0, %c0_1] : memref<128x128xf32, #tpu.memory_space<vmem>>, vector<128x128xf32>
    %c0_2 = arith.constant 0 : index
    %c0_3 = arith.constant 0 : index
    %4 = vector.load %arg10[%c0_2, %c0_3] : memref<128x128xf32, #tpu.memory_space<vmem>>, vector<128x128xf32>
    %5 = arith.truncf %3 : vector<128x128xf32> to vector<128x128xbf16>
    %6 = arith.truncf %4 : vector<128x128xf32> to vector<128x128xbf16>
    %c0_4 = arith.constant 0 : index
    %c0_5 = arith.constant 0 : index
    %7 = vector.load %arg3[%c0_4, %c0_5] : memref<128x128xbf16, #tpu.memory_space<vmem>>, vector<128x128xbf16>
    %c0_6 = arith.constant 0 : index
    %c0_7 = arith.constant 0 : index
    %8 = vector.load %arg4[%c0_6, %c0_7] : memref<128x128xbf16, #tpu.memory_space<vmem>>, vector<128x128xbf16>
    %c0_8 = arith.constant 0 : index
    %c0_9 = arith.constant 0 : index
    %c0_10 = arith.constant 0 : index
    %c0_11 = arith.constant 0 : index
    %9 = vector.load %arg5[%c0_8, %c0_9, %c0_10, %c0_11] : memref<1x7x128x128xbf16, #tpu.memory_space<vmem>>, vector<1x1x128x128xbf16>
    %10 = vector.shape_cast %9 : vector<1x1x128x128xbf16> to vector<128x128xbf16>
    %c0_12 = arith.constant 0 : index
    %c1 = arith.constant 1 : index
    %c0_13 = arith.constant 0 : index
    %c0_14 = arith.constant 0 : index
    %11 = vector.load %arg5[%c0_12, %c1, %c0_13, %c0_14] : memref<1x7x128x128xbf16, #tpu.memory_space<vmem>>, vector<1x1x128x128xbf16>
    %12 = vector.shape_cast %11 : vector<1x1x128x128xbf16> to vector<128x128xbf16>
    %c0_15 = arith.constant 0 : index
    %c2 = arith.constant 2 : index
    %c0_16 = arith.constant 0 : index
    %c0_17 = arith.constant 0 : index
    %13 = vector.load %arg5[%c0_15, %c2, %c0_16, %c0_17] : memref<1x7x128x128xbf16, #tpu.memory_space<vmem>>, vector<1x1x128x128xbf16>
    %14 = vector.shape_cast %13 : vector<1x1x128x128xbf16> to vector<128x128xbf16>
    %c0_18 = arith.constant 0 : index
    %c3 = arith.constant 3 : index
    %c0_19 = arith.constant 0 : index
    %c0_20 = arith.constant 0 : index
    %15 = vector.load %arg5[%c0_18, %c3, %c0_19, %c0_20] : memref<1x7x128x128xbf16, #tpu.memory_space<vmem>>, vector<1x1x128x128xbf16>
    %16 = vector.shape_cast %15 : vector<1x1x128x128xbf16> to vector<128x128xbf16>
    %c0_21 = arith.constant 0 : index
    %c4 = arith.constant 4 : index
    %c0_22 = arith.constant 0 : index
    %c0_23 = arith.constant 0 : index
    %17 = vector.load %arg5[%c0_21, %c4, %c0_22, %c0_23] : memref<1x7x128x128xbf16, #tpu.memory_space<vmem>>, vector<1x1x128x128xbf16>
    %18 = vector.shape_cast %17 : vector<1x1x128x128xbf16> to vector<128x128xbf16>
    %c0_24 = arith.constant 0 : index
    %c5 = arith.constant 5 : index
    %c0_25 = arith.constant 0 : index
    %c0_26 = arith.constant 0 : index
    %19 = vector.load %arg5[%c0_24, %c5, %c0_25, %c0_26] : memref<1x7x128x128xbf16, #tpu.memory_space<vmem>>, vector<1x1x128x128xbf16>
    %20 = vector.shape_cast %19 : vector<1x1x128x128xbf16> to vector<128x128xbf16>
    %c0_27 = arith.constant 0 : index
    %c6 = arith.constant 6 : index
    %c0_28 = arith.constant 0 : index
    %c0_29 = arith.constant 0 : index
    %21 = vector.load %arg5[%c0_27, %c6, %c0_28, %c0_29] : memref<1x7x128x128xbf16, #tpu.memory_space<vmem>>, vector<1x1x128x128xbf16>
    %22 = vector.shape_cast %21 : vector<1x1x128x128xbf16> to vector<128x128xbf16>
    %cst = arith.constant dense<0.000000e+00> : vector<128x128xf32>
    %23 = tpu.matmul %5, %10, %cst {dimension_numbers = #tpu.dot_dimension_numbers<[1], [0], [0], [1], [0, 0, 1, 1], [], []>} : vector<128x128xbf16>, vector<128x128xbf16>, vector<128x128xf32> -> vector<128x128xf32>
    %24 = arith.truncf %23 : vector<128x128xf32> to vector<128x128xbf16>
    %cst_30 = arith.constant dense<0.000000e+00> : vector<128x128xf32>
    %25 = tpu.matmul %5, %12, %cst_30 {dimension_numbers = #tpu.dot_dimension_numbers<[1], [0], [0], [1], [0, 0, 1, 1], [], []>} : vector<128x128xbf16>, vector<128x128xbf16>, vector<128x128xf32> -> vector<128x128xf32>
    %26 = arith.truncf %25 : vector<128x128xf32> to vector<128x128xbf16>
    %cst_31 = arith.constant dense<0.000000e+00> : vector<128x128xf32>
    %27 = tpu.matmul %7, %24, %cst_31 {dimension_numbers = #tpu.dot_dimension_numbers<[1], [0], [0], [1], [0, 0, 1, 1], [], []>} : vector<128x128xbf16>, vector<128x128xbf16>, vector<128x128xf32> -> vector<128x128xf32>
    %cst_32 = arith.constant dense<0.000000e+00> : vector<128x128xf32>
    %28 = tpu.matmul %8, %26, %cst_32 {dimension_numbers = #tpu.dot_dimension_numbers<[1], [0], [0], [1], [0, 0, 1, 1], [], []>} : vector<128x128xbf16>, vector<128x128xbf16>, vector<128x128xf32> -> vector<128x128xf32>
    %29 = arith.addf %27, %28 : vector<128x128xf32>
    %cst_33 = arith.constant dense<0.000000e+00> : vector<128x128xf32>
    %30 = tpu.matmul %6, %14, %cst_33 {dimension_numbers = #tpu.dot_dimension_numbers<[1], [0], [0], [1], [0, 0, 1, 1], [], []>} : vector<128x128xbf16>, vector<128x128xbf16>, vector<128x128xf32> -> vector<128x128xf32>
    %31 = arith.addf %29, %30 : vector<128x128xf32>
    %c0_34 = arith.constant 0 : index
    %c0_35 = arith.constant 0 : index
    %c0_36 = arith.constant 0 : index
    %32 = vector.load %arg7[%c0_34, %c0_35, %c0_36] : memref<1x128x128xf32, #tpu.memory_space<vmem>>, vector<1x128x128xf32>
    %33 = vector.shape_cast %32 : vector<1x128x128xf32> to vector<128x128xf32>
    %34 = arith.addf %31, %33 : vector<128x128xf32>
    %cst_37 = arith.constant 0.000000e+00 : f32
    %35 = vector.broadcast %cst_37 : f32 to vector<128x128xf32>
    %36 = arith.maximumf %34, %35 : vector<128x128xf32>
    %37 = arith.truncf %36 : vector<128x128xf32> to vector<128x128xbf16>
    %cst_38 = arith.constant dense<0.000000e+00> : vector<128x128xf32>
    %38 = tpu.matmul %37, %16, %cst_38 {dimension_numbers = #tpu.dot_dimension_numbers<[1], [0], [0], [1], [0, 0, 1, 1], [], []>} : vector<128x128xbf16>, vector<128x128xbf16>, vector<128x128xf32> -> vector<128x128xf32>
    %c0_39 = arith.constant 0 : index
    %c0_40 = arith.constant 0 : index
    %c0_41 = arith.constant 0 : index
    %39 = vector.load %arg6[%c0_39, %c0_40, %c0_41] : memref<1x6x128xf32, #tpu.memory_space<vmem>>, vector<1x1x128xf32>
    %40 = vector.shape_cast %39 : vector<1x1x128xf32> to vector<1x128xf32>
    %41 = vector.broadcast %40 : vector<1x128xf32> to vector<128x128xf32>
    %42 = arith.addf %38, %41 : vector<128x128xf32>
    %cst_42 = arith.constant dense<0.000000e+00> : vector<128xf32>
    %43 = vector.multi_reduction <add>, %42, %cst_42 [1] : vector<128x128xf32> to vector<128xf32>
    %44 = vector.shape_cast %43 : vector<128xf32> to vector<128x1xf32>
    %cst_43 = arith.constant 1.280000e+02 : f32
    %45 = vector.broadcast %cst_43 : f32 to vector<128x1xf32>
    %46 = arith.divf %44, %45 : vector<128x1xf32>
    %47 = vector.broadcast %46 : vector<128x1xf32> to vector<128x128xf32>
    %48 = arith.subf %42, %47 : vector<128x128xf32>
    %49 = arith.mulf %48, %48 : vector<128x128xf32>
    %cst_44 = arith.constant dense<0.000000e+00> : vector<128xf32>
    %50 = vector.multi_reduction <add>, %49, %cst_44 [1] : vector<128x128xf32> to vector<128xf32>
    %51 = vector.shape_cast %50 : vector<128xf32> to vector<128x1xf32>
    %cst_45 = arith.constant 1.280000e+02 : f32
    %52 = vector.broadcast %cst_45 : f32 to vector<128x1xf32>
    %53 = arith.divf %51, %52 : vector<128x1xf32>
    %54 = vector.broadcast %46 : vector<128x1xf32> to vector<128x128xf32>
    %55 = arith.subf %42, %54 : vector<128x128xf32>
    %cst_46 = arith.constant 9.99999974E-6 : f32
    %56 = vector.broadcast %cst_46 : f32 to vector<128x1xf32>
    %57 = arith.addf %53, %56 : vector<128x1xf32>
    %58 = math.rsqrt %57 : vector<128x1xf32>
    %59 = vector.broadcast %58 : vector<128x1xf32> to vector<128x128xf32>
    %60 = arith.mulf %55, %59 : vector<128x128xf32>
    %c0_47 = arith.constant 0 : index
    %c1_48 = arith.constant 1 : index
    %c0_49 = arith.constant 0 : index
    %61 = vector.load %arg6[%c0_47, %c1_48, %c0_49] : memref<1x6x128xf32, #tpu.memory_space<vmem>>, vector<1x1x128xf32>
    %62 = vector.shape_cast %61 : vector<1x1x128xf32> to vector<1x128xf32>
    %63 = vector.broadcast %62 : vector<1x128xf32> to vector<128x128xf32>
    %64 = arith.mulf %60, %63 : vector<128x128xf32>
    %c0_50 = arith.constant 0 : index
    %c2_51 = arith.constant 2 : index
    %c0_52 = arith.constant 0 : index
    %65 = vector.load %arg6[%c0_50, %c2_51, %c0_52] : memref<1x6x128xf32, #tpu.memory_space<vmem>>, vector<1x1x128xf32>
    %66 = vector.shape_cast %65 : vector<1x1x128xf32> to vector<1x128xf32>
    %67 = vector.broadcast %66 : vector<1x128xf32> to vector<128x128xf32>
    %68 = arith.addf %64, %67 : vector<128x128xf32>
    %69 = arith.addf %68, %4 : vector<128x128xf32>
    %c0_53 = arith.constant 0 : index
    %c0_54 = arith.constant 0 : index
    %70 = vector.load %arg10[%c0_53, %c0_54] : memref<128x128xf32, #tpu.memory_space<vmem>>, vector<128x128xf32>
    tpu.vector_store %arg10[%c0_53, %c0_54], %69 {strides = array<i32>} : memref<128x128xf32, #tpu.memory_space<vmem>>, vector<128x128xf32>,
    %71 = arith.truncf %69 : vector<128x128xf32> to vector<128x128xbf16>
    %cst_55 = arith.constant dense<0.000000e+00> : vector<128x128xf32>
    %72 = tpu.matmul %8, %71, %cst_55 {dimension_numbers = #tpu.dot_dimension_numbers<[0], [0], [1], [1], [0, 1, 1, 1], [], []>} : vector<128x128xbf16>, vector<128x128xbf16>, vector<128x128xf32> -> vector<128x128xf32>
    %cst_56 = arith.constant dense<0.000000e+00> : vector<128x128xf32>
    %73 = tpu.matmul %5, %18, %cst_56 {dimension_numbers = #tpu.dot_dimension_numbers<[1], [0], [0], [1], [0, 0, 1, 1], [], []>} : vector<128x128xbf16>, vector<128x128xbf16>, vector<128x128xf32> -> vector<128x128xf32>
    %74 = arith.truncf %72 : vector<128x128xf32> to vector<128x128xbf16>
    %cst_57 = arith.constant dense<0.000000e+00> : vector<128x128xf32>
    %75 = tpu.matmul %74, %20, %cst_57 {dimension_numbers = #tpu.dot_dimension_numbers<[1], [0], [0], [1], [0, 0, 1, 1], [], []>} : vector<128x128xbf16>, vector<128x128xbf16>, vector<128x128xf32> -> vector<128x128xf32>
    %76 = arith.addf %73, %75 : vector<128x128xf32>
    %c0_58 = arith.constant 0 : index
    %c0_59 = arith.constant 0 : index
    %c0_60 = arith.constant 0 : index
    %77 = vector.load %arg8[%c0_58, %c0_59, %c0_60] : memref<1x128x128xf32, #tpu.memory_space<vmem>>, vector<1x128x128xf32>
    %78 = vector.shape_cast %77 : vector<1x128x128xf32> to vector<128x128xf32>
    %79 = arith.addf %76, %78 : vector<128x128xf32>
    %cst_61 = arith.constant 0.000000e+00 : f32
    %80 = vector.broadcast %cst_61 : f32 to vector<128x128xf32>
    %81 = arith.maximumf %79, %80 : vector<128x128xf32>
    %82 = arith.truncf %81 : vector<128x128xf32> to vector<128x128xbf16>
    %cst_62 = arith.constant dense<0.000000e+00> : vector<128x128xf32>
    %83 = tpu.matmul %82, %22, %cst_62 {dimension_numbers = #tpu.dot_dimension_numbers<[1], [0], [0], [1], [0, 0, 1, 1], [], []>} : vector<128x128xbf16>, vector<128x128xbf16>, vector<128x128xf32> -> vector<128x128xf32>
    %c0_63 = arith.constant 0 : index
    %c3_64 = arith.constant 3 : index
    %c0_65 = arith.constant 0 : index
    %84 = vector.load %arg6[%c0_63, %c3_64, %c0_65] : memref<1x6x128xf32, #tpu.memory_space<vmem>>, vector<1x1x128xf32>
    %85 = vector.shape_cast %84 : vector<1x1x128xf32> to vector<1x128xf32>
    %86 = vector.broadcast %85 : vector<1x128xf32> to vector<128x128xf32>
    %87 = arith.addf %83, %86 : vector<128x128xf32>
    %cst_66 = arith.constant dense<0.000000e+00> : vector<128xf32>
    %88 = vector.multi_reduction <add>, %87, %cst_66 [1] : vector<128x128xf32> to vector<128xf32>
    %89 = vector.shape_cast %88 : vector<128xf32> to vector<128x1xf32>
    %cst_67 = arith.constant 1.280000e+02 : f32
    %90 = vector.broadcast %cst_67 : f32 to vector<128x1xf32>
    %91 = arith.divf %89, %90 : vector<128x1xf32>
    %92 = vector.broadcast %91 : vector<128x1xf32> to vector<128x128xf32>
    %93 = arith.subf %87, %92 : vector<128x128xf32>
    %94 = arith.mulf %93, %93 : vector<128x128xf32>
    %cst_68 = arith.constant dense<0.000000e+00> : vector<128xf32>
    %95 = vector.multi_reduction <add>, %94, %cst_68 [1] : vector<128x128xf32> to vector<128xf32>
    %96 = vector.shape_cast %95 : vector<128xf32> to vector<128x1xf32>
    %cst_69 = arith.constant 1.280000e+02 : f32
    %97 = vector.broadcast %cst_69 : f32 to vector<128x1xf32>
    %98 = arith.divf %96, %97 : vector<128x1xf32>
    %99 = vector.broadcast %91 : vector<128x1xf32> to vector<128x128xf32>
    %100 = arith.subf %87, %99 : vector<128x128xf32>
    %cst_70 = arith.constant 9.99999974E-6 : f32
    %101 = vector.broadcast %cst_70 : f32 to vector<128x1xf32>
    %102 = arith.addf %98, %101 : vector<128x1xf32>
    %103 = math.rsqrt %102 : vector<128x1xf32>
    %104 = vector.broadcast %103 : vector<128x1xf32> to vector<128x128xf32>
    %105 = arith.mulf %100, %104 : vector<128x128xf32>
    %c0_71 = arith.constant 0 : index
    %c4_72 = arith.constant 4 : index
    %c0_73 = arith.constant 0 : index
    %106 = vector.load %arg6[%c0_71, %c4_72, %c0_73] : memref<1x6x128xf32, #tpu.memory_space<vmem>>, vector<1x1x128xf32>
    %107 = vector.shape_cast %106 : vector<1x1x128xf32> to vector<1x128xf32>
    %108 = vector.broadcast %107 : vector<1x128xf32> to vector<128x128xf32>
    %109 = arith.mulf %105, %108 : vector<128x128xf32>
    %c0_74 = arith.constant 0 : index
    %c5_75 = arith.constant 5 : index
    %c0_76 = arith.constant 0 : index
    %110 = vector.load %arg6[%c0_74, %c5_75, %c0_76] : memref<1x6x128xf32, #tpu.memory_space<vmem>>, vector<1x1x128xf32>
    %111 = vector.shape_cast %110 : vector<1x1x128xf32> to vector<1x128xf32>
    %112 = vector.broadcast %111 : vector<1x128xf32> to vector<128x128xf32>
    %113 = arith.addf %109, %112 : vector<128x128xf32>
    %114 = arith.addf %113, %3 : vector<128x128xf32>
    %c0_77 = arith.constant 0 : index
    %c0_78 = arith.constant 0 : index
    %115 = vector.load %arg9[%c0_77, %c0_78] : memref<128x128xf32, #tpu.memory_space<vmem>>, vector<128x128xf32>
    tpu.vector_store %arg9[%c0_77, %c0_78], %114 {strides = array<i32>} : memref<128x128xf32, #tpu.memory_space<vmem>>, vector<128x128xf32>,
    return
  }
  func.func @transform_0(%arg0: i32) -> (i32, i32) {
    %c0_i32 = arith.constant 0 : i32
    %c0_i32_0 = arith.constant 0 : i32
    %c0_i32_1 = arith.constant 0 : i32
    return %c0_i32, %c0_i32_0 : i32, i32
  }
  func.func @transform_1(%arg0: i32) -> (i32, i32) {
    %c0_i32 = arith.constant 0 : i32
    %c0_i32_0 = arith.constant 0 : i32
    %c0_i32_1 = arith.constant 0 : i32
    return %c0_i32, %c0_i32_0 : i32, i32
  }
  func.func @transform_2(%arg0: i32) -> (i32, i32) {
    %c0_i32 = arith.constant 0 : i32
    %c0_i32_0 = arith.constant 0 : i32
    %c0_i32_1 = arith.constant 0 : i32
    return %c0_i32, %c0_i32_0 : i32, i32
  }
  func.func @transform_3(%arg0: i32) -> (i32, i32) {
    %c0_i32 = arith.constant 0 : i32
    %c0_i32_0 = arith.constant 0 : i32
    %c0_i32_1 = arith.constant 0 : i32
    return %c0_i32, %c0_i32_0 : i32, i32
  }
  func.func @transform_4(%arg0: i32) -> (i32, i32, i32, i32) {
    %c0_i32 = arith.constant 0 : i32
    %c0_i32_0 = arith.constant 0 : i32
    %c0_i32_1 = arith.constant 0 : i32
    %c0_i32_2 = arith.constant 0 : i32
    return %arg0, %c0_i32, %c0_i32_0, %c0_i32_1 : i32, i32, i32, i32
  }
  func.func @transform_5(%arg0: i32) -> (i32, i32, i32) {
    %c0_i32 = arith.constant 0 : i32
    %c0_i32_0 = arith.constant 0 : i32
    %c0_i32_1 = arith.constant 0 : i32
    return %arg0, %c0_i32, %c0_i32_0 : i32, i32, i32
  }
  func.func @transform_6(%arg0: i32) -> (i32, i32, i32) {
    %c0_i32 = arith.constant 0 : i32
    %c0_i32_0 = arith.constant 0 : i32
    %c0_i32_1 = arith.constant 0 : i32
    return %arg0, %c0_i32, %c0_i32_0 : i32, i32, i32
  }
  func.func @transform_7(%arg0: i32) -> (i32, i32, i32) {
    %c0_i32 = arith.constant 0 : i32
    %c0_i32_0 = arith.constant 0 : i32
    %c0_i32_1 = arith.constant 0 : i32
    return %arg0, %c0_i32, %c0_i32_0 : i32, i32, i32
  }
  func.func @transform_8(%arg0: i32) -> (i32, i32) {
    %c0_i32 = arith.constant 0 : i32
    %c0_i32_0 = arith.constant 0 : i32
    %c0_i32_1 = arith.constant 0 : i32
    return %c0_i32, %c0_i32_0 : i32, i32
  }
  func.func @transform_9(%arg0: i32) -> (i32, i32) {
    %c0_i32 = arith.constant 0 : i32
    %c0_i32_0 = arith.constant 0 : i32
    %c0_i32_1 = arith.constant 0 : i32
    return %c0_i32, %c0_i32_0 : i32, i32
  }
}

module attributes {stable_mosaic.version = 11 : i64} {
  func.func @_decoder_kernel(%arg0: i32, %arg1: memref<128x128xf32, #tpu.memory_space<vmem>>, %arg2: memref<128x1xf32, #tpu.memory_space<vmem>>, %arg3: memref<128x256xbf16, #tpu.memory_space<vmem>>, %arg4: memref<1x256xf32, #tpu.memory_space<vmem>>, %arg5: memref<1x256xf32, #tpu.memory_space<vmem>>, %arg6: memref<256x128xbf16, #tpu.memory_space<vmem>>, %arg7: memref<1x128xf32, #tpu.memory_space<vmem>>, %arg8: memref<128x128xf32, #tpu.memory_space<vmem>>) attributes {dimension_semantics = [#tpu.dimension_semantics<parallel>], iteration_bounds = array<i64: 1>, scalar_prefetch = 0 : i64, scratch_operands = 0 : i64, tpu.core_type = #tpu.core_type<tc>, window_params = [{transform_indices = @transform_0, window_bounds = array<i64: 128, 128>}, {transform_indices = @transform_1, window_bounds = array<i64: 128, 1>}, {pipeline_mode = #tpu.pipeline_mode<synchronous>, transform_indices = @transform_2, window_bounds = array<i64: 128, 256>}, {pipeline_mode = #tpu.pipeline_mode<synchronous>, transform_indices = @transform_3, window_bounds = array<i64: 1, 256>}, {pipeline_mode = #tpu.pipeline_mode<synchronous>, transform_indices = @transform_4, window_bounds = array<i64: 1, 256>}, {pipeline_mode = #tpu.pipeline_mode<synchronous>, transform_indices = @transform_5, window_bounds = array<i64: 256, 128>}, {pipeline_mode = #tpu.pipeline_mode<synchronous>, transform_indices = @transform_6, window_bounds = array<i64: 1, 128>}, {transform_indices = @transform_7, window_bounds = array<i64: 128, 128>}]} {
    %c0 = arith.constant 0 : index
    %c0_0 = arith.constant 0 : index
    %0 = vector.load %arg1[%c0, %c0_0] : memref<128x128xf32, #tpu.memory_space<vmem>>, vector<128x128xf32>
    %1 = arith.truncf %0 : vector<128x128xf32> to vector<128x128xbf16>
    %c0_1 = arith.constant 0 : index
    %c0_2 = arith.constant 0 : index
    %2 = vector.load %arg3[%c0_1, %c0_2] : memref<128x256xbf16, #tpu.memory_space<vmem>>, vector<128x256xbf16>
    %cst = arith.constant dense<0.000000e+00> : vector<128x256xf32>
    %3 = tpu.matmul %1, %2, %cst {dimension_numbers = #tpu.dot_dimension_numbers<[1], [0], [0], [1], [0, 0, 1, 1], [], []>} : vector<128x128xbf16>, vector<128x256xbf16>, vector<128x256xf32> -> vector<128x256xf32>
    %c0_3 = arith.constant 0 : index
    %c0_4 = arith.constant 0 : index
    %4 = vector.load %arg2[%c0_3, %c0_4] : memref<128x1xf32, #tpu.memory_space<vmem>>, vector<128x1xf32>
    %c0_5 = arith.constant 0 : index
    %c0_6 = arith.constant 0 : index
    %5 = vector.load %arg4[%c0_5, %c0_6] : memref<1x256xf32, #tpu.memory_space<vmem>>, vector<1x256xf32>
    %6 = vector.broadcast %4 : vector<128x1xf32> to vector<128x256xf32>
    %7 = vector.broadcast %5 : vector<1x256xf32> to vector<128x256xf32>
    %8 = arith.mulf %6, %7 : vector<128x256xf32>
    %9 = arith.addf %3, %8 : vector<128x256xf32>
    %c0_7 = arith.constant 0 : index
    %c0_8 = arith.constant 0 : index
    %10 = vector.load %arg5[%c0_7, %c0_8] : memref<1x256xf32, #tpu.memory_space<vmem>>, vector<1x256xf32>
    %11 = vector.broadcast %10 : vector<1x256xf32> to vector<128x256xf32>
    %12 = arith.addf %9, %11 : vector<128x256xf32>
    %cst_9 = arith.constant 0.000000e+00 : f32
    %13 = vector.broadcast %cst_9 : f32 to vector<128x256xf32>
    %14 = arith.maximumf %12, %13 : vector<128x256xf32>
    %15 = arith.truncf %14 : vector<128x256xf32> to vector<128x256xbf16>
    %c0_10 = arith.constant 0 : index
    %c0_11 = arith.constant 0 : index
    %16 = vector.load %arg6[%c0_10, %c0_11] : memref<256x128xbf16, #tpu.memory_space<vmem>>, vector<256x128xbf16>
    %cst_12 = arith.constant dense<0.000000e+00> : vector<128x128xf32>
    %17 = tpu.matmul %15, %16, %cst_12 {dimension_numbers = #tpu.dot_dimension_numbers<[1], [0], [0], [1], [0, 0, 1, 1], [], []>} : vector<128x256xbf16>, vector<256x128xbf16>, vector<128x128xf32> -> vector<128x128xf32>
    %c0_13 = arith.constant 0 : index
    %c0_14 = arith.constant 0 : index
    %18 = vector.load %arg7[%c0_13, %c0_14] : memref<1x128xf32, #tpu.memory_space<vmem>>, vector<1x128xf32>
    %19 = vector.broadcast %18 : vector<1x128xf32> to vector<128x128xf32>
    %20 = arith.addf %17, %19 : vector<128x128xf32>
    %c0_15 = arith.constant 0 : index
    %c0_16 = arith.constant 0 : index
    %21 = vector.load %arg8[%c0_15, %c0_16] : memref<128x128xf32, #tpu.memory_space<vmem>>, vector<128x128xf32>
    tpu.vector_store %arg8[%c0_15, %c0_16], %20 {strides = array<i32>} : memref<128x128xf32, #tpu.memory_space<vmem>>, vector<128x128xf32>,
    return
  }
  func.func @transform_0(%arg0: i32) -> (i32, i32) {
    %c0_i32 = arith.constant 0 : i32
    %c0_i32_0 = arith.constant 0 : i32
    return %arg0, %c0_i32 : i32, i32
  }
  func.func @transform_1(%arg0: i32) -> (i32, i32) {
    %c0_i32 = arith.constant 0 : i32
    %c0_i32_0 = arith.constant 0 : i32
    return %arg0, %c0_i32 : i32, i32
  }
  func.func @transform_2(%arg0: i32) -> (i32, i32) {
    %c0_i32 = arith.constant 0 : i32
    %c0_i32_0 = arith.constant 0 : i32
    %c0_i32_1 = arith.constant 0 : i32
    return %c0_i32, %c0_i32_0 : i32, i32
  }
  func.func @transform_3(%arg0: i32) -> (i32, i32) {
    %c0_i32 = arith.constant 0 : i32
    %c0_i32_0 = arith.constant 0 : i32
    %c0_i32_1 = arith.constant 0 : i32
    return %c0_i32, %c0_i32_0 : i32, i32
  }
  func.func @transform_4(%arg0: i32) -> (i32, i32) {
    %c0_i32 = arith.constant 0 : i32
    %c0_i32_0 = arith.constant 0 : i32
    %c0_i32_1 = arith.constant 0 : i32
    return %c0_i32, %c0_i32_0 : i32, i32
  }
  func.func @transform_5(%arg0: i32) -> (i32, i32) {
    %c0_i32 = arith.constant 0 : i32
    %c0_i32_0 = arith.constant 0 : i32
    %c0_i32_1 = arith.constant 0 : i32
    return %c0_i32, %c0_i32_0 : i32, i32
  }
  func.func @transform_6(%arg0: i32) -> (i32, i32) {
    %c0_i32 = arith.constant 0 : i32
    %c0_i32_0 = arith.constant 0 : i32
    %c0_i32_1 = arith.constant 0 : i32
    return %c0_i32, %c0_i32_0 : i32, i32
  }
  func.func @transform_7(%arg0: i32) -> (i32, i32) {
    %c0_i32 = arith.constant 0 : i32
    %c0_i32_0 = arith.constant 0 : i32
    return %arg0, %c0_i32 : i32, i32
  }
}

</mosaic_0001>

<llo_original>
// kernel: fv_mgn_forward.4
$region0: #{fv_mgn_forward.4}
  #allocation0 [shape = 'u32[]', space=smem, size = 0x4, offset = 0x4, fixed_abs, tag = 'smem constant byte address 0x4 - core index']
  #allocation1 [shape = 'u32[72,128]{1,0:T(1,128)}', space=vmem, size = 0x9000, scoped, tag = 'internal scratch']
  %s0 = inlined_call_operand.vmem [shape: f32[128,4], index: 0, kind: input, shape index: {}]
  %s1 = inlined_call_operand.hbm [shape: bf16[4,128], index: 1, kind: input, shape index: {}]
  %s2 = inlined_call_operand.hbm [shape: f32[1,128], index: 2, kind: input, shape index: {}]
  %s3 = inlined_call_operand.hbm [shape: bf16[128,128], index: 3, kind: input, shape index: {}]
  %s4 = inlined_call_operand.hbm [shape: f32[1,128], index: 4, kind: input, shape index: {}]
  %s5 = inlined_call_operand.hbm [shape: f32[1,128], index: 5, kind: input, shape index: {}]
  %s6 = inlined_call_operand.hbm [shape: f32[1,128], index: 6, kind: input, shape index: {}]
  %s7 = inlined_call_operand.vmem [shape: f32[128,128], index: 7, kind: output, shape index: {}]
  %s8 = sld [smem:[#allocation0]]
  $region62: #{fv_mgn_forward.4} parent=0
    _
  %s10 = ssub.s32 1, %s8
  %s11 = scalar_select 0, %s10, %s8
  $region1: #{fv_mgn_forward.4} parent=0
    #allocation2 [shape = 'u8[1024]{0}', space=vmem, size = 0x400, scoped, tag = 'input window, operand 1, single buffered']
    #allocation3 [shape = 's32[1]{0}', space=sflag, size = 0x4, scoped, tag = 'scoped memory for fv_mgn_forward.4']
    #allocation4 [shape = 'u8[512]{0}', space=vmem, size = 0x400, scoped, tag = 'input window, operand 2, single buffered']
    #allocation5 [shape = 's32[1]{0}', space=sflag, size = 0x4, scoped, tag = 'scoped memory for fv_mgn_forward.4']
    #allocation6 [shape = 'u8[32768]{0}', space=vmem, size = 0x8000, scoped, tag = 'input window, operand 3, single buffered']
    #allocation7 [shape = 'u8[512]{0}', space=vmem, size = 0x400, scoped, tag = 'input window, operand 4, single buffered']
    #allocation8 [shape = 's32[1]{0}', space=sflag, size = 0x4, scoped, tag = 'scoped memory for fv_mgn_forward.4']
    #allocation9 [shape = 'u8[512]{0}', space=vmem, size = 0x400, scoped, tag = 'input window, operand 5, single buffered']
    #allocation10 [shape = 'u8[512]{0}', space=vmem, size = 0x400, scoped, tag = 'input window, operand 6, single buffered']
    #allocation11 [shape = 's32[1]{0}', space=sflag, size = 0x4, scoped, tag = 'scoped memory for fv_mgn_forward.4']
    %12 = vsyncpa [#allocation3], 0
    %13 = vsyncpa [#allocation5], 0
    %14 = vsyncpa [#allocation8], 0
    %15 = vsyncpa [#allocation11], 0
    // Predicated region
    $region2: #{fv_mgn_forward.4} parent=1 // pred_check
      _
    $region3: #{fv_mgn_forward.4} parent=1 // pred_check_branch
      %17 = sbr.rel (0) target = $region5
    $region4: #{fv_mgn_forward.4} parent=1 // pred_region
      _
    $region5: #{fv_mgn_forward.4} parent=1 // pred_fallthru
      _
    // Predicated region
    $region6: #{fv_mgn_forward.4} parent=1 // pred_check
      _
    $region7: #{fv_mgn_forward.4} parent=1 // pred_check_branch
      %19 = sbr.rel (0) target = $region9
    $region8: #{fv_mgn_forward.4} parent=1 // pred_region
      %21 = vsyncadd [#allocation3], 0
      %s23 = sshll.u32 %s1, 4
      %s24 = int_to_ptr.hbm [resolvable:$true] %s23
      %s25 = sshll.u32 [#allocation2], 4
      %s26 = int_to_ptr.vmem [resolvable:$true] %s25
      %28 = dma.hbm_to_vmem [thread:$0]  %s24, 32, %s26, [#allocation3]
    $region9: #{fv_mgn_forward.4} parent=1 // pred_fallthru
      _
    // Predicated region
    $region10: #{fv_mgn_forward.4} parent=1 // pred_check
      _
    $region11: #{fv_mgn_forward.4} parent=1 // pred_check_branch
      %30 = sbr.rel (0) target = $region13
    $region12: #{fv_mgn_forward.4} parent=1 // pred_region
      %32 = vsyncadd [#allocation5], 0
      %s34 = sshll.u32 %s2, 4
      %s35 = int_to_ptr.hbm [resolvable:$true] %s34
      %s36 = sshll.u32 [#allocation4], 4
      %s37 = int_to_ptr.vmem [resolvable:$true] %s36
      %39 = dma.hbm_to_vmem [thread:$0]  %s35, 16, %s37, [#allocation5]
    $region13: #{fv_mgn_forward.4} parent=1 // pred_fallthru
      _
    // Predicated region
    $region14: #{fv_mgn_forward.4} parent=1 // pred_check
      _
    $region15: #{fv_mgn_forward.4} parent=1 // pred_check_branch
      %41 = sbr.rel (0) target = $region17
    $region16: #{fv_mgn_forward.4} parent=1 // pred_region
      %43 = vsyncadd [#allocation5], 0
      %s44 = sshll.u32 %s3, 4
      %s45 = int_to_ptr.hbm [resolvable:$true] %s44
      %s46 = sshll.u32 [#allocation6], 4
      %s47 = int_to_ptr.vmem [resolvable:$true] %s46
      %52 = dma.hbm_to_vmem [thread:$0]  %s45, 1024, %s47, [#allocation5], 64, 64, 4
    $region17: #{fv_mgn_forward.4} parent=1 // pred_fallthru
      _
    // Predicated region
    $region18: #{fv_mgn_forward.4} parent=1 // pred_check
      _
    $region19: #{fv_mgn_forward.4} parent=1 // pred_check_branch
      %54 = sbr.rel (0) target = $region21
    $region20: #{fv_mgn_forward.4} parent=1 // pred_region
      %56 = vsyncadd [#allocation8], 0
      %s58 = sshll.u32 %s4, 4
      %s59 = int_to_ptr.hbm [resolvable:$true] %s58
      %s60 = sshll.u32 [#allocation7], 4
      %s61 = int_to_ptr.vmem [resolvable:$true] %s60
      %63 = dma.hbm_to_vmem [thread:$0]  %s59, 16, %s61, [#allocation8]
    $region21: #{fv_mgn_forward.4} parent=1 // pred_fallthru
      _
    // Predicated region
    $region22: #{fv_mgn_forward.4} parent=1 // pred_check
      _
    $region23: #{fv_mgn_forward.4} parent=1 // pred_check_branch
      %65 = sbr.rel (0) target = $region25
    $region24: #{fv_mgn_forward.4} parent=1 // pred_region
      %67 = vsyncadd [#allocation8], 0
      %s69 = sshll.u32 %s5, 4
      %s70 = int_to_ptr.hbm [resolvable:$true] %s69
      %s71 = sshll.u32 [#allocation9], 4
      %s72 = int_to_ptr.vmem [resolvable:$true] %s71
      %74 = dma.hbm_to_vmem [thread:$0]  %s70, 16, %s72, [#allocation8]
    $region25: #{fv_mgn_forward.4} parent=1 // pred_fallthru
      _
    // Predicated region
    $region26: #{fv_mgn_forward.4} parent=1 // pred_check
      _
    $region27: #{fv_mgn_forward.4} parent=1 // pred_check_branch
      %76 = sbr.rel (0) target = $region29
    $region28: #{fv_mgn_forward.4} parent=1 // pred_region
      %78 = vsyncadd [#allocation11], 0
      %s80 = sshll.u32 %s6, 4
      %s81 = int_to_ptr.hbm [resolvable:$true] %s80
      %s82 = sshll.u32 [#allocation10], 4
      %s83 = int_to_ptr.vmem [resolvable:$true] %s82
      %85 = dma.hbm_to_vmem [thread:$0]  %s81, 16, %s83, [#allocation11]
    $region29: #{fv_mgn_forward.4} parent=1 // pred_fallthru
      _
    // Predicated region
    $region30: #{fv_mgn_forward.4} parent=1 // pred_check
      _
    $region31: #{fv_mgn_forward.4} parent=1 // pred_check_branch
      %87 = sbr.rel (0) target = $region33
    $region32: #{fv_mgn_forward.4} parent=1 // pred_region
      %89 = dma.done [#allocation3], 32
    $region33: #{fv_mgn_forward.4} parent=1 // pred_fallthru
      _
    // Predicated region
    $region34: #{fv_mgn_forward.4} parent=1 // pred_check
      _
    $region35: #{fv_mgn_forward.4} parent=1 // pred_check_branch
      %91 = sbr.rel (0) target = $region37
    $region36: #{fv_mgn_forward.4} parent=1 // pred_region
      %93 = dma.done [#allocation5], 16
    $region37: #{fv_mgn_forward.4} parent=1 // pred_fallthru
      _
    // Predicated region
    $region38: #{fv_mgn_forward.4} parent=1 // pred_check
      _
    $region39: #{fv_mgn_forward.4} parent=1 // pred_check_branch
      %95 = sbr.rel (0) target = $region41
    $region40: #{fv_mgn_forward.4} parent=1 // pred_region
      %97 = dma.done [#allocation5], 1024
    $region41: #{fv_mgn_forward.4} parent=1 // pred_fallthru
      _
    // Predicated region
    $region42: #{fv_mgn_forward.4} parent=1 // pred_check
      _
    $region43: #{fv_mgn_forward.4} parent=1 // pred_check_branch
      %99 = sbr.rel (0) target = $region45
    $region44: #{fv_mgn_forward.4} parent=1 // pred_region
      %101 = dma.done [#allocation8], 16
    $region45: #{fv_mgn_forward.4} parent=1 // pred_fallthru
      _
    // Predicated region
    $region46: #{fv_mgn_forward.4} parent=1 // pred_check
      _
    $region47: #{fv_mgn_forward.4} parent=1 // pred_check_branch
      %103 = sbr.rel (0) target = $region49
    $region48: #{fv_mgn_forward.4} parent=1 // pred_region
      %105 = dma.done [#allocation8], 16
    $region49: #{fv_mgn_forward.4} parent=1 // pred_fallthru
      _
    // Predicated region
    $region50: #{fv_mgn_forward.4} parent=1 // pred_check
      _
    $region51: #{fv_mgn_forward.4} parent=1 // pred_check_branch
      %107 = sbr.rel (0) target = $region53
    $region52: #{fv_mgn_forward.4} parent=1 // pred_region
      %109 = dma.done [#allocation11], 16
    $region53: #{fv_mgn_forward.4} parent=1 // pred_fallthru
      _
    %v111 = vld [vmem:[%s0] sm:$0xff]
    %v112 = vld [vmem:[%s0 + $0x8] sm:$0xff]
    %v113 = vld [vmem:[%s0 + $0x10] sm:$0xff]
    %v114 = vld [vmem:[%s0 + $0x18] sm:$0xff]
    %v115 = vld [vmem:[%s0 + $0x20] sm:$0xff]
    %v116 = vld [vmem:[%s0 + $0x28] sm:$0xff]
    %v117 = vld [vmem:[%s0 + $0x30] sm:$0xff]
    %v118 = vld [vmem:[%s0 + $0x38] sm:$0xff]
    %v119 = vld [vmem:[%s0 + $0x40] sm:$0xff]
    %v120 = vld [vmem:[%s0 + $0x48] sm:$0xff]
    %v121 = vld [vmem:[%s0 + $0x50] sm:$0xff]
    %v122 = vld [vmem:[%s0 + $0x58] sm:$0xff]
    %v123 = vld [vmem:[%s0 + $0x60] sm:$0xff]
    %v124 = vld [vmem:[%s0 + $0x68] sm:$0xff]
    %v125 = vld [vmem:[%s0 + $0x70] sm:$0xff]
    %v126 = vld [vmem:[%s0 + $0x78] sm:$0xff]
    %v127 = vpack.c.bf16 %v112, %v111
    %v128 = vpack.c.bf16 %v114, %v113
    %v129 = vpack.c.bf16 %v116, %v115
    %v130 = vpack.c.bf16 %v118, %v117
    %v131 = vpack.c.bf16 %v120, %v119
    %v132 = vpack.c.bf16 %v122, %v121
    %v133 = vpack.c.bf16 %v124, %v123
    %v134 = vpack.c.bf16 %v126, %v125
    %v135 = vld [vmem:[#allocation2] sm:$0x3]
    %v136 = vld [vmem:[#allocation4] sm:$0x1]
    %v138 = vperm.slane %v136, 0
    %vm140 = vcmask 31744
    %v142 = vsel %vm140, %v127, 0
    %v145 = vsel %vm140, %v128, 0
    %v148 = vsel %vm140, %v129, 0
    %v151 = vsel %vm140, %v130, 0
    %v154 = vsel %vm140, %v131, 0
    %v157 = vsel %vm140, %v132, 0
    %v160 = vsel %vm140, %v133, 0
    %v163 = vsel %vm140, %v134, 0
    %vm165 = vcmask 1041408
    %v167 = vsel %vm165, %v135, 0
    %169 = vmatpush.bf16.msra.mxu0 0
    %170 = vmatpush.bf16.msra.mxu0 0
    %171 = vmatpush.bf16.msra.mxu0 0
    %172 = vmatpush.bf16.msra.mxu0 0
    %173 = vmatpush.bf16.msra.mxu0 0
    %174 = vmatpush.bf16.msra.mxu0 0
    %175 = vmatpush.bf16.msra.mxu0 0
    %176 = vmatpush.bf16.msra.mxu0 %v167
    %177 = vmatmul.bf16.gmra.mxu0 %v142
    %v178 = vpop.f32.mrf.mxu0
    %v179 = vadd.f32 %v138, %v178
    %v180 = vpop.f32.mrf.mxu0
    %v181 = vadd.f32 %v138, %v180
    %182 = vmatmul.bf16.gmra.mxu0 %v145
    %v183 = vpop.f32.mrf.mxu0
    %v184 = vadd.f32 %v138, %v183
    %v185 = vpop.f32.mrf.mxu0
    %v186 = vadd.f32 %v138, %v185
    %187 = vmatmul.bf16.gmra.mxu0 %v148
    %v188 = vpop.f32.mrf.mxu0
    %v189 = vadd.f32 %v138, %v188
    %v190 = vpop.f32.mrf.mxu0
    %v191 = vadd.f32 %v138, %v190
    %192 = vmatmul.bf16.gmra.mxu0 %v151
    %v193 = vpop.f32.mrf.mxu0
    %v194 = vadd.f32 %v138, %v193
    %v195 = vpop.f32.mrf.mxu0
    %v196 = vadd.f32 %v138, %v195
    %197 = vmatmul.bf16.gmra.mxu0 %v154
    %v198 = vpop.f32.mrf.mxu0
    %v199 = vadd.f32 %v138, %v198
    %v200 = vpop.f32.mrf.mxu0
    %v201 = vadd.f32 %v138, %v200
    %202 = vmatmul.bf16.gmra.mxu0 %v157
    %v203 = vpop.f32.mrf.mxu0
    %v204 = vadd.f32 %v138, %v203
    %v205 = vpop.f32.mrf.mxu0
    %v206 = vadd.f32 %v138, %v205
    %207 = vmatmul.bf16.gmra.mxu0 %v160
    %v208 = vpop.f32.mrf.mxu0
    %v209 = vadd.f32 %v138, %v208
    %v210 = vpop.f32.mrf.mxu0
    %v211 = vadd.f32 %v138, %v210
    %212 = vmatmul.bf16.gmra.mxu0 %v163
    %v213 = vpop.f32.mrf.mxu0
    %v214 = vadd.f32 %v138, %v213
    %v215 = vpop.f32.mrf.mxu0
    %v216 = vadd.f32 %v138, %v215
    %217 = vdwg.mxu0
    %v218 = vmax.f32 %v179, 0.0
    %v219 = vmax.f32 %v181, 0.0
    %v220 = vmax.f32 %v184, 0.0
    %v221 = vmax.f32 %v186, 0.0
    %v222 = vmax.f32 %v189, 0.0
    %v223 = vmax.f32 %v191, 0.0
    %v224 = vmax.f32 %v194, 0.0
    %v225 = vmax.f32 %v196, 0.0
    %v226 = vmax.f32 %v199, 0.0
    %v227 = vmax.f32 %v201, 0.0
    %v228 = vmax.f32 %v204, 0.0
    %v229 = vmax.f32 %v206, 0.0
    %v230 = vmax.f32 %v209, 0.0
    %v231 = vmax.f32 %v211, 0.0
    %v232 = vmax.f32 %v214, 0.0
    %v233 = vmax.f32 %v216, 0.0
    %v234 = vpack.c.bf16 %v219, %v218
    %v235 = vpack.c.bf16 %v221, %v220
    %v236 = vpack.c.bf16 %v223, %v222
    %v237 = vpack.c.bf16 %v225, %v224
    %v238 = vpack.c.bf16 %v227, %v226
    %v239 = vpack.c.bf16 %v229, %v228
    %v240 = vpack.c.bf16 %v231, %v230
    %v241 = vpack.c.bf16 %v233, %v232
    %v242 = vld [vmem:[#allocation6] sm:$0xf]
    %v243 = vld [vmem:[#allocation6 + $0x4] sm:$0xf]
    %v244 = vld [vmem:[#allocation6 + $0x8] sm:$0xf]
    %v245 = vld [vmem:[#allocation6 + $0xc] sm:$0xf]
    %v246 = vld [vmem:[#allocation6 + $0x10] sm:$0xf]
    %v247 = vld [vmem:[#allocation6 + $0x14] sm:$0xf]
    %v248 = vld [vmem:[#allocation6 + $0x18] sm:$0xf]
    %v249 = vld [vmem:[#allocation6 + $0x1c] sm:$0xf]
    %v250 = vld [vmem:[#allocation6 + $0x20] sm:$0xf]
    %v251 = vld [vmem:[#allocation6 + $0x24] sm:$0xf]
    %v252 = vld [vmem:[#allocation6 + $0x28] sm:$0xf]
    %v253 = vld [vmem:[#allocation6 + $0x2c] sm:$0xf]
    %v254 = vld [vmem:[#allocation6 + $0x30] sm:$0xf]
    %v255 = vld [vmem:[#allocation6 + $0x34] sm:$0xf]
    %v256 = vld [vmem:[#allocation6 + $0x38] sm:$0xf]
    %v257 = vld [vmem:[#allocation6 + $0x3c] sm:$0xf]
    %v258 = vld [vmem:[#allocation7] sm:$0x1]
    %v260 = vperm.slane %v258, 0
    %v278 = vunpack.c.l.b16 %v242
    %v279 = vunpack.c.l.b16 %v243
    %v280 = vunpack.c.l.b16 %v244
    %v281 = vunpack.c.l.b16 %v245
    %v282 = vunpack.c.l.b16 %v246
    %v283 = vunpack.c.l.b16 %v247
    %v284 = vunpack.c.l.b16 %v248
    %v285 = vunpack.c.l.b16 %v249
    %v286 = vunpack.c.l.b16 %v250
    %v287 = vunpack.c.l.b16 %v251
    %v288 = vunpack.c.l.b16 %v252
    %v289 = vunpack.c.l.b16 %v253
    %v290 = vunpack.c.l.b16 %v254
    %v291 = vunpack.c.l.b16 %v255
    %v292 = vunpack.c.l.b16 %v256
    %v293 = vunpack.c.l.b16 %v257
    %v294 = vpack.c.b16 %v279, %v278
    %v295 = vpack.c.b16 %v281, %v280
    %v296 = vpack.c.b16 %v283, %v282
    %v297 = vpack.c.b16 %v285, %v284
    %v298 = vpack.c.b16 %v287, %v286
    %v299 = vpack.c.b16 %v289, %v288
    %v300 = vpack.c.b16 %v291, %v290
    %v301 = vpack.c.b16 %v293, %v292
    %310 = vmatpush.bf16.msra.mxu0 %v301
    %311 = vmatpush.bf16.msra.mxu0 %v300
    %312 = vmatpush.bf16.msra.mxu0 %v299
    %313 = vmatpush.bf16.msra.mxu0 %v298
    %314 = vmatpush.bf16.msra.mxu0 %v297
    %315 = vmatpush.bf16.msra.mxu0 %v296
    %316 = vmatpush.bf16.msra.mxu0 %v295
    %317 = vmatpush.bf16.msra.mxu0 %v294
    %318 = vmatmul.bf16.gmra.mxu0 %v234
    %v319 = vpop.f32.mrf.mxu0
    %v320 = vadd.f32 %v260, %v319
    %v321 = vpop.f32.mrf.mxu0
    %v322 = vadd.f32 %v260, %v321
    %323 = vmatmul.bf16.gmra.mxu0 %v235
    %v324 = vpop.f32.mrf.mxu0
    %v325 = vadd.f32 %v260, %v324
    %v326 = vpop.f32.mrf.mxu0
    %v327 = vadd.f32 %v260, %v326
    %328 = vmatmul.bf16.gmra.mxu0 %v236
    %v329 = vpop.f32.mrf.mxu0
    %v330 = vadd.f32 %v260, %v329
    %v331 = vpop.f32.mrf.mxu0
    %v332 = vadd.f32 %v260, %v331
    %333 = vmatmul.bf16.gmra.mxu0 %v237
    %v334 = vpop.f32.mrf.mxu0
    %v335 = vadd.f32 %v260, %v334
    %v336 = vpop.f32.mrf.mxu0
    %v337 = vadd.f32 %v260, %v336
    %338 = vmatmul.bf16.gmra.mxu0 %v238
    %v339 = vpop.f32.mrf.mxu0
    %v340 = vadd.f32 %v260, %v339
    %v341 = vpop.f32.mrf.mxu0
    %v342 = vadd.f32 %v260, %v341
    %343 = vmatmul.bf16.gmra.mxu0 %v239
    %v344 = vpop.f32.mrf.mxu0
    %v345 = vadd.f32 %v260, %v344
    %v346 = vpop.f32.mrf.mxu0
    %v347 = vadd.f32 %v260, %v346
    %348 = vmatmul.bf16.gmra.mxu0 %v240
    %v349 = vpop.f32.mrf.mxu0
    %v350 = vadd.f32 %v260, %v349
    %v351 = vpop.f32.mrf.mxu0
    %v352 = vadd.f32 %v260, %v351
    %353 = vmatmul.bf16.gmra.mxu0 %v241
    %v354 = vpop.f32.mrf.mxu0
    %v355 = vadd.f32 %v260, %v354
    %v356 = vpop.f32.mrf.mxu0
    %v357 = vadd.f32 %v260, %v356
    %358 = vdwg.mxu0
    %359 = vadd.xlane.f32.xlu0 %v320
    %v360 = vpop.xlane.xlu0 %359
    %361 = vadd.xlane.f32.xlu0 %v322
    %v362 = vpop.xlane.xlu0 %361
    %363 = vadd.xlane.f32.xlu0 %v325
    %v364 = vpop.xlane.xlu0 %363
    %365 = vadd.xlane.f32.xlu0 %v327
    %v366 = vpop.xlane.xlu0 %365
    %367 = vadd.xlane.f32.xlu0 %v330
    %v368 = vpop.xlane.xlu0 %367
    %369 = vadd.xlane.f32.xlu0 %v332
    %v370 = vpop.xlane.xlu0 %369
    %371 = vadd.xlane.f32.xlu0 %v335
    %v372 = vpop.xlane.xlu0 %371
    %373 = vadd.xlane.f32.xlu0 %v337
    %v374 = vpop.xlane.xlu0 %373
    %375 = vadd.xlane.f32.xlu0 %v340
    %v376 = vpop.xlane.xlu0 %375
    %377 = vadd.xlane.f32.xlu0 %v342
    %v378 = vpop.xlane.xlu0 %377
    %379 = vadd.xlane.f32.xlu0 %v345
    %v380 = vpop.xlane.xlu0 %379
    %381 = vadd.xlane.f32.xlu0 %v347
    %v382 = vpop.xlane.xlu0 %381
    %383 = vadd.xlane.f32.xlu0 %v350
    %v384 = vpop.xlane.xlu0 %383
    %385 = vadd.xlane.f32.xlu0 %v352
    %v386 = vpop.xlane.xlu0 %385
    %387 = vadd.xlane.f32.xlu0 %v355
    %v388 = vpop.xlane.xlu0 %387
    %389 = vadd.xlane.f32.xlu0 %v357
    %v390 = vpop.xlane.xlu0 %389
    %v391 = vrcp.pop 128.0
    %v392 = vmul.f32 128.0, %v391
    %v393 = vsub.f32 1.0, %v392
    %v394 = vmul.f32 %v391, %v393
    %v395 = vadd.f32 %v391, %v394
    %vm396 = vweird.f32 %v391
    %v397 = vsel %vm396, %v391, %v395
    %v398 = vmul.f32 %v360, %v397
    %v399 = vmul.f32 %v362, %v397
    %v400 = vmul.f32 %v364, %v397
    %v401 = vmul.f32 %v366, %v397
    %v402 = vmul.f32 %v368, %v397
    %v403 = vmul.f32 %v370, %v397
    %v404 = vmul.f32 %v372, %v397
    %v405 = vmul.f32 %v374, %v397
    %v406 = vmul.f32 %v376, %v397
    %v407 = vmul.f32 %v378, %v397
    %v408 = vmul.f32 %v380, %v397
    %v409 = vmul.f32 %v382, %v397
    %v410 = vmul.f32 %v384, %v397
    %v411 = vmul.f32 %v386, %v397
    %v412 = vmul.f32 %v388, %v397
    %v413 = vmul.f32 %v390, %v397
    %v414 = vsub.f32 %v320, %v398
    %v415 = vsub.f32 %v322, %v399
    %v416 = vsub.f32 %v325, %v400
    %v417 = vsub.f32 %v327, %v401
    %v418 = vsub.f32 %v330, %v402
    %v419 = vsub.f32 %v332, %v403
    %v420 = vsub.f32 %v335, %v404
    %v421 = vsub.f32 %v337, %v405
    %v422 = vsub.f32 %v340, %v406
    %v423 = vsub.f32 %v342, %v407
    %v424 = vsub.f32 %v345, %v408
    %v425 = vsub.f32 %v347, %v409
    %v426 = vsub.f32 %v350, %v410
    %v427 = vsub.f32 %v352, %v411
    %v428 = vsub.f32 %v355, %v412
    %v429 = vsub.f32 %v357, %v413
    %v430 = vmul.f32 %v414, %v414
    %v431 = vmul.f32 %v415, %v415
    %v432 = vmul.f32 %v416, %v416
    %v433 = vmul.f32 %v417, %v417
    %v434 = vmul.f32 %v418, %v418
    %v435 = vmul.f32 %v419, %v419
    %v436 = vmul.f32 %v420, %v420
    %v437 = vmul.f32 %v421, %v421
    %v438 = vmul.f32 %v422, %v422
    %v439 = vmul.f32 %v423, %v423
    %v440 = vmul.f32 %v424, %v424
    %v441 = vmul.f32 %v425, %v425
    %v442 = vmul.f32 %v426, %v426
    %v443 = vmul.f32 %v427, %v427
    %v444 = vmul.f32 %v428, %v428
    %v445 = vmul.f32 %v429, %v429
    %446 = vadd.xlane.f32.xlu0 %v430
    %v447 = vpop.xlane.xlu0 %446
    %448 = vadd.xlane.f32.xlu0 %v431
    %v449 = vpop.xlane.xlu0 %448
    %450 = vadd.xlane.f32.xlu0 %v432
    %v451 = vpop.xlane.xlu0 %450
    %452 = vadd.xlane.f32.xlu0 %v433
    %v453 = vpop.xlane.xlu0 %452
    %454 = vadd.xlane.f32.xlu0 %v434
    %v455 = vpop.xlane.xlu0 %454
    %456 = vadd.xlane.f32.xlu0 %v435
    %v457 = vpop.xlane.xlu0 %456
    %458 = vadd.xlane.f32.xlu0 %v436
    %v459 = vpop.xlane.xlu0 %458
    %460 = vadd.xlane.f32.xlu0 %v437
    %v461 = vpop.xlane.xlu0 %460
    %462 = vadd.xlane.f32.xlu0 %v438
    %v463 = vpop.xlane.xlu0 %462
    %464 = vadd.xlane.f32.xlu0 %v439
    %v465 = vpop.xlane.xlu0 %464
    %466 = vadd.xlane.f32.xlu0 %v440
    %v467 = vpop.xlane.xlu0 %466
    %468 = vadd.xlane.f32.xlu0 %v441
    %v469 = vpop.xlane.xlu0 %468
    %470 = vadd.xlane.f32.xlu0 %v442
    %v471 = vpop.xlane.xlu0 %470
    %472 = vadd.xlane.f32.xlu0 %v443
    %v473 = vpop.xlane.xlu0 %472
    %474 = vadd.xlane.f32.xlu0 %v444
    %v475 = vpop.xlane.xlu0 %474
    %476 = vadd.xlane.f32.xlu0 %v445
    %v477 = vpop.xlane.xlu0 %476
    %v478 = vmul.f32 %v447, %v397
    %v479 = vmul.f32 %v449, %v397
    %v480 = vmul.f32 %v451, %v397
    %v481 = vmul.f32 %v453, %v397
    %v482 = vmul.f32 %v455, %v397
    %v483 = vmul.f32 %v457, %v397
    %v484 = vmul.f32 %v459, %v397
    %v485 = vmul.f32 %v461, %v397
    %v486 = vmul.f32 %v463, %v397
    %v487 = vmul.f32 %v465, %v397
    %v488 = vmul.f32 %v467, %v397
    %v489 = vmul.f32 %v469, %v397
    %v490 = vmul.f32 %v471, %v397
    %v491 = vmul.f32 %v473, %v397
    %v492 = vmul.f32 %v475, %v397
    %v493 = vmul.f32 %v477, %v397
    %v494 = vadd.f32 %v478, 1e-05
    %v495 = vadd.f32 %v479, 1e-05
    %v496 = vadd.f32 %v480, 1e-05
    %v497 = vadd.f32 %v481, 1e-05
    %v498 = vadd.f32 %v482, 1e-05
    %v499 = vadd.f32 %v483, 1e-05
    %v500 = vadd.f32 %v484, 1e-05
    %v501 = vadd.f32 %v485, 1e-05
    %v502 = vadd.f32 %v486, 1e-05
    %v503 = vadd.f32 %v487, 1e-05
    %v504 = vadd.f32 %v488, 1e-05
    %v505 = vadd.f32 %v489, 1e-05
    %v506 = vadd.f32 %v490, 1e-05
    %v507 = vadd.f32 %v491, 1e-05
    %v508 = vadd.f32 %v492, 1e-05
    %v509 = vadd.f32 %v493, 1e-05
    %v510 = vrsqrt.pop %v494
    %v511 = vmul.f32 %v510, %v494
    %v512 = vmul.f32 %v511, %v510
    %v513 = vmul.f32 0.5, %v512
    %v514 = vsub.f32 1.5, %v513
    %v515 = vmul.f32 %v510, %v514
    %vm516 = vweird.f32 %v494
    %vm517 = vweird.f32 %v510
    %vm518 = vmor %vm516, %vm517
    %v519 = vsel %vm518, %v510, %v515
    %v520 = vrsqrt.pop %v495
    %v521 = vmul.f32 %v520, %v495
    %v522 = vmul.f32 %v521, %v520
    %v523 = vmul.f32 0.5, %v522
    %v524 = vsub.f32 1.5, %v523
    %v525 = vmul.f32 %v520, %v524
    %vm526 = vweird.f32 %v495
    %vm527 = vweird.f32 %v520
    %vm528 = vmor %vm526, %vm527
    %v529 = vsel %vm528, %v520, %v525
    %v530 = vrsqrt.pop %v496
    %v531 = vmul.f32 %v530, %v496
    %v532 = vmul.f32 %v531, %v530
    %v533 = vmul.f32 0.5, %v532
    %v534 = vsub.f32 1.5, %v533
    %v535 = vmul.f32 %v530, %v534
    %vm536 = vweird.f32 %v496
    %vm537 = vweird.f32 %v530
    %vm538 = vmor %vm536, %vm537
    %v539 = vsel %vm538, %v530, %v535
    %v540 = vrsqrt.pop %v497
    %v541 = vmul.f32 %v540, %v497
    %v542 = vmul.f32 %v541, %v540
    %v543 = vmul.f32 0.5, %v542
    %v544 = vsub.f32 1.5, %v543
    %v545 = vmul.f32 %v540, %v544
    %vm546 = vweird.f32 %v497
    %vm547 = vweird.f32 %v540
    %vm548 = vmor %vm546, %vm547
    %v549 = vsel %vm548, %v540, %v545
    %v550 = vrsqrt.pop %v498
    %v551 = vmul.f32 %v550, %v498
    %v552 = vmul.f32 %v551, %v550
    %v553 = vmul.f32 0.5, %v552
    %v554 = vsub.f32 1.5, %v553
    %v555 = vmul.f32 %v550, %v554
    %vm556 = vweird.f32 %v498
    %vm557 = vweird.f32 %v550
    %vm558 = vmor %vm556, %vm557
    %v559 = vsel %vm558, %v550, %v555
    %v560 = vrsqrt.pop %v499
    %v561 = vmul.f32 %v560, %v499
    %v562 = vmul.f32 %v561, %v560
    %v563 = vmul.f32 0.5, %v562
    %v564 = vsub.f32 1.5, %v563
    %v565 = vmul.f32 %v560, %v564
    %vm566 = vweird.f32 %v499
    %vm567 = vweird.f32 %v560
    %vm568 = vmor %vm566, %vm567
    %v569 = vsel %vm568, %v560, %v565
    %v570 = vrsqrt.pop %v500
    %v571 = vmul.f32 %v570, %v500
    %v572 = vmul.f32 %v571, %v570
    %v573 = vmul.f32 0.5, %v572
    %v574 = vsub.f32 1.5, %v573
    %v575 = vmul.f32 %v570, %v574
    %vm576 = vweird.f32 %v500
    %vm577 = vweird.f32 %v570
    %vm578 = vmor %vm576, %vm577
    %v579 = vsel %vm578, %v570, %v575
    %v580 = vrsqrt.pop %v501
    %v581 = vmul.f32 %v580, %v501
    %v582 = vmul.f32 %v581, %v580
    %v583 = vmul.f32 0.5, %v582
    %v584 = vsub.f32 1.5, %v583
    %v585 = vmul.f32 %v580, %v584
    %vm586 = vweird.f32 %v501
    %vm587 = vweird.f32 %v580
    %vm588 = vmor %vm586, %vm587
    %v589 = vsel %vm588, %v580, %v585
    %v590 = vrsqrt.pop %v502
    %v591 = vmul.f32 %v590, %v502
    %v592 = vmul.f32 %v591, %v590
    %v593 = vmul.f32 0.5, %v592
    %v594 = vsub.f32 1.5, %v593
    %v595 = vmul.f32 %v590, %v594
    %vm596 = vweird.f32 %v502
    %vm597 = vweird.f32 %v590
    %vm598 = vmor %vm596, %vm597
    %v599 = vsel %vm598, %v590, %v595
    %v600 = vrsqrt.pop %v503
    %v601 = vmul.f32 %v600, %v503
    %v602 = vmul.f32 %v601, %v600
    %v603 = vmul.f32 0.5, %v602
    %v604 = vsub.f32 1.5, %v603
    %v605 = vmul.f32 %v600, %v604
    %vm606 = vweird.f32 %v503
    %vm607 = vweird.f32 %v600
    %vm608 = vmor %vm606, %vm607
    %v609 = vsel %vm608, %v600, %v605
    %v610 = vrsqrt.pop %v504
    %v611 = vmul.f32 %v610, %v504
    %v612 = vmul.f32 %v611, %v610
    %v613 = vmul.f32 0.5, %v612
    %v614 = vsub.f32 1.5, %v613
    %v615 = vmul.f32 %v610, %v614
    %vm616 = vweird.f32 %v504
    %vm617 = vweird.f32 %v610
    %vm618 = vmor %vm616, %vm617
    %v619 = vsel %vm618, %v610, %v615
    %v620 = vrsqrt.pop %v505
    %v621 = vmul.f32 %v620, %v505
    %v622 = vmul.f32 %v621, %v620
    %v623 = vmul.f32 0.5, %v622
    %v624 = vsub.f32 1.5, %v623
    %v625 = vmul.f32 %v620, %v624
    %vm626 = vweird.f32 %v505
    %vm627 = vweird.f32 %v620
    %vm628 = vmor %vm626, %vm627
    %v629 = vsel %vm628, %v620, %v625
    %v630 = vrsqrt.pop %v506
    %v631 = vmul.f32 %v630, %v506
    %v632 = vmul.f32 %v631, %v630
    %v633 = vmul.f32 0.5, %v632
    %v634 = vsub.f32 1.5, %v633
    %v635 = vmul.f32 %v630, %v634
    %vm636 = vweird.f32 %v506
    %vm637 = vweird.f32 %v630
    %vm638 = vmor %vm636, %vm637
    %v639 = vsel %vm638, %v630, %v635
    %v640 = vrsqrt.pop %v507
    %v641 = vmul.f32 %v640, %v507
    %v642 = vmul.f32 %v641, %v640
    %v643 = vmul.f32 0.5, %v642
    %v644 = vsub.f32 1.5, %v643
    %v645 = vmul.f32 %v640, %v644
    %vm646 = vweird.f32 %v507
    %vm647 = vweird.f32 %v640
    %vm648 = vmor %vm646, %vm647
    %v649 = vsel %vm648, %v640, %v645
    %v650 = vrsqrt.pop %v508
    %v651 = vmul.f32 %v650, %v508
    %v652 = vmul.f32 %v651, %v650
    %v653 = vmul.f32 0.5, %v652
    %v654 = vsub.f32 1.5, %v653
    %v655 = vmul.f32 %v650, %v654
    %vm656 = vweird.f32 %v508
    %vm657 = vweird.f32 %v650
    %vm658 = vmor %vm656, %vm657
    %v659 = vsel %vm658, %v650, %v655
    %v660 = vrsqrt.pop %v509
    %v661 = vmul.f32 %v660, %v509
    %v662 = vmul.f32 %v661, %v660
    %v663 = vmul.f32 0.5, %v662
    %v664 = vsub.f32 1.5, %v663
    %v665 = vmul.f32 %v660, %v664
    %vm666 = vweird.f32 %v509
    %vm667 = vweird.f32 %v660
    %vm668 = vmor %vm666, %vm667
    %v669 = vsel %vm668, %v660, %v665
    %v670 = vmul.f32 %v414, %v519
    %v671 = vmul.f32 %v415, %v529
    %v672 = vmul.f32 %v416, %v539
    %v673 = vmul.f32 %v417, %v549
    %v674 = vmul.f32 %v418, %v559
    %v675 = vmul.f32 %v419, %v569
    %v676 = vmul.f32 %v420, %v579
    %v677 = vmul.f32 %v421, %v589
    %v678 = vmul.f32 %v422, %v599
    %v679 = vmul.f32 %v423, %v609
    %v680 = vmul.f32 %v424, %v619
    %v681 = vmul.f32 %v425, %v629
    %v682 = vmul.f32 %v426, %v639
    %v683 = vmul.f32 %v427, %v649
    %v684 = vmul.f32 %v428, %v659
    %v685 = vmul.f32 %v429, %v669
    %v686 = vld [vmem:[#allocation9] sm:$0x1]
    %v688 = vperm.slane %v686, 0
    %v690 = vmul.f32 %v670, %v688
    %v691 = vmul.f32 %v671, %v688
    %v692 = vmul.f32 %v672, %v688
    %v693 = vmul.f32 %v673, %v688
    %v694 = vmul.f32 %v674, %v688
    %v695 = vmul.f32 %v675, %v688
    %v696 = vmul.f32 %v676, %v688
    %v697 = vmul.f32 %v677, %v688
    %v698 = vmul.f32 %v678, %v688
    %v699 = vmul.f32 %v679, %v688
    %v700 = vmul.f32 %v680, %v688
    %v701 = vmul.f32 %v681, %v688
    %v702 = vmul.f32 %v682, %v688
    %v703 = vmul.f32 %v683, %v688
    %v704 = vmul.f32 %v684, %v688
    %v705 = vmul.f32 %v685, %v688
    %v706 = vld [vmem:[#allocation10] sm:$0x1]
    %v708 = vperm.slane %v706, 0
    %v710 = vadd.f32 %v690, %v708
    %v711 = vadd.f32 %v691, %v708
    %v712 = vadd.f32 %v692, %v708
    %v713 = vadd.f32 %v693, %v708
    %v714 = vadd.f32 %v694, %v708
    %v715 = vadd.f32 %v695, %v708
    %v716 = vadd.f32 %v696, %v708
    %v717 = vadd.f32 %v697, %v708
    %v718 = vadd.f32 %v698, %v708
    %v719 = vadd.f32 %v699, %v708
    %v720 = vadd.f32 %v700, %v708
    %v721 = vadd.f32 %v701, %v708
    %v722 = vadd.f32 %v702, %v708
    %v723 = vadd.f32 %v703, %v708
    %v724 = vadd.f32 %v704, %v708
    %v725 = vadd.f32 %v705, %v708
    %726 = vst [vmem:[%s7] sm:$0xff] %v710
    %727 = vst [vmem:[%s7 + $0x8] sm:$0xff] %v711
    %728 = vst [vmem:[%s7 + $0x10] sm:$0xff] %v712
    %729 = vst [vmem:[%s7 + $0x18] sm:$0xff] %v713
    %730 = vst [vmem:[%s7 + $0x20] sm:$0xff] %v714
    %731 = vst [vmem:[%s7 + $0x28] sm:$0xff] %v715
    %732 = vst [vmem:[%s7 + $0x30] sm:$0xff] %v716
    %733 = vst [vmem:[%s7 + $0x38] sm:$0xff] %v717
    %734 = vst [vmem:[%s7 + $0x40] sm:$0xff] %v718
    %735 = vst [vmem:[%s7 + $0x48] sm:$0xff] %v719
    %736 = vst [vmem:[%s7 + $0x50] sm:$0xff] %v720
    %737 = vst [vmem:[%s7 + $0x58] sm:$0xff] %v721
    %738 = vst [vmem:[%s7 + $0x60] sm:$0xff] %v722
    %739 = vst [vmem:[%s7 + $0x68] sm:$0xff] %v723
    %740 = vst [vmem:[%s7 + $0x70] sm:$0xff] %v724
    %741 = vst [vmem:[%s7 + $0x78] sm:$0xff] %v725
    // Predicated region
    $region54: #{fv_mgn_forward.4} parent=1 // pred_check
      _
    $region55: #{fv_mgn_forward.4} parent=1 // pred_check_branch
      %743 = sbr.rel (0) target = $region57
    $region56: #{fv_mgn_forward.4} parent=1 // pred_region
      _
    $region57: #{fv_mgn_forward.4} parent=1 // pred_fallthru
      _
    // Predicated region
    $region58: #{fv_mgn_forward.4} parent=1 // pred_check
      _
    $region59: #{fv_mgn_forward.4} parent=1 // pred_check_branch
      %745 = sbr.rel (0) target = $region61
    $region60: #{fv_mgn_forward.4} parent=1 // pred_region
      _
    $region61: #{fv_mgn_forward.4} parent=1 // pred_fallthru
      _
    %746 = vsyncpa [#allocation3], 1
    %747 = vsyncpa [#allocation5], 1
    %748 = vsyncpa [#allocation8], 1
    %749 = vsyncpa [#allocation11], 1

// kernel: fv_mgn_forward.5
$region0: #{fv_mgn_forward.5}
  #allocation0 [shape = 'u32[]', space=smem, size = 0x4, offset = 0x4, fixed_abs, tag = 'smem constant byte address 0x4 - core index']
  #allocation1 [shape = 'u32[72,128]{1,0:T(1,128)}', space=vmem, size = 0x9000, scoped, tag = 'internal scratch']
  %s0 = inlined_call_operand.vmem [shape: f32[128,9], index: 0, kind: input, shape index: {}]
  %s1 = inlined_call_operand.hbm [shape: bf16[9,128], index: 1, kind: input, shape index: {}]
  %s2 = inlined_call_operand.hbm [shape: f32[1,128], index: 2, kind: input, shape index: {}]
  %s3 = inlined_call_operand.hbm [shape: bf16[128,128], index: 3, kind: input, shape index: {}]
  %s4 = inlined_call_operand.hbm [shape: f32[1,128], index: 4, kind: input, shape index: {}]
  %s5 = inlined_call_operand.hbm [shape: f32[1,128], index: 5, kind: input, shape index: {}]
  %s6 = inlined_call_operand.hbm [shape: f32[1,128], index: 6, kind: input, shape index: {}]
  %s7 = inlined_call_operand.vmem [shape: f32[128,128], index: 7, kind: output, shape index: {}]
  %s8 = sld [smem:[#allocation0]]
  $region62: #{fv_mgn_forward.5} parent=0
    _
  %s10 = ssub.s32 1, %s8
  %s11 = scalar_select 0, %s10, %s8
  $region1: #{fv_mgn_forward.5} parent=0
    #allocation2 [shape = 'u8[4096]{0}', space=vmem, size = 0x1000, scoped, tag = 'input window, operand 1, single buffered']
    #allocation3 [shape = 's32[1]{0}', space=sflag, size = 0x4, scoped, tag = 'scoped memory for fv_mgn_forward.5']
    #allocation4 [shape = 'u8[512]{0}', space=vmem, size = 0x400, scoped, tag = 'input window, operand 2, single buffered']
    #allocation5 [shape = 's32[1]{0}', space=sflag, size = 0x4, scoped, tag = 'scoped memory for fv_mgn_forward.5']
    #allocation6 [shape = 'u8[32768]{0}', space=vmem, size = 0x8000, scoped, tag = 'input window, operand 3, single buffered']
    #allocation7 [shape = 'u8[512]{0}', space=vmem, size = 0x400, scoped, tag = 'input window, operand 4, single buffered']
    #allocation8 [shape = 's32[1]{0}', space=sflag, size = 0x4, scoped, tag = 'scoped memory for fv_mgn_forward.5']
    #allocation9 [shape = 'u8[512]{0}', space=vmem, size = 0x400, scoped, tag = 'input window, operand 5, single buffered']
    #allocation10 [shape = 'u8[512]{0}', space=vmem, size = 0x400, scoped, tag = 'input window, operand 6, single buffered']
    #allocation11 [shape = 's32[1]{0}', space=sflag, size = 0x4, scoped, tag = 'scoped memory for fv_mgn_forward.5']
    %12 = vsyncpa [#allocation3], 0
    %13 = vsyncpa [#allocation5], 0
    %14 = vsyncpa [#allocation8], 0
    %15 = vsyncpa [#allocation11], 0
    // Predicated region
    $region2: #{fv_mgn_forward.5} parent=1 // pred_check
      _
    $region3: #{fv_mgn_forward.5} parent=1 // pred_check_branch
      %17 = sbr.rel (0) target = $region5
    $region4: #{fv_mgn_forward.5} parent=1 // pred_region
      _
    $region5: #{fv_mgn_forward.5} parent=1 // pred_fallthru
      _
    // Predicated region
    $region6: #{fv_mgn_forward.5} parent=1 // pred_check
      _
    $region7: #{fv_mgn_forward.5} parent=1 // pred_check_branch
      %19 = sbr.rel (0) target = $region9
    $region8: #{fv_mgn_forward.5} parent=1 // pred_region
      %21 = vsyncadd [#allocation3], 0
      %s22 = sshll.u32 %s1, 4
      %s23 = int_to_ptr.hbm [resolvable:$true] %s22
      %s24 = sshll.u32 [#allocation2], 4
      %s25 = int_to_ptr.vmem [resolvable:$true] %s24
      %30 = dma.hbm_to_vmem [thread:$0]  %s23, 128, %s25, [#allocation3], 64, 64, 4
    $region9: #{fv_mgn_forward.5} parent=1 // pred_fallthru
      _
    // Predicated region
    $region10: #{fv_mgn_forward.5} parent=1 // pred_check
      _
    $region11: #{fv_mgn_forward.5} parent=1 // pred_check_branch
      %32 = sbr.rel (0) target = $region13
    $region12: #{fv_mgn_forward.5} parent=1 // pred_region
      %34 = vsyncadd [#allocation5], 0
      %s36 = sshll.u32 %s2, 4
      %s37 = int_to_ptr.hbm [resolvable:$true] %s36
      %s38 = sshll.u32 [#allocation4], 4
      %s39 = int_to_ptr.vmem [resolvable:$true] %s38
      %41 = dma.hbm_to_vmem [thread:$0]  %s37, 16, %s39, [#allocation5]
    $region13: #{fv_mgn_forward.5} parent=1 // pred_fallthru
      _
    // Predicated region
    $region14: #{fv_mgn_forward.5} parent=1 // pred_check
      _
    $region15: #{fv_mgn_forward.5} parent=1 // pred_check_branch
      %43 = sbr.rel (0) target = $region17
    $region16: #{fv_mgn_forward.5} parent=1 // pred_region
      %45 = vsyncadd [#allocation5], 0
      %s46 = sshll.u32 %s3, 4
      %s47 = int_to_ptr.hbm [resolvable:$true] %s46
      %s48 = sshll.u32 [#allocation6], 4
      %s49 = int_to_ptr.vmem [resolvable:$true] %s48
      %54 = dma.hbm_to_vmem [thread:$0]  %s47, 1024, %s49, [#allocation5], 64, 64, 4
    $region17: #{fv_mgn_forward.5} parent=1 // pred_fallthru
      _
    // Predicated region
    $region18: #{fv_mgn_forward.5} parent=1 // pred_check
      _
    $region19: #{fv_mgn_forward.5} parent=1 // pred_check_branch
      %56 = sbr.rel (0) target = $region21
    $region20: #{fv_mgn_forward.5} parent=1 // pred_region
      %58 = vsyncadd [#allocation8], 0
      %s60 = sshll.u32 %s4, 4
      %s61 = int_to_ptr.hbm [resolvable:$true] %s60
      %s62 = sshll.u32 [#allocation7], 4
      %s63 = int_to_ptr.vmem [resolvable:$true] %s62
      %65 = dma.hbm_to_vmem [thread:$0]  %s61, 16, %s63, [#allocation8]
    $region21: #{fv_mgn_forward.5} parent=1 // pred_fallthru
      _
    // Predicated region
    $region22: #{fv_mgn_forward.5} parent=1 // pred_check
      _
    $region23: #{fv_mgn_forward.5} parent=1 // pred_check_branch
      %67 = sbr.rel (0) target = $region25
    $region24: #{fv_mgn_forward.5} parent=1 // pred_region
      %69 = vsyncadd [#allocation8], 0
      %s71 = sshll.u32 %s5, 4
      %s72 = int_to_ptr.hbm [resolvable:$true] %s71
      %s73 = sshll.u32 [#allocation9], 4
      %s74 = int_to_ptr.vmem [resolvable:$true] %s73
      %76 = dma.hbm_to_vmem [thread:$0]  %s72, 16, %s74, [#allocation8]
    $region25: #{fv_mgn_forward.5} parent=1 // pred_fallthru
      _
    // Predicated region
    $region26: #{fv_mgn_forward.5} parent=1 // pred_check
      _
    $region27: #{fv_mgn_forward.5} parent=1 // pred_check_branch
      %78 = sbr.rel (0) target = $region29
    $region28: #{fv_mgn_forward.5} parent=1 // pred_region
      %80 = vsyncadd [#allocation11], 0
      %s82 = sshll.u32 %s6, 4
      %s83 = int_to_ptr.hbm [resolvable:$true] %s82
      %s84 = sshll.u32 [#allocation10], 4
      %s85 = int_to_ptr.vmem [resolvable:$true] %s84
      %87 = dma.hbm_to_vmem [thread:$0]  %s83, 16, %s85, [#allocation11]
    $region29: #{fv_mgn_forward.5} parent=1 // pred_fallthru
      _
    // Predicated region
    $region30: #{fv_mgn_forward.5} parent=1 // pred_check
      _
    $region31: #{fv_mgn_forward.5} parent=1 // pred_check_branch
      %89 = sbr.rel (0) target = $region33
    $region32: #{fv_mgn_forward.5} parent=1 // pred_region
      %91 = dma.done [#allocation3], 128
    $region33: #{fv_mgn_forward.5} parent=1 // pred_fallthru
      _
    // Predicated region
    $region34: #{fv_mgn_forward.5} parent=1 // pred_check
      _
    $region35: #{fv_mgn_forward.5} parent=1 // pred_check_branch
      %93 = sbr.rel (0) target = $region37
    $region36: #{fv_mgn_forward.5} parent=1 // pred_region
      %95 = dma.done [#allocation5], 16
    $region37: #{fv_mgn_forward.5} parent=1 // pred_fallthru
      _
    // Predicated region
    $region38: #{fv_mgn_forward.5} parent=1 // pred_check
      _
    $region39: #{fv_mgn_forward.5} parent=1 // pred_check_branch
      %97 = sbr.rel (0) target = $region41
    $region40: #{fv_mgn_forward.5} parent=1 // pred_region
      %99 = dma.done [#allocation5], 1024
    $region41: #{fv_mgn_forward.5} parent=1 // pred_fallthru
      _
    // Predicated region
    $region42: #{fv_mgn_forward.5} parent=1 // pred_check
      _
    $region43: #{fv_mgn_forward.5} parent=1 // pred_check_branch
      %101 = sbr.rel (0) target = $region45
    $region44: #{fv_mgn_forward.5} parent=1 // pred_region
      %103 = dma.done [#allocation8], 16
    $region45: #{fv_mgn_forward.5} parent=1 // pred_fallthru
      _
    // Predicated region
    $region46: #{fv_mgn_forward.5} parent=1 // pred_check
      _
    $region47: #{fv_mgn_forward.5} parent=1 // pred_check_branch
      %105 = sbr.rel (0) target = $region49
    $region48: #{fv_mgn_forward.5} parent=1 // pred_region
      %107 = dma.done [#allocation8], 16
    $region49: #{fv_mgn_forward.5} parent=1 // pred_fallthru
      _
    // Predicated region
    $region50: #{fv_mgn_forward.5} parent=1 // pred_check
      _
    $region51: #{fv_mgn_forward.5} parent=1 // pred_check_branch
      %109 = sbr.rel (0) target = $region53
    $region52: #{fv_mgn_forward.5} parent=1 // pred_region
      %111 = dma.done [#allocation11], 16
    $region53: #{fv_mgn_forward.5} parent=1 // pred_fallthru
      _
    %v113 = vld [vmem:[%s0] sm:$0xff]
    %v114 = vld [vmem:[%s0 + $0x8] sm:$0xff]
    %v115 = vld [vmem:[%s0 + $0x10] sm:$0xff]
    %v116 = vld [vmem:[%s0 + $0x18] sm:$0xff]
    %v117 = vld [vmem:[%s0 + $0x20] sm:$0xff]
    %v118 = vld [vmem:[%s0 + $0x28] sm:$0xff]
    %v119 = vld [vmem:[%s0 + $0x30] sm:$0xff]
    %v120 = vld [vmem:[%s0 + $0x38] sm:$0xff]
    %v121 = vld [vmem:[%s0 + $0x40] sm:$0xff]
    %v122 = vld [vmem:[%s0 + $0x48] sm:$0xff]
    %v123 = vld [vmem:[%s0 + $0x50] sm:$0xff]
    %v124 = vld [vmem:[%s0 + $0x58] sm:$0xff]
    %v125 = vld [vmem:[%s0 + $0x60] sm:$0xff]
    %v126 = vld [vmem:[%s0 + $0x68] sm:$0xff]
    %v127 = vld [vmem:[%s0 + $0x70] sm:$0xff]
    %v128 = vld [vmem:[%s0 + $0x78] sm:$0xff]
    %v129 = vpack.c.bf16 %v114, %v113
    %v130 = vpack.c.bf16 %v116, %v115
    %v131 = vpack.c.bf16 %v118, %v117
    %v132 = vpack.c.bf16 %v120, %v119
    %v133 = vpack.c.bf16 %v122, %v121
    %v134 = vpack.c.bf16 %v124, %v123
    %v135 = vpack.c.bf16 %v126, %v125
    %v136 = vpack.c.bf16 %v128, %v127
    %v137 = vld [vmem:[#allocation2] sm:$0xf]
    %v138 = vld [vmem:[#allocation2 + $0x4] sm:$0x1]
    %v139 = vld [vmem:[#allocation4] sm:$0x1]
    %v141 = vperm.slane %v139, 0
    %v145 = vunpack.c.l.b16 %v137
    %v146 = vunpack.c.l.b16 %v138
    %v147 = vpack.c.b16 %v146, %v145
    %vm148 = vcmask 72704
    %v150 = vsel %vm148, %v129, 0
    %v153 = vsel %vm148, %v130, 0
    %v156 = vsel %vm148, %v131, 0
    %v159 = vsel %vm148, %v132, 0
    %v162 = vsel %vm148, %v133, 0
    %v165 = vsel %vm148, %v134, 0
    %v168 = vsel %vm148, %v135, 0
    %v171 = vsel %vm148, %v136, 0
    %vm173 = vcmask 1043456
    %vm174 = vcmask 1044480
    %v175 = vsel %vm173, 4294967295, 65535
    %v176 = vsel %vm174, %v175, 0
    %v178 = vand.u32 %v147, %v176
    %180 = vmatpush.bf16.msra.mxu0 0
    %181 = vmatpush.bf16.msra.mxu0 0
    %182 = vmatpush.bf16.msra.mxu0 0
    %183 = vmatpush.bf16.msra.mxu0 0
    %184 = vmatpush.bf16.msra.mxu0 0
    %185 = vmatpush.bf16.msra.mxu0 0
    %186 = vmatpush.bf16.msra.mxu0 0
    %187 = vmatpush.bf16.msra.mxu0 %v178
    %188 = vmatmul.bf16.gmra.mxu0 %v150
    %v189 = vpop.f32.mrf.mxu0
    %v190 = vadd.f32 %v141, %v189
    %v191 = vpop.f32.mrf.mxu0
    %v192 = vadd.f32 %v141, %v191
    %193 = vmatmul.bf16.gmra.mxu0 %v153
    %v194 = vpop.f32.mrf.mxu0
    %v195 = vadd.f32 %v141, %v194
    %v196 = vpop.f32.mrf.mxu0
    %v197 = vadd.f32 %v141, %v196
    %198 = vmatmul.bf16.gmra.mxu0 %v156
    %v199 = vpop.f32.mrf.mxu0
    %v200 = vadd.f32 %v141, %v199
    %v201 = vpop.f32.mrf.mxu0
    %v202 = vadd.f32 %v141, %v201
    %203 = vmatmul.bf16.gmra.mxu0 %v159
    %v204 = vpop.f32.mrf.mxu0
    %v205 = vadd.f32 %v141, %v204
    %v206 = vpop.f32.mrf.mxu0
    %v207 = vadd.f32 %v141, %v206
    %208 = vmatmul.bf16.gmra.mxu0 %v162
    %v209 = vpop.f32.mrf.mxu0
    %v210 = vadd.f32 %v141, %v209
    %v211 = vpop.f32.mrf.mxu0
    %v212 = vadd.f32 %v141, %v211
    %213 = vmatmul.bf16.gmra.mxu0 %v165
    %v214 = vpop.f32.mrf.mxu0
    %v215 = vadd.f32 %v141, %v214
    %v216 = vpop.f32.mrf.mxu0
    %v217 = vadd.f32 %v141, %v216
    %218 = vmatmul.bf16.gmra.mxu0 %v168
    %v219 = vpop.f32.mrf.mxu0
    %v220 = vadd.f32 %v141, %v219
    %v221 = vpop.f32.mrf.mxu0
    %v222 = vadd.f32 %v141, %v221
    %223 = vmatmul.bf16.gmra.mxu0 %v171
    %v224 = vpop.f32.mrf.mxu0
    %v225 = vadd.f32 %v141, %v224
    %v226 = vpop.f32.mrf.mxu0
    %v227 = vadd.f32 %v141, %v226
    %228 = vdwg.mxu0
    %v229 = vmax.f32 %v190, 0.0
    %v230 = vmax.f32 %v192, 0.0
    %v231 = vmax.f32 %v195, 0.0
    %v232 = vmax.f32 %v197, 0.0
    %v233 = vmax.f32 %v200, 0.0
    %v234 = vmax.f32 %v202, 0.0
    %v235 = vmax.f32 %v205, 0.0
    %v236 = vmax.f32 %v207, 0.0
    %v237 = vmax.f32 %v210, 0.0
    %v238 = vmax.f32 %v212, 0.0
    %v239 = vmax.f32 %v215, 0.0
    %v240 = vmax.f32 %v217, 0.0
    %v241 = vmax.f32 %v220, 0.0
    %v242 = vmax.f32 %v222, 0.0
    %v243 = vmax.f32 %v225, 0.0
    %v244 = vmax.f32 %v227, 0.0
    %v245 = vpack.c.bf16 %v230, %v229
    %v246 = vpack.c.bf16 %v232, %v231
    %v247 = vpack.c.bf16 %v234, %v233
    %v248 = vpack.c.bf16 %v236, %v235
    %v249 = vpack.c.bf16 %v238, %v237
    %v250 = vpack.c.bf16 %v240, %v239
    %v251 = vpack.c.bf16 %v242, %v241
    %v252 = vpack.c.bf16 %v244, %v243
    %v253 = vld [vmem:[#allocation6] sm:$0xf]
    %v254 = vld [vmem:[#allocation6 + $0x4] sm:$0xf]
    %v255 = vld [vmem:[#allocation6 + $0x8] sm:$0xf]
    %v256 = vld [vmem:[#allocation6 + $0xc] sm:$0xf]
    %v257 = vld [vmem:[#allocation6 + $0x10] sm:$0xf]
    %v258 = vld [vmem:[#allocation6 + $0x14] sm:$0xf]
    %v259 = vld [vmem:[#allocation6 + $0x18] sm:$0xf]
    %v260 = vld [vmem:[#allocation6 + $0x1c] sm:$0xf]
    %v261 = vld [vmem:[#allocation6 + $0x20] sm:$0xf]
    %v262 = vld [vmem:[#allocation6 + $0x24] sm:$0xf]
    %v263 = vld [vmem:[#allocation6 + $0x28] sm:$0xf]
    %v264 = vld [vmem:[#allocation6 + $0x2c] sm:$0xf]
    %v265 = vld [vmem:[#allocation6 + $0x30] sm:$0xf]
    %v266 = vld [vmem:[#allocation6 + $0x34] sm:$0xf]
    %v267 = vld [vmem:[#allocation6 + $0x38] sm:$0xf]
    %v268 = vld [vmem:[#allocation6 + $0x3c] sm:$0xf]
    %v269 = vld [vmem:[#allocation7] sm:$0x1]
    %v271 = vperm.slane %v269, 0
    %v289 = vunpack.c.l.b16 %v253
    %v290 = vunpack.c.l.b16 %v254
    %v291 = vunpack.c.l.b16 %v255
    %v292 = vunpack.c.l.b16 %v256
    %v293 = vunpack.c.l.b16 %v257
    %v294 = vunpack.c.l.b16 %v258
    %v295 = vunpack.c.l.b16 %v259
    %v296 = vunpack.c.l.b16 %v260
    %v297 = vunpack.c.l.b16 %v261
    %v298 = vunpack.c.l.b16 %v262
    %v299 = vunpack.c.l.b16 %v263
    %v300 = vunpack.c.l.b16 %v264
    %v301 = vunpack.c.l.b16 %v265
    %v302 = vunpack.c.l.b16 %v266
    %v303 = vunpack.c.l.b16 %v267
    %v304 = vunpack.c.l.b16 %v268
    %v305 = vpack.c.b16 %v290, %v289
    %v306 = vpack.c.b16 %v292, %v291
    %v307 = vpack.c.b16 %v294, %v293
    %v308 = vpack.c.b16 %v296, %v295
    %v309 = vpack.c.b16 %v298, %v297
    %v310 = vpack.c.b16 %v300, %v299
    %v311 = vpack.c.b16 %v302, %v301
    %v312 = vpack.c.b16 %v304, %v303
    %321 = vmatpush.bf16.msra.mxu0 %v312
    %322 = vmatpush.bf16.msra.mxu0 %v311
    %323 = vmatpush.bf16.msra.mxu0 %v310
    %324 = vmatpush.bf16.msra.mxu0 %v309
    %325 = vmatpush.bf16.msra.mxu0 %v308
    %326 = vmatpush.bf16.msra.mxu0 %v307
    %327 = vmatpush.bf16.msra.mxu0 %v306
    %328 = vmatpush.bf16.msra.mxu0 %v305
    %329 = vmatmul.bf16.gmra.mxu0 %v245
    %v330 = vpop.f32.mrf.mxu0
    %v331 = vadd.f32 %v271, %v330
    %v332 = vpop.f32.mrf.mxu0
    %v333 = vadd.f32 %v271, %v332
    %334 = vmatmul.bf16.gmra.mxu0 %v246
    %v335 = vpop.f32.mrf.mxu0
    %v336 = vadd.f32 %v271, %v335
    %v337 = vpop.f32.mrf.mxu0
    %v338 = vadd.f32 %v271, %v337
    %339 = vmatmul.bf16.gmra.mxu0 %v247
    %v340 = vpop.f32.mrf.mxu0
    %v341 = vadd.f32 %v271, %v340
    %v342 = vpop.f32.mrf.mxu0
    %v343 = vadd.f32 %v271, %v342
    %344 = vmatmul.bf16.gmra.mxu0 %v248
    %v345 = vpop.f32.mrf.mxu0
    %v346 = vadd.f32 %v271, %v345
    %v347 = vpop.f32.mrf.mxu0
    %v348 = vadd.f32 %v271, %v347
    %349 = vmatmul.bf16.gmra.mxu0 %v249
    %v350 = vpop.f32.mrf.mxu0
    %v351 = vadd.f32 %v271, %v350
    %v352 = vpop.f32.mrf.mxu0
    %v353 = vadd.f32 %v271, %v352
    %354 = vmatmul.bf16.gmra.mxu0 %v250
    %v355 = vpop.f32.mrf.mxu0
    %v356 = vadd.f32 %v271, %v355
    %v357 = vpop.f32.mrf.mxu0
    %v358 = vadd.f32 %v271, %v357
    %359 = vmatmul.bf16.gmra.mxu0 %v251
    %v360 = vpop.f32.mrf.mxu0
    %v361 = vadd.f32 %v271, %v360
    %v362 = vpop.f32.mrf.mxu0
    %v363 = vadd.f32 %v271, %v362
    %364 = vmatmul.bf16.gmra.mxu0 %v252
    %v365 = vpop.f32.mrf.mxu0
    %v366 = vadd.f32 %v271, %v365
    %v367 = vpop.f32.mrf.mxu0
    %v368 = vadd.f32 %v271, %v367
    %369 = vdwg.mxu0
    %370 = vadd.xlane.f32.xlu0 %v331
    %v371 = vpop.xlane.xlu0 %370
    %372 = vadd.xlane.f32.xlu0 %v333
    %v373 = vpop.xlane.xlu0 %372
    %374 = vadd.xlane.f32.xlu0 %v336
    %v375 = vpop.xlane.xlu0 %374
    %376 = vadd.xlane.f32.xlu0 %v338
    %v377 = vpop.xlane.xlu0 %376
    %378 = vadd.xlane.f32.xlu0 %v341
    %v379 = vpop.xlane.xlu0 %378
    %380 = vadd.xlane.f32.xlu0 %v343
    %v381 = vpop.xlane.xlu0 %380
    %382 = vadd.xlane.f32.xlu0 %v346
    %v383 = vpop.xlane.xlu0 %382
    %384 = vadd.xlane.f32.xlu0 %v348
    %v385 = vpop.xlane.xlu0 %384
    %386 = vadd.xlane.f32.xlu0 %v351
    %v387 = vpop.xlane.xlu0 %386
    %388 = vadd.xlane.f32.xlu0 %v353
    %v389 = vpop.xlane.xlu0 %388
    %390 = vadd.xlane.f32.xlu0 %v356
    %v391 = vpop.xlane.xlu0 %390
    %392 = vadd.xlane.f32.xlu0 %v358
    %v393 = vpop.xlane.xlu0 %392
    %394 = vadd.xlane.f32.xlu0 %v361
    %v395 = vpop.xlane.xlu0 %394
    %396 = vadd.xlane.f32.xlu0 %v363
    %v397 = vpop.xlane.xlu0 %396
    %398 = vadd.xlane.f32.xlu0 %v366
    %v399 = vpop.xlane.xlu0 %398
    %400 = vadd.xlane.f32.xlu0 %v368
    %v401 = vpop.xlane.xlu0 %400
    %v402 = vrcp.pop 128.0
    %v403 = vmul.f32 128.0, %v402
    %v404 = vsub.f32 1.0, %v403
    %v405 = vmul.f32 %v402, %v404
    %v406 = vadd.f32 %v402, %v405
    %vm407 = vweird.f32 %v402
    %v408 = vsel %vm407, %v402, %v406
    %v409 = vmul.f32 %v371, %v408
    %v410 = vmul.f32 %v373, %v408
    %v411 = vmul.f32 %v375, %v408
    %v412 = vmul.f32 %v377, %v408
    %v413 = vmul.f32 %v379, %v408
    %v414 = vmul.f32 %v381, %v408
    %v415 = vmul.f32 %v383, %v408
    %v416 = vmul.f32 %v385, %v408
    %v417 = vmul.f32 %v387, %v408
    %v418 = vmul.f32 %v389, %v408
    %v419 = vmul.f32 %v391, %v408
    %v420 = vmul.f32 %v393, %v408
    %v421 = vmul.f32 %v395, %v408
    %v422 = vmul.f32 %v397, %v408
    %v423 = vmul.f32 %v399, %v408
    %v424 = vmul.f32 %v401, %v408
    %v425 = vsub.f32 %v331, %v409
    %v426 = vsub.f32 %v333, %v410
    %v427 = vsub.f32 %v336, %v411
    %v428 = vsub.f32 %v338, %v412
    %v429 = vsub.f32 %v341, %v413
    %v430 = vsub.f32 %v343, %v414
    %v431 = vsub.f32 %v346, %v415
    %v432 = vsub.f32 %v348, %v416
    %v433 = vsub.f32 %v351, %v417
    %v434 = vsub.f32 %v353, %v418
    %v435 = vsub.f32 %v356, %v419
    %v436 = vsub.f32 %v358, %v420
    %v437 = vsub.f32 %v361, %v421
    %v438 = vsub.f32 %v363, %v422
    %v439 = vsub.f32 %v366, %v423
    %v440 = vsub.f32 %v368, %v424
    %v441 = vmul.f32 %v425, %v425
    %v442 = vmul.f32 %v426, %v426
    %v443 = vmul.f32 %v427, %v427
    %v444 = vmul.f32 %v428, %v428
    %v445 = vmul.f32 %v429, %v429
    %v446 = vmul.f32 %v430, %v430
    %v447 = vmul.f32 %v431, %v431
    %v448 = vmul.f32 %v432, %v432
    %v449 = vmul.f32 %v433, %v433
    %v450 = vmul.f32 %v434, %v434
    %v451 = vmul.f32 %v435, %v435
    %v452 = vmul.f32 %v436, %v436
    %v453 = vmul.f32 %v437, %v437
    %v454 = vmul.f32 %v438, %v438
    %v455 = vmul.f32 %v439, %v439
    %v456 = vmul.f32 %v440, %v440
    %457 = vadd.xlane.f32.xlu0 %v441
    %v458 = vpop.xlane.xlu0 %457
    %459 = vadd.xlane.f32.xlu0 %v442
    %v460 = vpop.xlane.xlu0 %459
    %461 = vadd.xlane.f32.xlu0 %v443
    %v462 = vpop.xlane.xlu0 %461
    %463 = vadd.xlane.f32.xlu0 %v444
    %v464 = vpop.xlane.xlu0 %463
    %465 = vadd.xlane.f32.xlu0 %v445
    %v466 = vpop.xlane.xlu0 %465
    %467 = vadd.xlane.f32.xlu0 %v446
    %v468 = vpop.xlane.xlu0 %467
    %469 = vadd.xlane.f32.xlu0 %v447
    %v470 = vpop.xlane.xlu0 %469
    %471 = vadd.xlane.f32.xlu0 %v448
    %v472 = vpop.xlane.xlu0 %471
    %473 = vadd.xlane.f32.xlu0 %v449
    %v474 = vpop.xlane.xlu0 %473
    %475 = vadd.xlane.f32.xlu0 %v450
    %v476 = vpop.xlane.xlu0 %475
    %477 = vadd.xlane.f32.xlu0 %v451
    %v478 = vpop.xlane.xlu0 %477
    %479 = vadd.xlane.f32.xlu0 %v452
    %v480 = vpop.xlane.xlu0 %479
    %481 = vadd.xlane.f32.xlu0 %v453
    %v482 = vpop.xlane.xlu0 %481
    %483 = vadd.xlane.f32.xlu0 %v454
    %v484 = vpop.xlane.xlu0 %483
    %485 = vadd.xlane.f32.xlu0 %v455
    %v486 = vpop.xlane.xlu0 %485
    %487 = vadd.xlane.f32.xlu0 %v456
    %v488 = vpop.xlane.xlu0 %487
    %v489 = vmul.f32 %v458, %v408
    %v490 = vmul.f32 %v460, %v408
    %v491 = vmul.f32 %v462, %v408
    %v492 = vmul.f32 %v464, %v408
    %v493 = vmul.f32 %v466, %v408
    %v494 = vmul.f32 %v468, %v408
    %v495 = vmul.f32 %v470, %v408
    %v496 = vmul.f32 %v472, %v408
    %v497 = vmul.f32 %v474, %v408
    %v498 = vmul.f32 %v476, %v408
    %v499 = vmul.f32 %v478, %v408
    %v500 = vmul.f32 %v480, %v408
    %v501 = vmul.f32 %v482, %v408
    %v502 = vmul.f32 %v484, %v408
    %v503 = vmul.f32 %v486, %v408
    %v504 = vmul.f32 %v488, %v408
    %v505 = vadd.f32 %v489, 1e-05
    %v506 = vadd.f32 %v490, 1e-05
    %v507 = vadd.f32 %v491, 1e-05
    %v508 = vadd.f32 %v492, 1e-05
    %v509 = vadd.f32 %v493, 1e-05
    %v510 = vadd.f32 %v494, 1e-05
    %v511 = vadd.f32 %v495, 1e-05
    %v512 = vadd.f32 %v496, 1e-05
    %v513 = vadd.f32 %v497, 1e-05
    %v514 = vadd.f32 %v498, 1e-05
    %v515 = vadd.f32 %v499, 1e-05
    %v516 = vadd.f32 %v500, 1e-05
    %v517 = vadd.f32 %v501, 1e-05
    %v518 = vadd.f32 %v502, 1e-05
    %v519 = vadd.f32 %v503, 1e-05
    %v520 = vadd.f32 %v504, 1e-05
    %v521 = vrsqrt.pop %v505
    %v522 = vmul.f32 %v521, %v505
    %v523 = vmul.f32 %v522, %v521
    %v524 = vmul.f32 0.5, %v523
    %v525 = vsub.f32 1.5, %v524
    %v526 = vmul.f32 %v521, %v525
    %vm527 = vweird.f32 %v505
    %vm528 = vweird.f32 %v521
    %vm529 = vmor %vm527, %vm528
    %v530 = vsel %vm529, %v521, %v526
    %v531 = vrsqrt.pop %v506
    %v532 = vmul.f32 %v531, %v506
    %v533 = vmul.f32 %v532, %v531
    %v534 = vmul.f32 0.5, %v533
    %v535 = vsub.f32 1.5, %v534
    %v536 = vmul.f32 %v531, %v535
    %vm537 = vweird.f32 %v506
    %vm538 = vweird.f32 %v531
    %vm539 = vmor %vm537, %vm538
    %v540 = vsel %vm539, %v531, %v536
    %v541 = vrsqrt.pop %v507
    %v542 = vmul.f32 %v541, %v507
    %v543 = vmul.f32 %v542, %v541
    %v544 = vmul.f32 0.5, %v543
    %v545 = vsub.f32 1.5, %v544
    %v546 = vmul.f32 %v541, %v545
    %vm547 = vweird.f32 %v507
    %vm548 = vweird.f32 %v541
    %vm549 = vmor %vm547, %vm548
    %v550 = vsel %vm549, %v541, %v546
    %v551 = vrsqrt.pop %v508
    %v552 = vmul.f32 %v551, %v508
    %v553 = vmul.f32 %v552, %v551
    %v554 = vmul.f32 0.5, %v553
    %v555 = vsub.f32 1.5, %v554
    %v556 = vmul.f32 %v551, %v555
    %vm557 = vweird.f32 %v508
    %vm558 = vweird.f32 %v551
    %vm559 = vmor %vm557, %vm558
    %v560 = vsel %vm559, %v551, %v556
    %v561 = vrsqrt.pop %v509
    %v562 = vmul.f32 %v561, %v509
    %v563 = vmul.f32 %v562, %v561
    %v564 = vmul.f32 0.5, %v563
    %v565 = vsub.f32 1.5, %v564
    %v566 = vmul.f32 %v561, %v565
    %vm567 = vweird.f32 %v509
    %vm568 = vweird.f32 %v561
    %vm569 = vmor %vm567, %vm568
    %v570 = vsel %vm569, %v561, %v566
    %v571 = vrsqrt.pop %v510
    %v572 = vmul.f32 %v571, %v510
    %v573 = vmul.f32 %v572, %v571
    %v574 = vmul.f32 0.5, %v573
    %v575 = vsub.f32 1.5, %v574
    %v576 = vmul.f32 %v571, %v575
    %vm577 = vweird.f32 %v510
    %vm578 = vweird.f32 %v571
    %vm579 = vmor %vm577, %vm578
    %v580 = vsel %vm579, %v571, %v576
    %v581 = vrsqrt.pop %v511
    %v582 = vmul.f32 %v581, %v511
    %v583 = vmul.f32 %v582, %v581
    %v584 = vmul.f32 0.5, %v583
    %v585 = vsub.f32 1.5, %v584
    %v586 = vmul.f32 %v581, %v585
    %vm587 = vweird.f32 %v511
    %vm588 = vweird.f32 %v581
    %vm589 = vmor %vm587, %vm588
    %v590 = vsel %vm589, %v581, %v586
    %v591 = vrsqrt.pop %v512
    %v592 = vmul.f32 %v591, %v512
    %v593 = vmul.f32 %v592, %v591
    %v594 = vmul.f32 0.5, %v593
    %v595 = vsub.f32 1.5, %v594
    %v596 = vmul.f32 %v591, %v595
    %vm597 = vweird.f32 %v512
    %vm598 = vweird.f32 %v591
    %vm599 = vmor %vm597, %vm598
    %v600 = vsel %vm599, %v591, %v596
    %v601 = vrsqrt.pop %v513
    %v602 = vmul.f32 %v601, %v513
    %v603 = vmul.f32 %v602, %v601
    %v604 = vmul.f32 0.5, %v603
    %v605 = vsub.f32 1.5, %v604
    %v606 = vmul.f32 %v601, %v605
    %vm607 = vweird.f32 %v513
    %vm608 = vweird.f32 %v601
    %vm609 = vmor %vm607, %vm608
    %v610 = vsel %vm609, %v601, %v606
    %v611 = vrsqrt.pop %v514
    %v612 = vmul.f32 %v611, %v514
    %v613 = vmul.f32 %v612, %v611
    %v614 = vmul.f32 0.5, %v613
    %v615 = vsub.f32 1.5, %v614
    %v616 = vmul.f32 %v611, %v615
    %vm617 = vweird.f32 %v514
    %vm618 = vweird.f32 %v611
    %vm619 = vmor %vm617, %vm618
    %v620 = vsel %vm619, %v611, %v616
    %v621 = vrsqrt.pop %v515
    %v622 = vmul.f32 %v621, %v515
    %v623 = vmul.f32 %v622, %v621
    %v624 = vmul.f32 0.5, %v623
    %v625 = vsub.f32 1.5, %v624
    %v626 = vmul.f32 %v621, %v625
    %vm627 = vweird.f32 %v515
    %vm628 = vweird.f32 %v621
    %vm629 = vmor %vm627, %vm628
    %v630 = vsel %vm629, %v621, %v626
    %v631 = vrsqrt.pop %v516
    %v632 = vmul.f32 %v631, %v516
    %v633 = vmul.f32 %v632, %v631
    %v634 = vmul.f32 0.5, %v633
    %v635 = vsub.f32 1.5, %v634
    %v636 = vmul.f32 %v631, %v635
    %vm637 = vweird.f32 %v516
    %vm638 = vweird.f32 %v631
    %vm639 = vmor %vm637, %vm638
    %v640 = vsel %vm639, %v631, %v636
    %v641 = vrsqrt.pop %v517
    %v642 = vmul.f32 %v641, %v517
    %v643 = vmul.f32 %v642, %v641
    %v644 = vmul.f32 0.5, %v643
    %v645 = vsub.f32 1.5, %v644
    %v646 = vmul.f32 %v641, %v645
    %vm647 = vweird.f32 %v517
    %vm648 = vweird.f32 %v641
    %vm649 = vmor %vm647, %vm648
    %v650 = vsel %vm649, %v641, %v646
    %v651 = vrsqrt.pop %v518
    %v652 = vmul.f32 %v651, %v518
    %v653 = vmul.f32 %v652, %v651
    %v654 = vmul.f32 0.5, %v653
    %v655 = vsub.f32 1.5, %v654
    %v656 = vmul.f32 %v651, %v655
    %vm657 = vweird.f32 %v518
    %vm658 = vweird.f32 %v651
    %vm659 = vmor %vm657, %vm658
    %v660 = vsel %vm659, %v651, %v656
    %v661 = vrsqrt.pop %v519
    %v662 = vmul.f32 %v661, %v519
    %v663 = vmul.f32 %v662, %v661
    %v664 = vmul.f32 0.5, %v663
    %v665 = vsub.f32 1.5, %v664
    %v666 = vmul.f32 %v661, %v665
    %vm667 = vweird.f32 %v519
    %vm668 = vweird.f32 %v661
    %vm669 = vmor %vm667, %vm668
    %v670 = vsel %vm669, %v661, %v666
    %v671 = vrsqrt.pop %v520
    %v672 = vmul.f32 %v671, %v520
    %v673 = vmul.f32 %v672, %v671
    %v674 = vmul.f32 0.5, %v673
    %v675 = vsub.f32 1.5, %v674
    %v676 = vmul.f32 %v671, %v675
    %vm677 = vweird.f32 %v520
    %vm678 = vweird.f32 %v671
    %vm679 = vmor %vm677, %vm678
    %v680 = vsel %vm679, %v671, %v676
    %v681 = vmul.f32 %v425, %v530
    %v682 = vmul.f32 %v426, %v540
    %v683 = vmul.f32 %v427, %v550
    %v684 = vmul.f32 %v428, %v560
    %v685 = vmul.f32 %v429, %v570
    %v686 = vmul.f32 %v430, %v580
    %v687 = vmul.f32 %v431, %v590
    %v688 = vmul.f32 %v432, %v600
    %v689 = vmul.f32 %v433, %v610
    %v690 = vmul.f32 %v434, %v620
    %v691 = vmul.f32 %v435, %v630
    %v692 = vmul.f32 %v436, %v640
    %v693 = vmul.f32 %v437, %v650
    %v694 = vmul.f32 %v438, %v660
    %v695 = vmul.f32 %v439, %v670
    %v696 = vmul.f32 %v440, %v680
    %v697 = vld [vmem:[#allocation9] sm:$0x1]
    %v699 = vperm.slane %v697, 0
    %v701 = vmul.f32 %v681, %v699
    %v702 = vmul.f32 %v682, %v699
    %v703 = vmul.f32 %v683, %v699
    %v704 = vmul.f32 %v684, %v699
    %v705 = vmul.f32 %v685, %v699
    %v706 = vmul.f32 %v686, %v699
    %v707 = vmul.f32 %v687, %v699
    %v708 = vmul.f32 %v688, %v699
    %v709 = vmul.f32 %v689, %v699
    %v710 = vmul.f32 %v690, %v699
    %v711 = vmul.f32 %v691, %v699
    %v712 = vmul.f32 %v692, %v699
    %v713 = vmul.f32 %v693, %v699
    %v714 = vmul.f32 %v694, %v699
    %v715 = vmul.f32 %v695, %v699
    %v716 = vmul.f32 %v696, %v699
    %v717 = vld [vmem:[#allocation10] sm:$0x1]
    %v719 = vperm.slane %v717, 0
    %v721 = vadd.f32 %v701, %v719
    %v722 = vadd.f32 %v702, %v719
    %v723 = vadd.f32 %v703, %v719
    %v724 = vadd.f32 %v704, %v719
    %v725 = vadd.f32 %v705, %v719
    %v726 = vadd.f32 %v706, %v719
    %v727 = vadd.f32 %v707, %v719
    %v728 = vadd.f32 %v708, %v719
    %v729 = vadd.f32 %v709, %v719
    %v730 = vadd.f32 %v710, %v719
    %v731 = vadd.f32 %v711, %v719
    %v732 = vadd.f32 %v712, %v719
    %v733 = vadd.f32 %v713, %v719
    %v734 = vadd.f32 %v714, %v719
    %v735 = vadd.f32 %v715, %v719
    %v736 = vadd.f32 %v716, %v719
    %737 = vst [vmem:[%s7] sm:$0xff] %v721
    %738 = vst [vmem:[%s7 + $0x8] sm:$0xff] %v722
    %739 = vst [vmem:[%s7 + $0x10] sm:$0xff] %v723
    %740 = vst [vmem:[%s7 + $0x18] sm:$0xff] %v724
    %741 = vst [vmem:[%s7 + $0x20] sm:$0xff] %v725
    %742 = vst [vmem:[%s7 + $0x28] sm:$0xff] %v726
    %743 = vst [vmem:[%s7 + $0x30] sm:$0xff] %v727
    %744 = vst [vmem:[%s7 + $0x38] sm:$0xff] %v728
    %745 = vst [vmem:[%s7 + $0x40] sm:$0xff] %v729
    %746 = vst [vmem:[%s7 + $0x48] sm:$0xff] %v730
    %747 = vst [vmem:[%s7 + $0x50] sm:$0xff] %v731
    %748 = vst [vmem:[%s7 + $0x58] sm:$0xff] %v732
    %749 = vst [vmem:[%s7 + $0x60] sm:$0xff] %v733
    %750 = vst [vmem:[%s7 + $0x68] sm:$0xff] %v734
    %751 = vst [vmem:[%s7 + $0x70] sm:$0xff] %v735
    %752 = vst [vmem:[%s7 + $0x78] sm:$0xff] %v736
    // Predicated region
    $region54: #{fv_mgn_forward.5} parent=1 // pred_check
      _
    $region55: #{fv_mgn_forward.5} parent=1 // pred_check_branch
      %754 = sbr.rel (0) target = $region57
    $region56: #{fv_mgn_forward.5} parent=1 // pred_region
      _
    $region57: #{fv_mgn_forward.5} parent=1 // pred_fallthru
      _
    // Predicated region
    $region58: #{fv_mgn_forward.5} parent=1 // pred_check
      _
    $region59: #{fv_mgn_forward.5} parent=1 // pred_check_branch
      %756 = sbr.rel (0) target = $region61
    $region60: #{fv_mgn_forward.5} parent=1 // pred_region
      _
    $region61: #{fv_mgn_forward.5} parent=1 // pred_fallthru
      _
    %757 = vsyncpa [#allocation3], 1
    %758 = vsyncpa [#allocation5], 1
    %759 = vsyncpa [#allocation8], 1
    %760 = vsyncpa [#allocation11], 1

// kernel: fv_mgn_forward.7
$region0: #{fv_mgn_forward.7}
  #allocation0 [shape = 'u32[]', space=smem, size = 0x4, offset = 0x4, fixed_abs, tag = 'smem constant byte address 0x4 - core index']
  #allocation1 [shape = 'u32[72,128]{1,0:T(1,128)}', space=vmem, size = 0x9000, scoped, tag = 'internal scratch']
  %s0 = inlined_call_operand.vmem [shape: f32[128,128], index: 0, kind: input, shape index: {}]
  %s1 = inlined_call_operand.vmem [shape: f32[128,1], index: 1, kind: input, shape index: {}]
  %s2 = inlined_call_operand.vmem [shape: bf16[128,256], index: 2, kind: input, shape index: {}]
  %s3 = inlined_call_operand.vmem [shape: f32[1,256], index: 3, kind: input, shape index: {}]
  %s4 = inlined_call_operand.vmem [shape: f32[1,256], index: 4, kind: input, shape index: {}]
  %s5 = inlined_call_operand.vmem [shape: bf16[256,128], index: 5, kind: input, shape index: {}]
  %s6 = inlined_call_operand.vmem [shape: f32[1,128], index: 6, kind: input, shape index: {}]
  %s7 = inlined_call_operand.vmem [shape: f32[128,128], index: 7, kind: output, shape index: {}]
  %s8 = sld [smem:[#allocation0]]
  $region38: #{fv_mgn_forward.7} parent=0
    _
  %s10 = ssub.s32 1, %s8
  %s11 = scalar_select 0, %s10, %s8
  // Predicated region
  $region2: #{fv_mgn_forward.7} parent=0 // pred_check
    _
  $region3: #{fv_mgn_forward.7} parent=0 // pred_check_branch
    %13 = sbr.rel (0) target = $region5
  $region4: #{fv_mgn_forward.7} parent=0 // pred_region
    _
  $region5: #{fv_mgn_forward.7} parent=0 // pred_fallthru
    _
  // Predicated region
  $region6: #{fv_mgn_forward.7} parent=0 // pred_check
    _
  $region7: #{fv_mgn_forward.7} parent=0 // pred_check_branch
    %15 = sbr.rel (0) target = $region9
  $region8: #{fv_mgn_forward.7} parent=0 // pred_region
    _
  $region9: #{fv_mgn_forward.7} parent=0 // pred_fallthru
    _
  // Predicated region
  $region10: #{fv_mgn_forward.7} parent=0 // pred_check
    _
  $region11: #{fv_mgn_forward.7} parent=0 // pred_check_branch
    %17 = sbr.rel (0) target = $region13
  $region12: #{fv_mgn_forward.7} parent=0 // pred_region
    _
  $region13: #{fv_mgn_forward.7} parent=0 // pred_fallthru
    _
  // Predicated region
  $region14: #{fv_mgn_forward.7} parent=0 // pred_check
    _
  $region15: #{fv_mgn_forward.7} parent=0 // pred_check_branch
    %19 = sbr.rel (0) target = $region17
  $region16: #{fv_mgn_forward.7} parent=0 // pred_region
    _
  $region17: #{fv_mgn_forward.7} parent=0 // pred_fallthru
    _
  // Predicated region
  $region18: #{fv_mgn_forward.7} parent=0 // pred_check
    _
  $region19: #{fv_mgn_forward.7} parent=0 // pred_check_branch
    %21 = sbr.rel (0) target = $region21
  $region20: #{fv_mgn_forward.7} parent=0 // pred_region
    _
  $region21: #{fv_mgn_forward.7} parent=0 // pred_fallthru
    _
  // Predicated region
  $region22: #{fv_mgn_forward.7} parent=0 // pred_check
    _
  $region23: #{fv_mgn_forward.7} parent=0 // pred_check_branch
    %23 = sbr.rel (0) target = $region25
  $region24: #{fv_mgn_forward.7} parent=0 // pred_region
    _
  $region25: #{fv_mgn_forward.7} parent=0 // pred_fallthru
    _
  // Predicated region
  $region26: #{fv_mgn_forward.7} parent=0 // pred_check
    _
  $region27: #{fv_mgn_forward.7} parent=0 // pred_check_branch
    %25 = sbr.rel (0) target = $region29
  $region28: #{fv_mgn_forward.7} parent=0 // pred_region
    _
  $region29: #{fv_mgn_forward.7} parent=0 // pred_fallthru
    _
  %v26 = vld [vmem:[%s0] sm:$0xff]
  %v27 = vld [vmem:[%s0 + $0x8] sm:$0xff]
  %v28 = vld [vmem:[%s0 + $0x10] sm:$0xff]
  %v29 = vld [vmem:[%s0 + $0x18] sm:$0xff]
  %v30 = vld [vmem:[%s0 + $0x20] sm:$0xff]
  %v31 = vld [vmem:[%s0 + $0x28] sm:$0xff]
  %v32 = vld [vmem:[%s0 + $0x30] sm:$0xff]
  %v33 = vld [vmem:[%s0 + $0x38] sm:$0xff]
  %v34 = vld [vmem:[%s0 + $0x40] sm:$0xff]
  %v35 = vld [vmem:[%s0 + $0x48] sm:$0xff]
  %v36 = vld [vmem:[%s0 + $0x50] sm:$0xff]
  %v37 = vld [vmem:[%s0 + $0x58] sm:$0xff]
  %v38 = vld [vmem:[%s0 + $0x60] sm:$0xff]
  %v39 = vld [vmem:[%s0 + $0x68] sm:$0xff]
  %v40 = vld [vmem:[%s0 + $0x70] sm:$0xff]
  %v41 = vld [vmem:[%s0 + $0x78] sm:$0xff]
  %v42 = vpack.c.bf16 %v27, %v26
  %v43 = vpack.c.bf16 %v29, %v28
  %v44 = vpack.c.bf16 %v31, %v30
  %v45 = vpack.c.bf16 %v33, %v32
  %v46 = vpack.c.bf16 %v35, %v34
  %v47 = vpack.c.bf16 %v37, %v36
  %v48 = vpack.c.bf16 %v39, %v38
  %v49 = vpack.c.bf16 %v41, %v40
  %v50 = vld [vmem:[%s2] sm:$0xff]
  %v51 = vld [vmem:[%s2 + $0x8] sm:$0xff]
  %v52 = vld [vmem:[%s2 + $0x10] sm:$0xff]
  %v53 = vld [vmem:[%s2 + $0x18] sm:$0xff]
  %v54 = vld [vmem:[%s2 + $0x20] sm:$0xff]
  %v55 = vld [vmem:[%s2 + $0x28] sm:$0xff]
  %v56 = vld [vmem:[%s2 + $0x30] sm:$0xff]
  %v57 = vld [vmem:[%s2 + $0x38] sm:$0xff]
  %v58 = vld [vmem:[%s2 + $0x40] sm:$0xff]
  %v59 = vld [vmem:[%s2 + $0x48] sm:$0xff]
  %v60 = vld [vmem:[%s2 + $0x50] sm:$0xff]
  %v61 = vld [vmem:[%s2 + $0x58] sm:$0xff]
  %v62 = vld [vmem:[%s2 + $0x60] sm:$0xff]
  %v63 = vld [vmem:[%s2 + $0x68] sm:$0xff]
  %v64 = vld [vmem:[%s2 + $0x70] sm:$0xff]
  %v65 = vld [vmem:[%s2 + $0x78] sm:$0xff]
  %v66 = vld [vmem:[%s1] sm:$0xff]
  %v67 = vld [vmem:[%s1 + $0x8] sm:$0xff]
  %v68 = vld [vmem:[%s1 + $0x10] sm:$0xff]
  %v69 = vld [vmem:[%s1 + $0x18] sm:$0xff]
  %v70 = vld [vmem:[%s1 + $0x20] sm:$0xff]
  %v71 = vld [vmem:[%s1 + $0x28] sm:$0xff]
  %v72 = vld [vmem:[%s1 + $0x30] sm:$0xff]
  %v73 = vld [vmem:[%s1 + $0x38] sm:$0xff]
  %v74 = vld [vmem:[%s1 + $0x40] sm:$0xff]
  %v75 = vld [vmem:[%s1 + $0x48] sm:$0xff]
  %v76 = vld [vmem:[%s1 + $0x50] sm:$0xff]
  %v77 = vld [vmem:[%s1 + $0x58] sm:$0xff]
  %v78 = vld [vmem:[%s1 + $0x60] sm:$0xff]
  %v79 = vld [vmem:[%s1 + $0x68] sm:$0xff]
  %v80 = vld [vmem:[%s1 + $0x70] sm:$0xff]
  %v81 = vld [vmem:[%s1 + $0x78] sm:$0xff]
  %v82 = vld [vmem:[%s3] sm:$0x3]
  %84 = vset.pattern.permute.xlu0 0
  %85 = vperm.xlu0 %84, %v66
  %v86 = vpop.permute.xlu0 %85
  %89 = vset.pattern.permute.xlu0 0
  %90 = vperm.xlu0 %89, %v67
  %v91 = vpop.permute.xlu0 %90
  %94 = vset.pattern.permute.xlu0 0
  %95 = vperm.xlu0 %94, %v68
  %v96 = vpop.permute.xlu0 %95
  %99 = vset.pattern.permute.xlu0 0
  %100 = vperm.xlu0 %99, %v69
  %v101 = vpop.permute.xlu0 %100
  %104 = vset.pattern.permute.xlu0 0
  %105 = vperm.xlu0 %104, %v70
  %v106 = vpop.permute.xlu0 %105
  %109 = vset.pattern.permute.xlu0 0
  %110 = vperm.xlu0 %109, %v71
  %v111 = vpop.permute.xlu0 %110
  %114 = vset.pattern.permute.xlu0 0
  %115 = vperm.xlu0 %114, %v72
  %v116 = vpop.permute.xlu0 %115
  %119 = vset.pattern.permute.xlu0 0
  %120 = vperm.xlu0 %119, %v73
  %v121 = vpop.permute.xlu0 %120
  %124 = vset.pattern.permute.xlu0 0
  %125 = vperm.xlu0 %124, %v74
  %v126 = vpop.permute.xlu0 %125
  %129 = vset.pattern.permute.xlu0 0
  %130 = vperm.xlu0 %129, %v75
  %v131 = vpop.permute.xlu0 %130
  %134 = vset.pattern.permute.xlu0 0
  %135 = vperm.xlu0 %134, %v76
  %v136 = vpop.permute.xlu0 %135
  %139 = vset.pattern.permute.xlu0 0
  %140 = vperm.xlu0 %139, %v77
  %v141 = vpop.permute.xlu0 %140
  %144 = vset.pattern.permute.xlu0 0
  %145 = vperm.xlu0 %144, %v78
  %v146 = vpop.permute.xlu0 %145
  %149 = vset.pattern.permute.xlu0 0
  %150 = vperm.xlu0 %149, %v79
  %v151 = vpop.permute.xlu0 %150
  %154 = vset.pattern.permute.xlu0 0
  %155 = vperm.xlu0 %154, %v80
  %v156 = vpop.permute.xlu0 %155
  %159 = vset.pattern.permute.xlu0 0
  %160 = vperm.xlu0 %159, %v81
  %v161 = vpop.permute.xlu0 %160
  %v164 = vperm.slane %v82, 0
  %v165 = vperm.slane %v82, 1
  %v168 = vmul.f32 %v86, %v164
  %v169 = vmul.f32 %v86, %v165
  %v170 = vmul.f32 %v91, %v164
  %v171 = vmul.f32 %v91, %v165
  %v172 = vmul.f32 %v96, %v164
  %v173 = vmul.f32 %v96, %v165
  %v174 = vmul.f32 %v101, %v164
  %v175 = vmul.f32 %v101, %v165
  %v176 = vmul.f32 %v106, %v164
  %v177 = vmul.f32 %v106, %v165
  %v178 = vmul.f32 %v111, %v164
  %v179 = vmul.f32 %v111, %v165
  %v180 = vmul.f32 %v116, %v164
  %v181 = vmul.f32 %v116, %v165
  %v182 = vmul.f32 %v121, %v164
  %v183 = vmul.f32 %v121, %v165
  %v184 = vmul.f32 %v126, %v164
  %v185 = vmul.f32 %v126, %v165
  %v186 = vmul.f32 %v131, %v164
  %v187 = vmul.f32 %v131, %v165
  %v188 = vmul.f32 %v136, %v164
  %v189 = vmul.f32 %v136, %v165
  %v190 = vmul.f32 %v141, %v164
  %v191 = vmul.f32 %v141, %v165
  %v192 = vmul.f32 %v146, %v164
  %v193 = vmul.f32 %v146, %v165
  %v194 = vmul.f32 %v151, %v164
  %v195 = vmul.f32 %v151, %v165
  %v196 = vmul.f32 %v156, %v164
  %v197 = vmul.f32 %v156, %v165
  %v198 = vmul.f32 %v161, %v164
  %v199 = vmul.f32 %v161, %v165
  %v216 = vunpack.c.l.b16 %v50
  %v217 = vunpack.c.h.b16 %v50
  %v218 = vunpack.c.l.b16 %v51
  %v219 = vunpack.c.h.b16 %v51
  %v220 = vunpack.c.l.b16 %v52
  %v221 = vunpack.c.h.b16 %v52
  %v222 = vunpack.c.l.b16 %v53
  %v223 = vunpack.c.h.b16 %v53
  %v224 = vunpack.c.l.b16 %v54
  %v225 = vunpack.c.h.b16 %v54
  %v226 = vunpack.c.l.b16 %v55
  %v227 = vunpack.c.h.b16 %v55
  %v228 = vunpack.c.l.b16 %v56
  %v229 = vunpack.c.h.b16 %v56
  %v230 = vunpack.c.l.b16 %v57
  %v231 = vunpack.c.h.b16 %v57
  %v232 = vunpack.c.l.b16 %v58
  %v233 = vunpack.c.h.b16 %v58
  %v234 = vunpack.c.l.b16 %v59
  %v235 = vunpack.c.h.b16 %v59
  %v236 = vunpack.c.l.b16 %v60
  %v237 = vunpack.c.h.b16 %v60
  %v238 = vunpack.c.l.b16 %v61
  %v239 = vunpack.c.h.b16 %v61
  %v240 = vunpack.c.l.b16 %v62
  %v241 = vunpack.c.h.b16 %v62
  %v242 = vunpack.c.l.b16 %v63
  %v243 = vunpack.c.h.b16 %v63
  %v244 = vunpack.c.l.b16 %v64
  %v245 = vunpack.c.h.b16 %v64
  %v246 = vunpack.c.l.b16 %v65
  %v247 = vunpack.c.h.b16 %v65
  %v248 = vpack.c.b16 %v218, %v216
  %v249 = vpack.c.b16 %v219, %v217
  %v250 = vpack.c.b16 %v222, %v220
  %v251 = vpack.c.b16 %v223, %v221
  %v252 = vpack.c.b16 %v226, %v224
  %v253 = vpack.c.b16 %v227, %v225
  %v254 = vpack.c.b16 %v230, %v228
  %v255 = vpack.c.b16 %v231, %v229
  %v256 = vpack.c.b16 %v234, %v232
  %v257 = vpack.c.b16 %v235, %v233
  %v258 = vpack.c.b16 %v238, %v236
  %v259 = vpack.c.b16 %v239, %v237
  %v260 = vpack.c.b16 %v242, %v240
  %v261 = vpack.c.b16 %v243, %v241
  %v262 = vpack.c.b16 %v246, %v244
  %v263 = vpack.c.b16 %v247, %v245
  %280 = vmatpush.bf16.msra.mxu0 %v262
  %281 = vmatpush.bf16.msra.mxu0 %v260
  %282 = vmatpush.bf16.msra.mxu0 %v258
  %283 = vmatpush.bf16.msra.mxu0 %v256
  %284 = vmatpush.bf16.msra.mxu0 %v254
  %285 = vmatpush.bf16.msra.mxu0 %v252
  %286 = vmatpush.bf16.msra.mxu0 %v250
  %287 = vmatpush.bf16.msra.mxu0 %v248
  %288 = vmatmul.bf16.gmra.mxu0 %v42
  %v289 = vpop.f32.mrf.mxu0
  %v290 = vadd.f32 %v168, %v289
  %v291 = vpop.f32.mrf.mxu0
  %v292 = vadd.f32 %v170, %v291
  %293 = vmatmul.bf16.gmra.mxu0 %v43
  %v294 = vpop.f32.mrf.mxu0
  %v295 = vadd.f32 %v172, %v294
  %v296 = vpop.f32.mrf.mxu0
  %v297 = vadd.f32 %v174, %v296
  %298 = vmatmul.bf16.gmra.mxu0 %v44
  %v299 = vpop.f32.mrf.mxu0
  %v300 = vadd.f32 %v176, %v299
  %v301 = vpop.f32.mrf.mxu0
  %v302 = vadd.f32 %v178, %v301
  %303 = vmatmul.bf16.gmra.mxu0 %v45
  %v304 = vpop.f32.mrf.mxu0
  %v305 = vadd.f32 %v180, %v304
  %v306 = vpop.f32.mrf.mxu0
  %v307 = vadd.f32 %v182, %v306
  %308 = vmatmul.bf16.gmra.mxu0 %v46
  %v309 = vpop.f32.mrf.mxu0
  %v310 = vadd.f32 %v184, %v309
  %v311 = vpop.f32.mrf.mxu0
  %v312 = vadd.f32 %v186, %v311
  %313 = vmatmul.bf16.gmra.mxu0 %v47
  %v314 = vpop.f32.mrf.mxu0
  %v315 = vadd.f32 %v188, %v314
  %v316 = vpop.f32.mrf.mxu0
  %v317 = vadd.f32 %v190, %v316
  %318 = vmatmul.bf16.gmra.mxu0 %v48
  %v319 = vpop.f32.mrf.mxu0
  %v320 = vadd.f32 %v192, %v319
  %v321 = vpop.f32.mrf.mxu0
  %v322 = vadd.f32 %v194, %v321
  %323 = vmatmul.bf16.gmra.mxu0 %v49
  %v324 = vpop.f32.mrf.mxu0
  %v325 = vadd.f32 %v196, %v324
  %v326 = vpop.f32.mrf.mxu0
  %v327 = vadd.f32 %v198, %v326
  %328 = vdwg.mxu0
  %329 = vmatpush.bf16.msra.mxu0 %v263
  %330 = vmatpush.bf16.msra.mxu0 %v261
  %331 = vmatpush.bf16.msra.mxu0 %v259
  %332 = vmatpush.bf16.msra.mxu0 %v257
  %333 = vmatpush.bf16.msra.mxu0 %v255
  %334 = vmatpush.bf16.msra.mxu0 %v253
  %335 = vmatpush.bf16.msra.mxu0 %v251
  %336 = vmatpush.bf16.msra.mxu0 %v249
  %337 = vmatmul.bf16.gmra.mxu0 %v42
  %v338 = vpop.f32.mrf.mxu0
  %v339 = vadd.f32 %v169, %v338
  %v340 = vpop.f32.mrf.mxu0
  %v341 = vadd.f32 %v171, %v340
  %342 = vmatmul.bf16.gmra.mxu0 %v43
  %v343 = vpop.f32.mrf.mxu0
  %v344 = vadd.f32 %v173, %v343
  %v345 = vpop.f32.mrf.mxu0
  %v346 = vadd.f32 %v175, %v345
  %347 = vmatmul.bf16.gmra.mxu0 %v44
  %v348 = vpop.f32.mrf.mxu0
  %v349 = vadd.f32 %v177, %v348
  %v350 = vpop.f32.mrf.mxu0
  %v351 = vadd.f32 %v179, %v350
  %352 = vmatmul.bf16.gmra.mxu0 %v45
  %v353 = vpop.f32.mrf.mxu0
  %v354 = vadd.f32 %v181, %v353
  %v355 = vpop.f32.mrf.mxu0
  %v356 = vadd.f32 %v183, %v355
  %357 = vmatmul.bf16.gmra.mxu0 %v46
  %v358 = vpop.f32.mrf.mxu0
  %v359 = vadd.f32 %v185, %v358
  %v360 = vpop.f32.mrf.mxu0
  %v361 = vadd.f32 %v187, %v360
  %362 = vmatmul.bf16.gmra.mxu0 %v47
  %v363 = vpop.f32.mrf.mxu0
  %v364 = vadd.f32 %v189, %v363
  %v365 = vpop.f32.mrf.mxu0
  %v366 = vadd.f32 %v191, %v365
  %367 = vmatmul.bf16.gmra.mxu0 %v48
  %v368 = vpop.f32.mrf.mxu0
  %v369 = vadd.f32 %v193, %v368
  %v370 = vpop.f32.mrf.mxu0
  %v371 = vadd.f32 %v195, %v370
  %372 = vmatmul.bf16.gmra.mxu0 %v49
  %v373 = vpop.f32.mrf.mxu0
  %v374 = vadd.f32 %v197, %v373
  %v375 = vpop.f32.mrf.mxu0
  %v376 = vadd.f32 %v199, %v375
  %377 = vdwg.mxu0
  %v378 = vld [vmem:[%s4] sm:$0x3]
  %v380 = vperm.slane %v378, 0
  %v381 = vperm.slane %v378, 1
  %v384 = vadd.f32 %v290, %v380
  %v385 = vadd.f32 %v339, %v381
  %v386 = vadd.f32 %v292, %v380
  %v387 = vadd.f32 %v341, %v381
  %v388 = vadd.f32 %v295, %v380
  %v389 = vadd.f32 %v344, %v381
  %v390 = vadd.f32 %v297, %v380
  %v391 = vadd.f32 %v346, %v381
  %v392 = vadd.f32 %v300, %v380
  %v393 = vadd.f32 %v349, %v381
  %v394 = vadd.f32 %v302, %v380
  %v395 = vadd.f32 %v351, %v381
  %v396 = vadd.f32 %v305, %v380
  %v397 = vadd.f32 %v354, %v381
  %v398 = vadd.f32 %v307, %v380
  %v399 = vadd.f32 %v356, %v381
  %v400 = vadd.f32 %v310, %v380
  %v401 = vadd.f32 %v359, %v381
  %v402 = vadd.f32 %v312, %v380
  %v403 = vadd.f32 %v361, %v381
  %v404 = vadd.f32 %v315, %v380
  %v405 = vadd.f32 %v364, %v381
  %v406 = vadd.f32 %v317, %v380
  %v407 = vadd.f32 %v366, %v381
  %v408 = vadd.f32 %v320, %v380
  %v409 = vadd.f32 %v369, %v381
  %v410 = vadd.f32 %v322, %v380
  %v411 = vadd.f32 %v371, %v381
  %v412 = vadd.f32 %v325, %v380
  %v413 = vadd.f32 %v374, %v381
  %v414 = vadd.f32 %v327, %v380
  %v415 = vadd.f32 %v376, %v381
  %v416 = vmax.f32 %v384, 0.0
  %v417 = vmax.f32 %v385, 0.0
  %v418 = vmax.f32 %v386, 0.0
  %v419 = vmax.f32 %v387, 0.0
  %v420 = vmax.f32 %v388, 0.0
  %v421 = vmax.f32 %v389, 0.0
  %v422 = vmax.f32 %v390, 0.0
  %v423 = vmax.f32 %v391, 0.0
  %v424 = vmax.f32 %v392, 0.0
  %v425 = vmax.f32 %v393, 0.0
  %v426 = vmax.f32 %v394, 0.0
  %v427 = vmax.f32 %v395, 0.0
  %v428 = vmax.f32 %v396, 0.0
  %v429 = vmax.f32 %v397, 0.0
  %v430 = vmax.f32 %v398, 0.0
  %v431 = vmax.f32 %v399, 0.0
  %v432 = vmax.f32 %v400, 0.0
  %v433 = vmax.f32 %v401, 0.0
  %v434 = vmax.f32 %v402, 0.0
  %v435 = vmax.f32 %v403, 0.0
  %v436 = vmax.f32 %v404, 0.0
  %v437 = vmax.f32 %v405, 0.0
  %v438 = vmax.f32 %v406, 0.0
  %v439 = vmax.f32 %v407, 0.0
  %v440 = vmax.f32 %v408, 0.0
  %v441 = vmax.f32 %v409, 0.0
  %v442 = vmax.f32 %v410, 0.0
  %v443 = vmax.f32 %v411, 0.0
  %v444 = vmax.f32 %v412, 0.0
  %v445 = vmax.f32 %v413, 0.0
  %v446 = vmax.f32 %v414, 0.0
  %v447 = vmax.f32 %v415, 0.0
  %v448 = vpack.c.bf16 %v418, %v416
  %v449 = vpack.c.bf16 %v419, %v417
  %v450 = vpack.c.bf16 %v422, %v420
  %v451 = vpack.c.bf16 %v423, %v421
  %v452 = vpack.c.bf16 %v426, %v424
  %v453 = vpack.c.bf16 %v427, %v425
  %v454 = vpack.c.bf16 %v430, %v428
  %v455 = vpack.c.bf16 %v431, %v429
  %v456 = vpack.c.bf16 %v434, %v432
  %v457 = vpack.c.bf16 %v435, %v433
  %v458 = vpack.c.bf16 %v438, %v436
  %v459 = vpack.c.bf16 %v439, %v437
  %v460 = vpack.c.bf16 %v442, %v440
  %v461 = vpack.c.bf16 %v443, %v441
  %v462 = vpack.c.bf16 %v446, %v444
  %v463 = vpack.c.bf16 %v447, %v445
  %v464 = vld [vmem:[%s5] sm:$0xf]
  %v465 = vld [vmem:[%s5 + $0x4] sm:$0xf]
  %v466 = vld [vmem:[%s5 + $0x8] sm:$0xf]
  %v467 = vld [vmem:[%s5 + $0xc] sm:$0xf]
  %v468 = vld [vmem:[%s5 + $0x10] sm:$0xf]
  %v469 = vld [vmem:[%s5 + $0x14] sm:$0xf]
  %v470 = vld [vmem:[%s5 + $0x18] sm:$0xf]
  %v471 = vld [vmem:[%s5 + $0x1c] sm:$0xf]
  %v472 = vld [vmem:[%s5 + $0x20] sm:$0xf]
  %v473 = vld [vmem:[%s5 + $0x24] sm:$0xf]
  %v474 = vld [vmem:[%s5 + $0x28] sm:$0xf]
  %v475 = vld [vmem:[%s5 + $0x2c] sm:$0xf]
  %v476 = vld [vmem:[%s5 + $0x30] sm:$0xf]
  %v477 = vld [vmem:[%s5 + $0x34] sm:$0xf]
  %v478 = vld [vmem:[%s5 + $0x38] sm:$0xf]
  %v479 = vld [vmem:[%s5 + $0x3c] sm:$0xf]
  %v480 = vld [vmem:[%s5 + $0x40] sm:$0xf]
  %v481 = vld [vmem:[%s5 + $0x44] sm:$0xf]
  %v482 = vld [vmem:[%s5 + $0x48] sm:$0xf]
  %v483 = vld [vmem:[%s5 + $0x4c] sm:$0xf]
  %v484 = vld [vmem:[%s5 + $0x50] sm:$0xf]
  %v485 = vld [vmem:[%s5 + $0x54] sm:$0xf]
  %v486 = vld [vmem:[%s5 + $0x58] sm:$0xf]
  %v487 = vld [vmem:[%s5 + $0x5c] sm:$0xf]
  %v488 = vld [vmem:[%s5 + $0x60] sm:$0xf]
  %v489 = vld [vmem:[%s5 + $0x64] sm:$0xf]
  %v490 = vld [vmem:[%s5 + $0x68] sm:$0xf]
  %v491 = vld [vmem:[%s5 + $0x6c] sm:$0xf]
  %v492 = vld [vmem:[%s5 + $0x70] sm:$0xf]
  %v493 = vld [vmem:[%s5 + $0x74] sm:$0xf]
  %v494 = vld [vmem:[%s5 + $0x78] sm:$0xf]
  %v495 = vld [vmem:[%s5 + $0x7c] sm:$0xf]
  %v496 = vld [vmem:[%s6] sm:$0x1]
  %v498 = vperm.slane %v496, 0
  %v532 = vunpack.c.l.b16 %v464
  %v533 = vunpack.c.l.b16 %v465
  %v534 = vunpack.c.l.b16 %v466
  %v535 = vunpack.c.l.b16 %v467
  %v536 = vunpack.c.l.b16 %v468
  %v537 = vunpack.c.l.b16 %v469
  %v538 = vunpack.c.l.b16 %v470
  %v539 = vunpack.c.l.b16 %v471
  %v540 = vunpack.c.l.b16 %v472
  %v541 = vunpack.c.l.b16 %v473
  %v542 = vunpack.c.l.b16 %v474
  %v543 = vunpack.c.l.b16 %v475
  %v544 = vunpack.c.l.b16 %v476
  %v545 = vunpack.c.l.b16 %v477
  %v546 = vunpack.c.l.b16 %v478
  %v547 = vunpack.c.l.b16 %v479
  %v548 = vunpack.c.l.b16 %v480
  %v549 = vunpack.c.l.b16 %v481
  %v550 = vunpack.c.l.b16 %v482
  %v551 = vunpack.c.l.b16 %v483
  %v552 = vunpack.c.l.b16 %v484
  %v553 = vunpack.c.l.b16 %v485
  %v554 = vunpack.c.l.b16 %v486
  %v555 = vunpack.c.l.b16 %v487
  %v556 = vunpack.c.l.b16 %v488
  %v557 = vunpack.c.l.b16 %v489
  %v558 = vunpack.c.l.b16 %v490
  %v559 = vunpack.c.l.b16 %v491
  %v560 = vunpack.c.l.b16 %v492
  %v561 = vunpack.c.l.b16 %v493
  %v562 = vunpack.c.l.b16 %v494
  %v563 = vunpack.c.l.b16 %v495
  %v564 = vpack.c.b16 %v533, %v532
  %v565 = vpack.c.b16 %v535, %v534
  %v566 = vpack.c.b16 %v537, %v536
  %v567 = vpack.c.b16 %v539, %v538
  %v568 = vpack.c.b16 %v541, %v540
  %v569 = vpack.c.b16 %v543, %v542
  %v570 = vpack.c.b16 %v545, %v544
  %v571 = vpack.c.b16 %v547, %v546
  %v572 = vpack.c.b16 %v549, %v548
  %v573 = vpack.c.b16 %v551, %v550
  %v574 = vpack.c.b16 %v553, %v552
  %v575 = vpack.c.b16 %v555, %v554
  %v576 = vpack.c.b16 %v557, %v556
  %v577 = vpack.c.b16 %v559, %v558
  %v578 = vpack.c.b16 %v561, %v560
  %v579 = vpack.c.b16 %v563, %v562
  %596 = vmatpush.bf16.msra.mxu0 %v571
  %597 = vmatpush.bf16.msra.mxu0 %v570
  %598 = vmatpush.bf16.msra.mxu0 %v569
  %599 = vmatpush.bf16.msra.mxu0 %v568
  %600 = vmatpush.bf16.msra.mxu0 %v567
  %601 = vmatpush.bf16.msra.mxu0 %v566
  %602 = vmatpush.bf16.msra.mxu0 %v565
  %603 = vmatpush.bf16.msra.mxu0 %v564
  %604 = vmatmul.bf16.gmra.mxu0 %v448
  %v605 = vpop.f32.mrf.mxu0
  %v606 = vadd.f32 %v498, %v605
  %v607 = vpop.f32.mrf.mxu0
  %v608 = vadd.f32 %v498, %v607
  %609 = vmatmul.bf16.gmra.mxu0 %v450
  %v610 = vpop.f32.mrf.mxu0
  %v611 = vadd.f32 %v498, %v610
  %v612 = vpop.f32.mrf.mxu0
  %v613 = vadd.f32 %v498, %v612
  %614 = vmatmul.bf16.gmra.mxu0 %v452
  %v615 = vpop.f32.mrf.mxu0
  %v616 = vadd.f32 %v498, %v615
  %v617 = vpop.f32.mrf.mxu0
  %v618 = vadd.f32 %v498, %v617
  %619 = vmatmul.bf16.gmra.mxu0 %v454
  %v620 = vpop.f32.mrf.mxu0
  %v621 = vadd.f32 %v498, %v620
  %v622 = vpop.f32.mrf.mxu0
  %v623 = vadd.f32 %v498, %v622
  %624 = vmatmul.bf16.gmra.mxu0 %v456
  %v625 = vpop.f32.mrf.mxu0
  %v626 = vadd.f32 %v498, %v625
  %v627 = vpop.f32.mrf.mxu0
  %v628 = vadd.f32 %v498, %v627
  %629 = vmatmul.bf16.gmra.mxu0 %v458
  %v630 = vpop.f32.mrf.mxu0
  %v631 = vadd.f32 %v498, %v630
  %v632 = vpop.f32.mrf.mxu0
  %v633 = vadd.f32 %v498, %v632
  %634 = vmatmul.bf16.gmra.mxu0 %v460
  %v635 = vpop.f32.mrf.mxu0
  %v636 = vadd.f32 %v498, %v635
  %v637 = vpop.f32.mrf.mxu0
  %v638 = vadd.f32 %v498, %v637
  %639 = vmatmul.bf16.gmra.mxu0 %v462
  %v640 = vpop.f32.mrf.mxu0
  %v641 = vadd.f32 %v498, %v640
  %v642 = vpop.f32.mrf.mxu0
  %v643 = vadd.f32 %v498, %v642
  %644 = vdwg.mxu0
  %645 = vmatpush.bf16.msra.mxu0 %v579
  %646 = vmatpush.bf16.msra.mxu0 %v578
  %647 = vmatpush.bf16.msra.mxu0 %v577
  %648 = vmatpush.bf16.msra.mxu0 %v576
  %649 = vmatpush.bf16.msra.mxu0 %v575
  %650 = vmatpush.bf16.msra.mxu0 %v574
  %651 = vmatpush.bf16.msra.mxu0 %v573
  %652 = vmatpush.bf16.msra.mxu0 %v572
  %653 = vmatmul.bf16.gmra.mxu0 %v449
  %v654 = vpop.f32.mrf.mxu0
  %v655 = vadd.f32 %v606, %v654
  %v656 = vpop.f32.mrf.mxu0
  %v657 = vadd.f32 %v608, %v656
  %658 = vmatmul.bf16.gmra.mxu0 %v451
  %v659 = vpop.f32.mrf.mxu0
  %v660 = vadd.f32 %v611, %v659
  %v661 = vpop.f32.mrf.mxu0
  %v662 = vadd.f32 %v613, %v661
  %663 = vmatmul.bf16.gmra.mxu0 %v453
  %v664 = vpop.f32.mrf.mxu0
  %v665 = vadd.f32 %v616, %v664
  %v666 = vpop.f32.mrf.mxu0
  %v667 = vadd.f32 %v618, %v666
  %668 = vmatmul.bf16.gmra.mxu0 %v455
  %v669 = vpop.f32.mrf.mxu0
  %v670 = vadd.f32 %v621, %v669
  %v671 = vpop.f32.mrf.mxu0
  %v672 = vadd.f32 %v623, %v671
  %673 = vmatmul.bf16.gmra.mxu0 %v457
  %v674 = vpop.f32.mrf.mxu0
  %v675 = vadd.f32 %v626, %v674
  %v676 = vpop.f32.mrf.mxu0
  %v677 = vadd.f32 %v628, %v676
  %678 = vmatmul.bf16.gmra.mxu0 %v459
  %v679 = vpop.f32.mrf.mxu0
  %v680 = vadd.f32 %v631, %v679
  %v681 = vpop.f32.mrf.mxu0
  %v682 = vadd.f32 %v633, %v681
  %683 = vmatmul.bf16.gmra.mxu0 %v461
  %v684 = vpop.f32.mrf.mxu0
  %v685 = vadd.f32 %v636, %v684
  %v686 = vpop.f32.mrf.mxu0
  %v687 = vadd.f32 %v638, %v686
  %688 = vmatmul.bf16.gmra.mxu0 %v463
  %v689 = vpop.f32.mrf.mxu0
  %v690 = vadd.f32 %v641, %v689
  %v691 = vpop.f32.mrf.mxu0
  %v692 = vadd.f32 %v643, %v691
  %693 = vdwg.mxu0
  %694 = vst [vmem:[%s7] sm:$0xff] %v655
  %695 = vst [vmem:[%s7 + $0x8] sm:$0xff] %v657
  %696 = vst [vmem:[%s7 + $0x10] sm:$0xff] %v660
  %697 = vst [vmem:[%s7 + $0x18] sm:$0xff] %v662
  %698 = vst [vmem:[%s7 + $0x20] sm:$0xff] %v665
  %699 = vst [vmem:[%s7 + $0x28] sm:$0xff] %v667
  %700 = vst [vmem:[%s7 + $0x30] sm:$0xff] %v670
  %701 = vst [vmem:[%s7 + $0x38] sm:$0xff] %v672
  %702 = vst [vmem:[%s7 + $0x40] sm:$0xff] %v675
  %703 = vst [vmem:[%s7 + $0x48] sm:$0xff] %v677
  %704 = vst [vmem:[%s7 + $0x50] sm:$0xff] %v680
  %705 = vst [vmem:[%s7 + $0x58] sm:$0xff] %v682
  %706 = vst [vmem:[%s7 + $0x60] sm:$0xff] %v685
  %707 = vst [vmem:[%s7 + $0x68] sm:$0xff] %v687
  %708 = vst [vmem:[%s7 + $0x70] sm:$0xff] %v690
  %709 = vst [vmem:[%s7 + $0x78] sm:$0xff] %v692
  // Predicated region
  $region30: #{fv_mgn_forward.7} parent=0 // pred_check
    _
  $region31: #{fv_mgn_forward.7} parent=0 // pred_check_branch
    %711 = sbr.rel (0) target = $region33
  $region32: #{fv_mgn_forward.7} parent=0 // pred_region
    _
  $region33: #{fv_mgn_forward.7} parent=0 // pred_fallthru
    _
  // Predicated region
  $region34: #{fv_mgn_forward.7} parent=0 // pred_check
    _
  $region35: #{fv_mgn_forward.7} parent=0 // pred_check_branch
    %713 = sbr.rel (0) target = $region37
  $region36: #{fv_mgn_forward.7} parent=0 // pred_region
    _
  $region37: #{fv_mgn_forward.7} parent=0 // pred_fallthru
    _

// kernel: fv_mgn_forward.6
$region0: #{fv_mgn_forward.6}
  #allocation0 [shape = 'u32[]', space=smem, size = 0x4, offset = 0x4, fixed_abs, tag = 'smem constant byte address 0x4 - core index']
  #allocation1 [shape = 'u32[72,128]{1,0:T(1,128)}', space=vmem, size = 0x9000, scoped, tag = 'internal scratch']
  %s0 = inlined_call_operand.vmem [shape: f32[128,128], index: 0, kind: input, shape index: {}]
  %s1 = inlined_call_operand.vmem [shape: f32[128,128], index: 1, kind: input, shape index: {}]
  %s2 = inlined_call_operand.vmem [shape: bf16[128,128], index: 2, kind: input, shape index: {}]
  %s3 = inlined_call_operand.vmem [shape: bf16[128,128], index: 3, kind: input, shape index: {}]
  %s4 = inlined_call_operand.vmem [shape: bf16[15,7,128,128], index: 4, kind: input, shape index: {}]
  %s5 = inlined_call_operand.vmem [shape: f32[15,6,128], index: 5, kind: input, shape index: {}]
  %s6 = inlined_call_operand.vmem [shape: f32[15,128,128], index: 6, kind: input, shape index: {}]
  %s7 = inlined_call_operand.vmem [shape: f32[15,128,128], index: 7, kind: input, shape index: {}]
  %s8 = inlined_call_operand.vmem [shape: f32[128,128], index: 8, kind: output, shape index: {0}]
  %s9 = inlined_call_operand.hbm [shape: f32[128,128], index: 9, kind: output, shape index: {1}]
  %10 = xla_tuple %s8, %s9
  %s11 = sld [smem:[#allocation0]]
  $region77: #{fv_mgn_forward.6} parent=0
    _
  %s13 = ssub.s32 1, %s11
  %s14 = scalar_select 0, %s13, %s11
  $region1: #{fv_mgn_forward.6} parent=0
    #allocation2 [shape = 'u8[65536]{0}', space=vmem, size = 0x10000, scoped, tag = 'output window, operand 1, single buffered']
    #allocation3 [shape = 's32[2]{0}', space=sflag, size = 0x8, scoped, tag = 'scoped memory for fv_mgn_forward.6']
    %15 = vsyncpa [#allocation3], 0
    loop: start=0, step=1, limit=17
    $region2: #{fv_mgn_forward.6} parent=1 // loop_pre_header
      _
    $region3: #{fv_mgn_forward.6} parent=1 // loop_header
      %s17 = sphi 0, %s21
      %p18 = scmp.ge.s32.totalorder %s17, 17
      %s25 = sphi 0, %s25
      %s27 = sphi 0, %s25
      %s28 = sphi 0, %s27
      %s42 = sphi 0, %s28
      %s46 = sphi 0, %s46
      %s48 = sphi 0, %s46
      %s49 = sphi 0, %s48
      %s63 = sphi 0, %s49
      %s67 = sphi 0, %s67
      %s69 = sphi 0, %s67
      %s70 = sphi 0, %s69
      %s84 = sphi 0, %s70
      %s88 = sphi 0, %s88
      %s90 = sphi 0, %s88
      %s91 = sphi 0, %s90
      %s105 = sphi 0, %s91
      %s111 = sphi 0, %s113
      %s114 = sphi 0, %s111
      %s115 = sphi 0, %s114
      %s131 = sphi 0, %s115
      %s137 = sphi 0, %s139
      %s140 = sphi 0, %s137
      %s141 = sphi 0, %s140
      %s157 = sphi 0, %s141
      %s163 = sphi 0, %s165
      %s166 = sphi 0, %s163
      %s167 = sphi 0, %s166
      %s183 = sphi 0, %s167
      %s189 = sphi 0, %s191
      %s192 = sphi 0, %s189
      %s193 = sphi 0, %s192
      %s209 = sphi 0, %s193
      %s213 = sphi 0, %s213
      %s215 = sphi 0, %s213
      %s216 = sphi 0, %s215
      %s230 = sphi 0, %s216
      %s234 = sphi 0, %s234
      %s236 = sphi 0, %s234
      %s237 = sphi 0, %s236
      %s251 = sphi 0, %s237
    $region4: #{fv_mgn_forward.6} parent=1 // loop_header_branch
      %20 = sbr.rel (%p18) target = $region8
    $region5: #{fv_mgn_forward.6} parent=1 // loop_body
      %s22 = ssub.s32 %s17, 1
      %s23 = ssub.s32 %s17, 2
      %s24 = sadd.s32 %s17, 1
      %s26 = sadd.s32 %s25, 1
      %p29 = scmp.eq.s32.totalorder %s17, 14
      %p30 = scmp.ne.s32.totalorder %s25, %s27
      %p31 = scmp.eq.s32.totalorder %s17, 0
      %p32 = por %p30, %p31
      %p33 = scmp.ne.s32.totalorder %s25, %s27
      %p34 = scmp.eq.s32.totalorder %s22, 14
      %p35 = por %p33, %p34
      %p36 = scmp.ne.s32.totalorder %s27, %s28
      %p37 = scmp.eq.s32.totalorder %s22, 0
      %p38 = por %p36, %p37
      %p39 = scmp.ne.s32.totalorder %s27, %s28
      %p40 = scmp.eq.s32.totalorder %s23, 14
      %p41 = por %p39, %p40
      %p43 = scmp.ne.s32.totalorder %s28, %s42
      %p44 = scmp.eq.s32.totalorder %s23, 0
      %p45 = por %p43, %p44
      %s47 = sadd.s32 %s46, 1
      %p50 = scmp.eq.s32.totalorder %s17, 14
      %p51 = scmp.ne.s32.totalorder %s46, %s48
      %p52 = scmp.eq.s32.totalorder %s17, 0
      %p53 = por %p51, %p52
      %p54 = scmp.ne.s32.totalorder %s46, %s48
      %p55 = scmp.eq.s32.totalorder %s22, 14
      %p56 = por %p54, %p55
      %p57 = scmp.ne.s32.totalorder %s48, %s49
      %p58 = scmp.eq.s32.totalorder %s22, 0
      %p59 = por %p57, %p58
      %p60 = scmp.ne.s32.totalorder %s48, %s49
      %p61 = scmp.eq.s32.totalorder %s23, 14
      %p62 = por %p60, %p61
      %p64 = scmp.ne.s32.totalorder %s49, %s63
      %p65 = scmp.eq.s32.totalorder %s23, 0
      %p66 = por %p64, %p65
      %s68 = sadd.s32 %s67, 1
      %p71 = scmp.eq.s32.totalorder %s17, 14
      %p72 = scmp.ne.s32.totalorder %s67, %s69
      %p73 = scmp.eq.s32.totalorder %s17, 0
      %p74 = por %p72, %p73
      %p75 = scmp.ne.s32.totalorder %s67, %s69
      %p76 = scmp.eq.s32.totalorder %s22, 14
      %p77 = por %p75, %p76
      %p78 = scmp.ne.s32.totalorder %s69, %s70
      %p79 = scmp.eq.s32.totalorder %s22, 0
      %p80 = por %p78, %p79
      %p81 = scmp.ne.s32.totalorder %s69, %s70
      %p82 = scmp.eq.s32.totalorder %s23, 14
      %p83 = por %p81, %p82
      %p85 = scmp.ne.s32.totalorder %s70, %s84
      %p86 = scmp.eq.s32.totalorder %s23, 0
      %p87 = por %p85, %p86
      %s89 = sadd.s32 %s88, 1
      %p92 = scmp.eq.s32.totalorder %s17, 14
      %p93 = scmp.ne.s32.totalorder %s88, %s90
      %p94 = scmp.eq.s32.totalorder %s17, 0
      %p95 = por %p93, %p94
      %p96 = scmp.ne.s32.totalorder %s88, %s90
      %p97 = scmp.eq.s32.totalorder %s22, 14
      %p98 = por %p96, %p97
      %p99 = scmp.ne.s32.totalorder %s90, %s91
      %p100 = scmp.eq.s32.totalorder %s22, 0
      %p101 = por %p99, %p100
      %p102 = scmp.ne.s32.totalorder %s90, %s91
      %p103 = scmp.eq.s32.totalorder %s23, 14
      %p104 = por %p102, %p103
      %p106 = scmp.ne.s32.totalorder %s91, %s105
      %p107 = scmp.eq.s32.totalorder %s23, 0
      %p108 = por %p106, %p107
      %s109 = ssub.s32 %s17, %s24
      %p110 = scmp.eq.s32.totalorder %s109, 0
      %s112 = sadd.s32 %s111, 1
      %s113 = scalar_select %p110, %s111, %s112
      %p116 = pneg %p110
      %p117 = scmp.eq.s32.totalorder %s17, 14
      %p118 = por %p116, %p117
      %p119 = scmp.ne.s32.totalorder %s111, %s114
      %p120 = scmp.eq.s32.totalorder %s17, 0
      %p121 = por %p119, %p120
      %p122 = scmp.ne.s32.totalorder %s111, %s114
      %p123 = scmp.eq.s32.totalorder %s22, 14
      %p124 = por %p122, %p123
      %p125 = scmp.ne.s32.totalorder %s114, %s115
      %p126 = scmp.eq.s32.totalorder %s22, 0
      %p127 = por %p125, %p126
      %p128 = scmp.ne.s32.totalorder %s114, %s115
      %p129 = scmp.eq.s32.totalorder %s23, 14
      %p130 = por %p128, %p129
      %p132 = scmp.ne.s32.totalorder %s115, %s131
      %p133 = scmp.eq.s32.totalorder %s23, 0
      %p134 = por %p132, %p133
      %s135 = ssub.s32 %s17, %s24
      %p136 = scmp.eq.s32.totalorder %s135, 0
      %s138 = sadd.s32 %s137, 1
      %s139 = scalar_select %p136, %s137, %s138
      %p142 = pneg %p136
      %p143 = scmp.eq.s32.totalorder %s17, 14
      %p144 = por %p142, %p143
      %p145 = scmp.ne.s32.totalorder %s137, %s140
      %p146 = scmp.eq.s32.totalorder %s17, 0
      %p147 = por %p145, %p146
      %p148 = scmp.ne.s32.totalorder %s137, %s140
      %p149 = scmp.eq.s32.totalorder %s22, 14
      %p150 = por %p148, %p149
      %p151 = scmp.ne.s32.totalorder %s140, %s141
      %p152 = scmp.eq.s32.totalorder %s22, 0
      %p153 = por %p151, %p152
      %p154 = scmp.ne.s32.totalorder %s140, %s141
      %p155 = scmp.eq.s32.totalorder %s23, 14
      %p156 = por %p154, %p155
      %p158 = scmp.ne.s32.totalorder %s141, %s157
      %p159 = scmp.eq.s32.totalorder %s23, 0
      %p160 = por %p158, %p159
      %s161 = ssub.s32 %s17, %s24
      %p162 = scmp.eq.s32.totalorder %s161, 0
      %s164 = sadd.s32 %s163, 1
      %s165 = scalar_select %p162, %s163, %s164
      %p168 = pneg %p162
      %p169 = scmp.eq.s32.totalorder %s17, 14
      %p170 = por %p168, %p169
      %p171 = scmp.ne.s32.totalorder %s163, %s166
      %p172 = scmp.eq.s32.totalorder %s17, 0
      %p173 = por %p171, %p172
      %p174 = scmp.ne.s32.totalorder %s163, %s166
      %p175 = scmp.eq.s32.totalorder %s22, 14
      %p176 = por %p174, %p175
      %p177 = scmp.ne.s32.totalorder %s166, %s167
      %p178 = scmp.eq.s32.totalorder %s22, 0
      %p179 = por %p177, %p178
      %p180 = scmp.ne.s32.totalorder %s166, %s167
      %p181 = scmp.eq.s32.totalorder %s23, 14
      %p182 = por %p180, %p181
      %p184 = scmp.ne.s32.totalorder %s167, %s183
      %p185 = scmp.eq.s32.totalorder %s23, 0
      %p186 = por %p184, %p185
      %s187 = ssub.s32 %s17, %s24
      %p188 = scmp.eq.s32.totalorder %s187, 0
      %s190 = sadd.s32 %s189, 1
      %s191 = scalar_select %p188, %s189, %s190
      %p194 = pneg %p188
      %p195 = scmp.eq.s32.totalorder %s17, 14
      %p196 = por %p194, %p195
      %p197 = scmp.ne.s32.totalorder %s189, %s192
      %p198 = scmp.eq.s32.totalorder %s17, 0
      %p199 = por %p197, %p198
      %p200 = scmp.ne.s32.totalorder %s189, %s192
      %p201 = scmp.eq.s32.totalorder %s22, 14
      %p202 = por %p200, %p201
      %p203 = scmp.ne.s32.totalorder %s192, %s193
      %p204 = scmp.eq.s32.totalorder %s22, 0
      %p205 = por %p203, %p204
      %p206 = scmp.ne.s32.totalorder %s192, %s193
      %p207 = scmp.eq.s32.totalorder %s23, 14
      %p208 = por %p206, %p207
      %p210 = scmp.ne.s32.totalorder %s193, %s209
      %p211 = scmp.eq.s32.totalorder %s23, 0
      %p212 = por %p210, %p211
      %s214 = sadd.s32 %s213, 1
      %p217 = scmp.eq.s32.totalorder %s17, 14
      %p218 = scmp.ne.s32.totalorder %s213, %s215
      %p219 = scmp.eq.s32.totalorder %s17, 0
      %p220 = por %p218, %p219
      %p221 = scmp.ne.s32.totalorder %s213, %s215
      %p222 = scmp.eq.s32.totalorder %s22, 14
      %p223 = por %p221, %p222
      %p224 = scmp.ne.s32.totalorder %s215, %s216
      %p225 = scmp.eq.s32.totalorder %s22, 0
      %p226 = por %p224, %p225
      %p227 = scmp.ne.s32.totalorder %s215, %s216
      %p228 = scmp.eq.s32.totalorder %s23, 14
      %p229 = por %p227, %p228
      %p231 = scmp.ne.s32.totalorder %s216, %s230
      %p232 = scmp.eq.s32.totalorder %s23, 0
      %p233 = por %p231, %p232
      %s235 = sadd.s32 %s234, 1
      %p238 = scmp.eq.s32.totalorder %s17, 14
      %p239 = scmp.ne.s32.totalorder %s234, %s236
      %p240 = scmp.eq.s32.totalorder %s17, 0
      %p241 = por %p239, %p240
      %p242 = scmp.ne.s32.totalorder %s234, %s236
      %p243 = scmp.eq.s32.totalorder %s22, 14
      %p244 = por %p242, %p243
      %p245 = scmp.ne.s32.totalorder %s236, %s237
      %p246 = scmp.eq.s32.totalorder %s22, 0
      %p247 = por %p245, %p246
      %p248 = scmp.ne.s32.totalorder %s236, %s237
      %p249 = scmp.eq.s32.totalorder %s23, 14
      %p250 = por %p248, %p249
      %p252 = scmp.ne.s32.totalorder %s237, %s251
      %p253 = scmp.eq.s32.totalorder %s23, 0
      %p254 = por %p252, %p253
      %p255 = scmp.le.s32.totalorder 1, %s17
      %p256 = scmp.lt.s32.totalorder %s17, 16
      %p257 = pnand %p255, %p256
      %p258 = pneg %p257
      // Predicated region
      $region9: #{fv_mgn_forward.6} parent=5 // pred_check
        _
      $region10: #{fv_mgn_forward.6} parent=5 // pred_check_branch
        %260 = sbr.rel (%p257) target = $region12
      $region11: #{fv_mgn_forward.6} parent=5 // pred_region
        %s261 = ssub.s32 %s17, 1
        // Predicated region
        $region13: #{fv_mgn_forward.6} parent=11 // pred_check
          %p262 = pneg %p38
        $region14: #{fv_mgn_forward.6} parent=11 // pred_check_branch
          %264 = sbr.rel (%p262) target = $region16
        $region15: #{fv_mgn_forward.6} parent=11 // pred_region
          _
        $region16: #{fv_mgn_forward.6} parent=11 // pred_fallthru
          _
        // Predicated region
        $region17: #{fv_mgn_forward.6} parent=11 // pred_check
          %p265 = pneg %p59
        $region18: #{fv_mgn_forward.6} parent=11 // pred_check_branch
          %267 = sbr.rel (%p265) target = $region20
        $region19: #{fv_mgn_forward.6} parent=11 // pred_region
          _
        $region20: #{fv_mgn_forward.6} parent=11 // pred_fallthru
          _
        // Predicated region
        $region21: #{fv_mgn_forward.6} parent=11 // pred_check
          %p268 = pneg %p80
        $region22: #{fv_mgn_forward.6} parent=11 // pred_check_branch
          %270 = sbr.rel (%p268) target = $region24
        $region23: #{fv_mgn_forward.6} parent=11 // pred_region
          _
        $region24: #{fv_mgn_forward.6} parent=11 // pred_fallthru
          _
        // Predicated region
        $region25: #{fv_mgn_forward.6} parent=11 // pred_check
          %p271 = pneg %p101
        $region26: #{fv_mgn_forward.6} parent=11 // pred_check_branch
          %273 = sbr.rel (%p271) target = $region28
        $region27: #{fv_mgn_forward.6} parent=11 // pred_region
          _
        $region28: #{fv_mgn_forward.6} parent=11 // pred_fallthru
          _
      $region12: #{fv_mgn_forward.6} parent=5 // pred_fallthru
        _
      %p274 = scmp.lt.s32.totalorder %s17, 15
      // Predicated region
      $region29: #{fv_mgn_forward.6} parent=5 // pred_check
        %p275 = pneg %p274
      $region30: #{fv_mgn_forward.6} parent=5 // pred_check_branch
        %277 = sbr.rel (%p275) target = $region32
      $region31: #{fv_mgn_forward.6} parent=5 // pred_region
        // Predicated region
        $region33: #{fv_mgn_forward.6} parent=31 // pred_check
          %p278 = pneg %p121
        $region34: #{fv_mgn_forward.6} parent=31 // pred_check_branch
          %280 = sbr.rel (%p278) target = $region36
        $region35: #{fv_mgn_forward.6} parent=31 // pred_region
          %p281 = scmp.lt.s32.totalorder %s17, 14
          %s282 = scalar_select %p281, %s17, 14
          %s283 = smul.addr %s282, 112
          %s284 = smul.addr %s283, 4
          %s285 = scalar_lea.vmem %s4, %s284
        $region36: #{fv_mgn_forward.6} parent=31 // pred_fallthru
          _
        // Predicated region
        $region37: #{fv_mgn_forward.6} parent=31 // pred_check
          %p286 = pneg %p147
        $region38: #{fv_mgn_forward.6} parent=31 // pred_check_branch
          %288 = sbr.rel (%p286) target = $region40
        $region39: #{fv_mgn_forward.6} parent=31 // pred_region
          %p289 = scmp.lt.s32.totalorder %s17, 14
          %s290 = scalar_select %p289, %s17, 14
          %s291 = smul.addr %s290, 8
          %s292 = scalar_lea.vmem %s5, %s291
        $region40: #{fv_mgn_forward.6} parent=31 // pred_fallthru
          _
        // Predicated region
        $region41: #{fv_mgn_forward.6} parent=31 // pred_check
          %p293 = pneg %p173
        $region42: #{fv_mgn_forward.6} parent=31 // pred_check_branch
          %295 = sbr.rel (%p293) target = $region44
        $region43: #{fv_mgn_forward.6} parent=31 // pred_region
          %p296 = scmp.lt.s32.totalorder %s17, 14
          %s297 = scalar_select %p296, %s17, 14
          %s298 = smul.addr %s297, 16
          %s299 = smul.addr %s298, 8
          %s300 = scalar_lea.vmem %s6, %s299
        $region44: #{fv_mgn_forward.6} parent=31 // pred_fallthru
          _
        // Predicated region
        $region45: #{fv_mgn_forward.6} parent=31 // pred_check
          %p301 = pneg %p199
        $region46: #{fv_mgn_forward.6} parent=31 // pred_check_branch
          %303 = sbr.rel (%p301) target = $region48
        $region47: #{fv_mgn_forward.6} parent=31 // pred_region
          %p304 = scmp.lt.s32.totalorder %s17, 14
          %s305 = scalar_select %p304, %s17, 14
          %s306 = smul.addr %s305, 16
          %s307 = smul.addr %s306, 8
          %s308 = scalar_lea.vmem %s7, %s307
        $region48: #{fv_mgn_forward.6} parent=31 // pred_fallthru
          _
      $region32: #{fv_mgn_forward.6} parent=5 // pred_fallthru
        _
      %p309 = scmp.le.s32.totalorder 1, %s17
      %p310 = scmp.lt.s32.totalorder %s17, 16
      %p311 = pnand %p309, %p310
      %p312 = pneg %p311
      // Predicated region
      $region49: #{fv_mgn_forward.6} parent=5 // pred_check
        _
      $region50: #{fv_mgn_forward.6} parent=5 // pred_check_branch
        %314 = sbr.rel (%p311) target = $region52
      $region51: #{fv_mgn_forward.6} parent=5 // pred_region
        %s315 = ssub.s32 %s17, 1
        %p316 = pneg %p38
        %p317 = pneg %p35
        %p318 = pneg %p59
        %p319 = pneg %p56
        %p320 = pneg %p80
        %p321 = pneg %p77
        %p322 = pneg %p101
        %p323 = pneg %p98
        %p324 = scmp.lt.s32.totalorder %s22, 14
        %s325 = scalar_select %p324, %s22, 14
        %s326 = smul.addr %s325, 112
        %s327 = smul.addr %s326, 4
        %s328 = scalar_lea.vmem %s4, %s327
        %p329 = pneg %p127
        %p330 = pneg %p124
        %p331 = scmp.lt.s32.totalorder %s22, 14
        %s332 = scalar_select %p331, %s22, 14
        %s333 = smul.addr %s332, 8
        %s334 = scalar_lea.vmem %s5, %s333
        %p335 = pneg %p153
        %p336 = pneg %p150
        %p337 = scmp.lt.s32.totalorder %s22, 14
        %s338 = scalar_select %p337, %s22, 14
        %s339 = smul.addr %s338, 16
        %s340 = smul.addr %s339, 8
        %s341 = scalar_lea.vmem %s6, %s340
        %p342 = pneg %p179
        %p343 = pneg %p176
        %p344 = scmp.lt.s32.totalorder %s22, 14
        %s345 = scalar_select %p344, %s22, 14
        %s346 = smul.addr %s345, 16
        %s347 = smul.addr %s346, 8
        %s348 = scalar_lea.vmem %s7, %s347
        %p349 = pneg %p205
        %p350 = pneg %p202
        %p351 = pneg %p226
        %p352 = pneg %p223
        %p353 = pneg %p247
        %p354 = pneg %p244
        %p355 = scmp.lt.s32.totalorder %s22, 14
        %s356 = scalar_select %p355, %s22, 14
        %s357 = smul.addr %s356, 112
        %s358 = smul.addr %s357, 4
        %s359 = scalar_lea.vmem %s4, %s358
        %p360 = scmp.lt.s32.totalorder %s22, 14
        %s361 = scalar_select %p360, %s22, 14
        %s362 = smul.addr %s361, 8
        %s363 = scalar_lea.vmem %s5, %s362
        %p364 = scmp.lt.s32.totalorder %s22, 14
        %s365 = scalar_select %p364, %s22, 14
        %s366 = smul.addr %s365, 16
        %s367 = smul.addr %s366, 8
        %s368 = scalar_lea.vmem %s6, %s367
        %p369 = scmp.lt.s32.totalorder %s22, 14
        %s370 = scalar_select %p369, %s22, 14
        %s371 = smul.addr %s370, 16
        %s372 = smul.addr %s371, 8
        %s373 = scalar_lea.vmem %s7, %s372
        %p374 = scmp.eq.s32.totalorder %s22, 0
        // Predicated region
        $region53: #{fv_mgn_forward.6} parent=51 // pred_check
          %p375 = pneg %p374
        $region54: #{fv_mgn_forward.6} parent=51 // pred_check_branch
          %377 = sbr.rel (%p375) target = $region56
        $region55: #{fv_mgn_forward.6} parent=51 // pred_region
          %v378 = vld [vmem:[%s0] sm:$0xff]
          %v379 = vld [vmem:[%s0 + $0x8] sm:$0xff]
          %v380 = vld [vmem:[%s0 + $0x10] sm:$0xff]
          %v381 = vld [vmem:[%s0 + $0x18] sm:$0xff]
          %v382 = vld [vmem:[%s0 + $0x20] sm:$0xff]
          %v383 = vld [vmem:[%s0 + $0x28] sm:$0xff]
          %v384 = vld [vmem:[%s0 + $0x30] sm:$0xff]
          %v385 = vld [vmem:[%s0 + $0x38] sm:$0xff]
          %v386 = vld [vmem:[%s0 + $0x40] sm:$0xff]
          %v387 = vld [vmem:[%s0 + $0x48] sm:$0xff]
          %v388 = vld [vmem:[%s0 + $0x50] sm:$0xff]
          %v389 = vld [vmem:[%s0 + $0x58] sm:$0xff]
          %v390 = vld [vmem:[%s0 + $0x60] sm:$0xff]
          %v391 = vld [vmem:[%s0 + $0x68] sm:$0xff]
          %v392 = vld [vmem:[%s0 + $0x70] sm:$0xff]
          %v393 = vld [vmem:[%s0 + $0x78] sm:$0xff]
          %394 = vst [vmem:[%s8] sm:$0xff] %v378
          %395 = vst [vmem:[%s8 + $0x8] sm:$0xff] %v379
          %396 = vst [vmem:[%s8 + $0x10] sm:$0xff] %v380
          %397 = vst [vmem:[%s8 + $0x18] sm:$0xff] %v381
          %398 = vst [vmem:[%s8 + $0x20] sm:$0xff] %v382
          %399 = vst [vmem:[%s8 + $0x28] sm:$0xff] %v383
          %400 = vst [vmem:[%s8 + $0x30] sm:$0xff] %v384
          %401 = vst [vmem:[%s8 + $0x38] sm:$0xff] %v385
          %402 = vst [vmem:[%s8 + $0x40] sm:$0xff] %v386
          %403 = vst [vmem:[%s8 + $0x48] sm:$0xff] %v387
          %404 = vst [vmem:[%s8 + $0x50] sm:$0xff] %v388
          %405 = vst [vmem:[%s8 + $0x58] sm:$0xff] %v389
          %406 = vst [vmem:[%s8 + $0x60] sm:$0xff] %v390
          %407 = vst [vmem:[%s8 + $0x68] sm:$0xff] %v391
          %408 = vst [vmem:[%s8 + $0x70] sm:$0xff] %v392
          %409 = vst [vmem:[%s8 + $0x78] sm:$0xff] %v393
          %v410 = vld [vmem:[%s1] sm:$0xff]
          %v411 = vld [vmem:[%s1 + $0x8] sm:$0xff]
          %v412 = vld [vmem:[%s1 + $0x10] sm:$0xff]
          %v413 = vld [vmem:[%s1 + $0x18] sm:$0xff]
          %v414 = vld [vmem:[%s1 + $0x20] sm:$0xff]
          %v415 = vld [vmem:[%s1 + $0x28] sm:$0xff]
          %v416 = vld [vmem:[%s1 + $0x30] sm:$0xff]
          %v417 = vld [vmem:[%s1 + $0x38] sm:$0xff]
          %v418 = vld [vmem:[%s1 + $0x40] sm:$0xff]
          %v419 = vld [vmem:[%s1 + $0x48] sm:$0xff]
          %v420 = vld [vmem:[%s1 + $0x50] sm:$0xff]
          %v421 = vld [vmem:[%s1 + $0x58] sm:$0xff]
          %v422 = vld [vmem:[%s1 + $0x60] sm:$0xff]
          %v423 = vld [vmem:[%s1 + $0x68] sm:$0xff]
          %v424 = vld [vmem:[%s1 + $0x70] sm:$0xff]
          %v425 = vld [vmem:[%s1 + $0x78] sm:$0xff]
          %426 = vst [vmem:[#allocation2] sm:$0xff] %v410
          %427 = vst [vmem:[#allocation2 + $0x8] sm:$0xff] %v411
          %428 = vst [vmem:[#allocation2 + $0x10] sm:$0xff] %v412
          %429 = vst [vmem:[#allocation2 + $0x18] sm:$0xff] %v413
          %430 = vst [vmem:[#allocation2 + $0x20] sm:$0xff] %v414
          %431 = vst [vmem:[#allocation2 + $0x28] sm:$0xff] %v415
          %432 = vst [vmem:[#allocation2 + $0x30] sm:$0xff] %v416
          %433 = vst [vmem:[#allocation2 + $0x38] sm:$0xff] %v417
          %434 = vst [vmem:[#allocation2 + $0x40] sm:$0xff] %v418
          %435 = vst [vmem:[#allocation2 + $0x48] sm:$0xff] %v419
          %436 = vst [vmem:[#allocation2 + $0x50] sm:$0xff] %v420
          %437 = vst [vmem:[#allocation2 + $0x58] sm:$0xff] %v421
          %438 = vst [vmem:[#allocation2 + $0x60] sm:$0xff] %v422
          %439 = vst [vmem:[#allocation2 + $0x68] sm:$0xff] %v423
          %440 = vst [vmem:[#allocation2 + $0x70] sm:$0xff] %v424
          %441 = vst [vmem:[#allocation2 + $0x78] sm:$0xff] %v425
        $region56: #{fv_mgn_forward.6} parent=51 // pred_fallthru
          _
        %v442 = vld [vmem:[%s8] sm:$0xff]
        %v443 = vld [vmem:[%s8 + $0x8] sm:$0xff]
        %v444 = vld [vmem:[%s8 + $0x10] sm:$0xff]
        %v445 = vld [vmem:[%s8 + $0x18] sm:$0xff]
        %v446 = vld [vmem:[%s8 + $0x20] sm:$0xff]
        %v447 = vld [vmem:[%s8 + $0x28] sm:$0xff]
        %v448 = vld [vmem:[%s8 + $0x30] sm:$0xff]
        %v449 = vld [vmem:[%s8 + $0x38] sm:$0xff]
        %v450 = vld [vmem:[%s8 + $0x40] sm:$0xff]
        %v451 = vld [vmem:[%s8 + $0x48] sm:$0xff]
        %v452 = vld [vmem:[%s8 + $0x50] sm:$0xff]
        %v453 = vld [vmem:[%s8 + $0x58] sm:$0xff]
        %v454 = vld [vmem:[%s8 + $0x60] sm:$0xff]
        %v455 = vld [vmem:[%s8 + $0x68] sm:$0xff]
        %v456 = vld [vmem:[%s8 + $0x70] sm:$0xff]
        %v457 = vld [vmem:[%s8 + $0x78] sm:$0xff]
        %v458 = vld [vmem:[#allocation2] sm:$0xff]
        %v459 = vld [vmem:[#allocation2 + $0x8] sm:$0xff]
        %v460 = vld [vmem:[#allocation2 + $0x10] sm:$0xff]
        %v461 = vld [vmem:[#allocation2 + $0x18] sm:$0xff]
        %v462 = vld [vmem:[#allocation2 + $0x20] sm:$0xff]
        %v463 = vld [vmem:[#allocation2 + $0x28] sm:$0xff]
        %v464 = vld [vmem:[#allocation2 + $0x30] sm:$0xff]
        %v465 = vld [vmem:[#allocation2 + $0x38] sm:$0xff]
        %v466 = vld [vmem:[#allocation2 + $0x40] sm:$0xff]
        %v467 = vld [vmem:[#allocation2 + $0x48] sm:$0xff]
        %v468 = vld [vmem:[#allocation2 + $0x50] sm:$0xff]
        %v469 = vld [vmem:[#allocation2 + $0x58] sm:$0xff]
        %v470 = vld [vmem:[#allocation2 + $0x60] sm:$0xff]
        %v471 = vld [vmem:[#allocation2 + $0x68] sm:$0xff]
        %v472 = vld [vmem:[#allocation2 + $0x70] sm:$0xff]
        %v473 = vld [vmem:[#allocation2 + $0x78] sm:$0xff]
        %v474 = vpack.c.bf16 %v443, %v442
        %v475 = vpack.c.bf16 %v445, %v444
        %v476 = vpack.c.bf16 %v447, %v446
        %v477 = vpack.c.bf16 %v449, %v448
        %v478 = vpack.c.bf16 %v451, %v450
        %v479 = vpack.c.bf16 %v453, %v452
        %v480 = vpack.c.bf16 %v455, %v454
        %v481 = vpack.c.bf16 %v457, %v456
        %v482 = vpack.c.bf16 %v459, %v458
        %v483 = vpack.c.bf16 %v461, %v460
        %v484 = vpack.c.bf16 %v463, %v462
        %v485 = vpack.c.bf16 %v465, %v464
        %v486 = vpack.c.bf16 %v467, %v466
        %v487 = vpack.c.bf16 %v469, %v468
        %v488 = vpack.c.bf16 %v471, %v470
        %v489 = vpack.c.bf16 %v473, %v472
        %v490 = vld [vmem:[%s2] sm:$0xf]
        %v491 = vld [vmem:[%s2 + $0x4] sm:$0xf]
        %v492 = vld [vmem:[%s2 + $0x8] sm:$0xf]
        %v493 = vld [vmem:[%s2 + $0xc] sm:$0xf]
        %v494 = vld [vmem:[%s2 + $0x10] sm:$0xf]
        %v495 = vld [vmem:[%s2 + $0x14] sm:$0xf]
        %v496 = vld [vmem:[%s2 + $0x18] sm:$0xf]
        %v497 = vld [vmem:[%s2 + $0x1c] sm:$0xf]
        %v498 = vld [vmem:[%s2 + $0x20] sm:$0xf]
        %v499 = vld [vmem:[%s2 + $0x24] sm:$0xf]
        %v500 = vld [vmem:[%s2 + $0x28] sm:$0xf]
        %v501 = vld [vmem:[%s2 + $0x2c] sm:$0xf]
        %v502 = vld [vmem:[%s2 + $0x30] sm:$0xf]
        %v503 = vld [vmem:[%s2 + $0x34] sm:$0xf]
        %v504 = vld [vmem:[%s2 + $0x38] sm:$0xf]
        %v505 = vld [vmem:[%s2 + $0x3c] sm:$0xf]
        %v506 = vld [vmem:[%s3] sm:$0xf]
        %v507 = vld [vmem:[%s3 + $0x4] sm:$0xf]
        %v508 = vld [vmem:[%s3 + $0x8] sm:$0xf]
        %v509 = vld [vmem:[%s3 + $0xc] sm:$0xf]
        %v510 = vld [vmem:[%s3 + $0x10] sm:$0xf]
        %v511 = vld [vmem:[%s3 + $0x14] sm:$0xf]
        %v512 = vld [vmem:[%s3 + $0x18] sm:$0xf]
        %v513 = vld [vmem:[%s3 + $0x1c] sm:$0xf]
        %v514 = vld [vmem:[%s3 + $0x20] sm:$0xf]
        %v515 = vld [vmem:[%s3 + $0x24] sm:$0xf]
        %v516 = vld [vmem:[%s3 + $0x28] sm:$0xf]
        %v517 = vld [vmem:[%s3 + $0x2c] sm:$0xf]
        %v518 = vld [vmem:[%s3 + $0x30] sm:$0xf]
        %v519 = vld [vmem:[%s3 + $0x34] sm:$0xf]
        %v520 = vld [vmem:[%s3 + $0x38] sm:$0xf]
        %v521 = vld [vmem:[%s3 + $0x3c] sm:$0xf]
        %v522 = vld [vmem:[%s359] sm:$0xf]
        %v523 = vld [vmem:[%s359 + $0x4] sm:$0xf]
        %v524 = vld [vmem:[%s359 + $0x8] sm:$0xf]
        %v525 = vld [vmem:[%s359 + $0xc] sm:$0xf]
        %v526 = vld [vmem:[%s359 + $0x10] sm:$0xf]
        %v527 = vld [vmem:[%s359 + $0x14] sm:$0xf]
        %v528 = vld [vmem:[%s359 + $0x18] sm:$0xf]
        %v529 = vld [vmem:[%s359 + $0x1c] sm:$0xf]
        %v530 = vld [vmem:[%s359 + $0x20] sm:$0xf]
        %v531 = vld [vmem:[%s359 + $0x24] sm:$0xf]
        %v532 = vld [vmem:[%s359 + $0x28] sm:$0xf]
        %v533 = vld [vmem:[%s359 + $0x2c] sm:$0xf]
        %v534 = vld [vmem:[%s359 + $0x30] sm:$0xf]
        %v535 = vld [vmem:[%s359 + $0x34] sm:$0xf]
        %v536 = vld [vmem:[%s359 + $0x38] sm:$0xf]
        %v537 = vld [vmem:[%s359 + $0x3c] sm:$0xf]
        %s538 = scalar_lea.vmem %s359, 64
        %v539 = vld [vmem:[%s538] sm:$0xf]
        %v540 = vld [vmem:[%s538 + $0x4] sm:$0xf]
        %v541 = vld [vmem:[%s538 + $0x8] sm:$0xf]
        %v542 = vld [vmem:[%s538 + $0xc] sm:$0xf]
        %v543 = vld [vmem:[%s538 + $0x10] sm:$0xf]
        %v544 = vld [vmem:[%s538 + $0x14] sm:$0xf]
        %v545 = vld [vmem:[%s538 + $0x18] sm:$0xf]
        %v546 = vld [vmem:[%s538 + $0x1c] sm:$0xf]
        %v547 = vld [vmem:[%s538 + $0x20] sm:$0xf]
        %v548 = vld [vmem:[%s538 + $0x24] sm:$0xf]
        %v549 = vld [vmem:[%s538 + $0x28] sm:$0xf]
        %v550 = vld [vmem:[%s538 + $0x2c] sm:$0xf]
        %v551 = vld [vmem:[%s538 + $0x30] sm:$0xf]
        %v552 = vld [vmem:[%s538 + $0x34] sm:$0xf]
        %v553 = vld [vmem:[%s538 + $0x38] sm:$0xf]
        %v554 = vld [vmem:[%s538 + $0x3c] sm:$0xf]
        %s555 = scalar_lea.vmem %s359, 128
        %v556 = vld [vmem:[%s555] sm:$0xf]
        %v557 = vld [vmem:[%s555 + $0x4] sm:$0xf]
        %v558 = vld [vmem:[%s555 + $0x8] sm:$0xf]
        %v559 = vld [vmem:[%s555 + $0xc] sm:$0xf]
        %v560 = vld [vmem:[%s555 + $0x10] sm:$0xf]
        %v561 = vld [vmem:[%s555 + $0x14] sm:$0xf]
        %v562 = vld [vmem:[%s555 + $0x18] sm:$0xf]
        %v563 = vld [vmem:[%s555 + $0x1c] sm:$0xf]
        %v564 = vld [vmem:[%s555 + $0x20] sm:$0xf]
        %v565 = vld [vmem:[%s555 + $0x24] sm:$0xf]
        %v566 = vld [vmem:[%s555 + $0x28] sm:$0xf]
        %v567 = vld [vmem:[%s555 + $0x2c] sm:$0xf]
        %v568 = vld [vmem:[%s555 + $0x30] sm:$0xf]
        %v569 = vld [vmem:[%s555 + $0x34] sm:$0xf]
        %v570 = vld [vmem:[%s555 + $0x38] sm:$0xf]
        %v571 = vld [vmem:[%s555 + $0x3c] sm:$0xf]
        %s572 = scalar_lea.vmem %s359, 192
        %v573 = vld [vmem:[%s572] sm:$0xf]
        %v574 = vld [vmem:[%s572 + $0x4] sm:$0xf]
        %v575 = vld [vmem:[%s572 + $0x8] sm:$0xf]
        %v576 = vld [vmem:[%s572 + $0xc] sm:$0xf]
        %v577 = vld [vmem:[%s572 + $0x10] sm:$0xf]
        %v578 = vld [vmem:[%s572 + $0x14] sm:$0xf]
        %v579 = vld [vmem:[%s572 + $0x18] sm:$0xf]
        %v580 = vld [vmem:[%s572 + $0x1c] sm:$0xf]
        %v581 = vld [vmem:[%s572 + $0x20] sm:$0xf]
        %v582 = vld [vmem:[%s572 + $0x24] sm:$0xf]
        %v583 = vld [vmem:[%s572 + $0x28] sm:$0xf]
        %v584 = vld [vmem:[%s572 + $0x2c] sm:$0xf]
        %v585 = vld [vmem:[%s572 + $0x30] sm:$0xf]
        %v586 = vld [vmem:[%s572 + $0x34] sm:$0xf]
        %v587 = vld [vmem:[%s572 + $0x38] sm:$0xf]
        %v588 = vld [vmem:[%s572 + $0x3c] sm:$0xf]
        %s589 = scalar_lea.vmem %s359, 256
        %v590 = vld [vmem:[%s589] sm:$0xf]
        %v591 = vld [vmem:[%s589 + $0x4] sm:$0xf]
        %v592 = vld [vmem:[%s589 + $0x8] sm:$0xf]
        %v593 = vld [vmem:[%s589 + $0xc] sm:$0xf]
        %v594 = vld [vmem:[%s589 + $0x10] sm:$0xf]
        %v595 = vld [vmem:[%s589 + $0x14] sm:$0xf]
        %v596 = vld [vmem:[%s589 + $0x18] sm:$0xf]
        %v597 = vld [vmem:[%s589 + $0x1c] sm:$0xf]
        %v598 = vld [vmem:[%s589 + $0x20] sm:$0xf]
        %v599 = vld [vmem:[%s589 + $0x24] sm:$0xf]
        %v600 = vld [vmem:[%s589 + $0x28] sm:$0xf]
        %v601 = vld [vmem:[%s589 + $0x2c] sm:$0xf]
        %v602 = vld [vmem:[%s589 + $0x30] sm:$0xf]
        %v603 = vld [vmem:[%s589 + $0x34] sm:$0xf]
        %v604 = vld [vmem:[%s589 + $0x38] sm:$0xf]
        %v605 = vld [vmem:[%s589 + $0x3c] sm:$0xf]
        %s606 = scalar_lea.vmem %s359, 320
        %v607 = vld [vmem:[%s606] sm:$0xf]
        %v608 = vld [vmem:[%s606 + $0x4] sm:$0xf]
        %v609 = vld [vmem:[%s606 + $0x8] sm:$0xf]
        %v610 = vld [vmem:[%s606 + $0xc] sm:$0xf]
        %v611 = vld [vmem:[%s606 + $0x10] sm:$0xf]
        %v612 = vld [vmem:[%s606 + $0x14] sm:$0xf]
        %v613 = vld [vmem:[%s606 + $0x18] sm:$0xf]
        %v614 = vld [vmem:[%s606 + $0x1c] sm:$0xf]
        %v615 = vld [vmem:[%s606 + $0x20] sm:$0xf]
        %v616 = vld [vmem:[%s606 + $0x24] sm:$0xf]
        %v617 = vld [vmem:[%s606 + $0x28] sm:$0xf]
        %v618 = vld [vmem:[%s606 + $0x2c] sm:$0xf]
        %v619 = vld [vmem:[%s606 + $0x30] sm:$0xf]
        %v620 = vld [vmem:[%s606 + $0x34] sm:$0xf]
        %v621 = vld [vmem:[%s606 + $0x38] sm:$0xf]
        %v622 = vld [vmem:[%s606 + $0x3c] sm:$0xf]
        %s623 = scalar_lea.vmem %s359, 384
        %v624 = vld [vmem:[%s623] sm:$0xf]
        %v625 = vld [vmem:[%s623 + $0x4] sm:$0xf]
        %v626 = vld [vmem:[%s623 + $0x8] sm:$0xf]
        %v627 = vld [vmem:[%s623 + $0xc] sm:$0xf]
        %v628 = vld [vmem:[%s623 + $0x10] sm:$0xf]
        %v629 = vld [vmem:[%s623 + $0x14] sm:$0xf]
        %v630 = vld [vmem:[%s623 + $0x18] sm:$0xf]
        %v631 = vld [vmem:[%s623 + $0x1c] sm:$0xf]
        %v632 = vld [vmem:[%s623 + $0x20] sm:$0xf]
        %v633 = vld [vmem:[%s623 + $0x24] sm:$0xf]
        %v634 = vld [vmem:[%s623 + $0x28] sm:$0xf]
        %v635 = vld [vmem:[%s623 + $0x2c] sm:$0xf]
        %v636 = vld [vmem:[%s623 + $0x30] sm:$0xf]
        %v637 = vld [vmem:[%s623 + $0x34] sm:$0xf]
        %v638 = vld [vmem:[%s623 + $0x38] sm:$0xf]
        %v639 = vld [vmem:[%s623 + $0x3c] sm:$0xf]
        %v656 = vunpack.c.l.b16 %v522
        %v657 = vunpack.c.l.b16 %v523
        %v658 = vunpack.c.l.b16 %v524
        %v659 = vunpack.c.l.b16 %v525
        %v660 = vunpack.c.l.b16 %v526
        %v661 = vunpack.c.l.b16 %v527
        %v662 = vunpack.c.l.b16 %v528
        %v663 = vunpack.c.l.b16 %v529
        %v664 = vunpack.c.l.b16 %v530
        %v665 = vunpack.c.l.b16 %v531
        %v666 = vunpack.c.l.b16 %v532
        %v667 = vunpack.c.l.b16 %v533
        %v668 = vunpack.c.l.b16 %v534
        %v669 = vunpack.c.l.b16 %v535
        %v670 = vunpack.c.l.b16 %v536
        %v671 = vunpack.c.l.b16 %v537
        %v672 = vpack.c.b16 %v657, %v656
        %v673 = vpack.c.b16 %v659, %v658
        %v674 = vpack.c.b16 %v661, %v660
        %v675 = vpack.c.b16 %v663, %v662
        %v676 = vpack.c.b16 %v665, %v664
        %v677 = vpack.c.b16 %v667, %v666
        %v678 = vpack.c.b16 %v669, %v668
        %v679 = vpack.c.b16 %v671, %v670
        %688 = vmatpush.bf16.msra.mxu0 %v679
        %689 = vmatpush.bf16.msra.mxu0 %v678
        %690 = vmatpush.bf16.msra.mxu0 %v677
        %691 = vmatpush.bf16.msra.mxu0 %v676
        %692 = vmatpush.bf16.msra.mxu0 %v675
        %693 = vmatpush.bf16.msra.mxu0 %v674
        %694 = vmatpush.bf16.msra.mxu0 %v673
        %695 = vmatpush.bf16.msra.mxu0 %v672
        %696 = vmatmul.bf16.gmra.mxu0 %v474
        %v697 = vpop.f32.mrf.mxu0
        %v698 = vadd.f32 0.0, %v697
        %v699 = vpop.f32.mrf.mxu0
        %v700 = vadd.f32 0.0, %v699
        %701 = vmatmul.bf16.gmra.mxu0 %v475
        %v702 = vpop.f32.mrf.mxu0
        %v703 = vadd.f32 0.0, %v702
        %v704 = vpop.f32.mrf.mxu0
        %v705 = vadd.f32 0.0, %v704
        %706 = vmatmul.bf16.gmra.mxu0 %v476
        %v707 = vpop.f32.mrf.mxu0
        %v708 = vadd.f32 0.0, %v707
        %v709 = vpop.f32.mrf.mxu0
        %v710 = vadd.f32 0.0, %v709
        %711 = vmatmul.bf16.gmra.mxu0 %v477
        %v712 = vpop.f32.mrf.mxu0
        %v713 = vadd.f32 0.0, %v712
        %v714 = vpop.f32.mrf.mxu0
        %v715 = vadd.f32 0.0, %v714
        %716 = vmatmul.bf16.gmra.mxu0 %v478
        %v717 = vpop.f32.mrf.mxu0
        %v718 = vadd.f32 0.0, %v717
        %v719 = vpop.f32.mrf.mxu0
        %v720 = vadd.f32 0.0, %v719
        %721 = vmatmul.bf16.gmra.mxu0 %v479
        %v722 = vpop.f32.mrf.mxu0
        %v723 = vadd.f32 0.0, %v722
        %v724 = vpop.f32.mrf.mxu0
        %v725 = vadd.f32 0.0, %v724
        %726 = vmatmul.bf16.gmra.mxu0 %v480
        %v727 = vpop.f32.mrf.mxu0
        %v728 = vadd.f32 0.0, %v727
        %v729 = vpop.f32.mrf.mxu0
        %v730 = vadd.f32 0.0, %v729
        %731 = vmatmul.bf16.gmra.mxu0 %v481
        %v732 = vpop.f32.mrf.mxu0
        %v733 = vadd.f32 0.0, %v732
        %v734 = vpop.f32.mrf.mxu0
        %v735 = vadd.f32 0.0, %v734
        %736 = vdwg.mxu0
        %v737 = vpack.c.bf16 %v700, %v698
        %v738 = vpack.c.bf16 %v705, %v703
        %v739 = vpack.c.bf16 %v710, %v708
        %v740 = vpack.c.bf16 %v715, %v713
        %v741 = vpack.c.bf16 %v720, %v718
        %v742 = vpack.c.bf16 %v725, %v723
        %v743 = vpack.c.bf16 %v730, %v728
        %v744 = vpack.c.bf16 %v735, %v733
        %v761 = vunpack.c.l.b16 %v539
        %v762 = vunpack.c.l.b16 %v540
        %v763 = vunpack.c.l.b16 %v541
        %v764 = vunpack.c.l.b16 %v542
        %v765 = vunpack.c.l.b16 %v543
        %v766 = vunpack.c.l.b16 %v544
        %v767 = vunpack.c.l.b16 %v545
        %v768 = vunpack.c.l.b16 %v546
        %v769 = vunpack.c.l.b16 %v547
        %v770 = vunpack.c.l.b16 %v548
        %v771 = vunpack.c.l.b16 %v549
        %v772 = vunpack.c.l.b16 %v550
        %v773 = vunpack.c.l.b16 %v551
        %v774 = vunpack.c.l.b16 %v552
        %v775 = vunpack.c.l.b16 %v553
        %v776 = vunpack.c.l.b16 %v554
        %v777 = vpack.c.b16 %v762, %v761
        %v778 = vpack.c.b16 %v764, %v763
        %v779 = vpack.c.b16 %v766, %v765
        %v780 = vpack.c.b16 %v768, %v767
        %v781 = vpack.c.b16 %v770, %v769
        %v782 = vpack.c.b16 %v772, %v771
        %v783 = vpack.c.b16 %v774, %v773
        %v784 = vpack.c.b16 %v776, %v775
        %793 = vmatpush.bf16.msra.mxu0 %v784
        %794 = vmatpush.bf16.msra.mxu0 %v783
        %795 = vmatpush.bf16.msra.mxu0 %v782
        %796 = vmatpush.bf16.msra.mxu0 %v781
        %797 = vmatpush.bf16.msra.mxu0 %v780
        %798 = vmatpush.bf16.msra.mxu0 %v779
        %799 = vmatpush.bf16.msra.mxu0 %v778
        %800 = vmatpush.bf16.msra.mxu0 %v777
        %801 = vmatmul.bf16.gmra.mxu0 %v474
        %v802 = vpop.f32.mrf.mxu0
        %v803 = vadd.f32 0.0, %v802
        %v804 = vpop.f32.mrf.mxu0
        %v805 = vadd.f32 0.0, %v804
        %806 = vmatmul.bf16.gmra.mxu0 %v475
        %v807 = vpop.f32.mrf.mxu0
        %v808 = vadd.f32 0.0, %v807
        %v809 = vpop.f32.mrf.mxu0
        %v810 = vadd.f32 0.0, %v809
        %811 = vmatmul.bf16.gmra.mxu0 %v476
        %v812 = vpop.f32.mrf.mxu0
        %v813 = vadd.f32 0.0, %v812
        %v814 = vpop.f32.mrf.mxu0
        %v815 = vadd.f32 0.0, %v814
        %816 = vmatmul.bf16.gmra.mxu0 %v477
        %v817 = vpop.f32.mrf.mxu0
        %v818 = vadd.f32 0.0, %v817
        %v819 = vpop.f32.mrf.mxu0
        %v820 = vadd.f32 0.0, %v819
        %821 = vmatmul.bf16.gmra.mxu0 %v478
        %v822 = vpop.f32.mrf.mxu0
        %v823 = vadd.f32 0.0, %v822
        %v824 = vpop.f32.mrf.mxu0
        %v825 = vadd.f32 0.0, %v824
        %826 = vmatmul.bf16.gmra.mxu0 %v479
        %v827 = vpop.f32.mrf.mxu0
        %v828 = vadd.f32 0.0, %v827
        %v829 = vpop.f32.mrf.mxu0
        %v830 = vadd.f32 0.0, %v829
        %831 = vmatmul.bf16.gmra.mxu0 %v480
        %v832 = vpop.f32.mrf.mxu0
        %v833 = vadd.f32 0.0, %v832
        %v834 = vpop.f32.mrf.mxu0
        %v835 = vadd.f32 0.0, %v834
        %836 = vmatmul.bf16.gmra.mxu0 %v481
        %v837 = vpop.f32.mrf.mxu0
        %v838 = vadd.f32 0.0, %v837
        %v839 = vpop.f32.mrf.mxu0
        %v840 = vadd.f32 0.0, %v839
        %841 = vdwg.mxu0
        %v842 = vpack.c.bf16 %v805, %v803
        %v843 = vpack.c.bf16 %v810, %v808
        %v844 = vpack.c.bf16 %v815, %v813
        %v845 = vpack.c.bf16 %v820, %v818
        %v846 = vpack.c.bf16 %v825, %v823
        %v847 = vpack.c.bf16 %v830, %v828
        %v848 = vpack.c.bf16 %v835, %v833
        %v849 = vpack.c.bf16 %v840, %v838
        %v866 = vunpack.c.l.b16 %v506
        %v867 = vunpack.c.l.b16 %v507
        %v868 = vunpack.c.l.b16 %v508
        %v869 = vunpack.c.l.b16 %v509
        %v870 = vunpack.c.l.b16 %v510
        %v871 = vunpack.c.l.b16 %v511
        %v872 = vunpack.c.l.b16 %v512
        %v873 = vunpack.c.l.b16 %v513
        %v874 = vunpack.c.l.b16 %v514
        %v875 = vunpack.c.l.b16 %v515
        %v876 = vunpack.c.l.b16 %v516
        %v877 = vunpack.c.l.b16 %v517
        %v878 = vunpack.c.l.b16 %v518
        %v879 = vunpack.c.l.b16 %v519
        %v880 = vunpack.c.l.b16 %v520
        %v881 = vunpack.c.l.b16 %v521
        %v882 = vpack.c.b16 %v867, %v866
        %v883 = vpack.c.b16 %v869, %v868
        %v884 = vpack.c.b16 %v871, %v870
        %v885 = vpack.c.b16 %v873, %v872
        %v886 = vpack.c.b16 %v875, %v874
        %v887 = vpack.c.b16 %v877, %v876
        %v888 = vpack.c.b16 %v879, %v878
        %v889 = vpack.c.b16 %v881, %v880
        %898 = vmatpush.bf16.msra.mxu0 %v849
        %899 = vmatpush.bf16.msra.mxu0 %v848
        %900 = vmatpush.bf16.msra.mxu0 %v847
        %901 = vmatpush.bf16.msra.mxu0 %v846
        %902 = vmatpush.bf16.msra.mxu0 %v845
        %903 = vmatpush.bf16.msra.mxu0 %v844
        %904 = vmatpush.bf16.msra.mxu0 %v843
        %905 = vmatpush.bf16.msra.mxu0 %v842
        %906 = vmatmul.bf16.gmra.mxu0 %v882
        %v907 = vpop.f32.mrf.mxu0
        %v908 = vadd.f32 0.0, %v907
        %v909 = vpop.f32.mrf.mxu0
        %v910 = vadd.f32 0.0, %v909
        %911 = vmatmul.bf16.gmra.mxu0 %v883
        %v912 = vpop.f32.mrf.mxu0
        %v913 = vadd.f32 0.0, %v912
        %v914 = vpop.f32.mrf.mxu0
        %v915 = vadd.f32 0.0, %v914
        %916 = vmatmul.bf16.gmra.mxu0 %v884
        %v917 = vpop.f32.mrf.mxu0
        %v918 = vadd.f32 0.0, %v917
        %v919 = vpop.f32.mrf.mxu0
        %v920 = vadd.f32 0.0, %v919
        %921 = vmatmul.bf16.gmra.mxu0 %v885
        %v922 = vpop.f32.mrf.mxu0
        %v923 = vadd.f32 0.0, %v922
        %v924 = vpop.f32.mrf.mxu0
        %v925 = vadd.f32 0.0, %v924
        %926 = vmatmul.bf16.gmra.mxu0 %v886
        %v927 = vpop.f32.mrf.mxu0
        %v928 = vadd.f32 0.0, %v927
        %v929 = vpop.f32.mrf.mxu0
        %v930 = vadd.f32 0.0, %v929
        %931 = vmatmul.bf16.gmra.mxu0 %v887
        %v932 = vpop.f32.mrf.mxu0
        %v933 = vadd.f32 0.0, %v932
        %v934 = vpop.f32.mrf.mxu0
        %v935 = vadd.f32 0.0, %v934
        %936 = vmatmul.bf16.gmra.mxu0 %v888
        %v937 = vpop.f32.mrf.mxu0
        %v938 = vadd.f32 0.0, %v937
        %v939 = vpop.f32.mrf.mxu0
        %v940 = vadd.f32 0.0, %v939
        %941 = vmatmul.bf16.gmra.mxu0 %v889
        %v942 = vpop.f32.mrf.mxu0
        %v943 = vadd.f32 0.0, %v942
        %v944 = vpop.f32.mrf.mxu0
        %v945 = vadd.f32 0.0, %v944
        %946 = vdwg.mxu0
        %v963 = vunpack.c.l.b16 %v490
        %v964 = vunpack.c.l.b16 %v491
        %v965 = vunpack.c.l.b16 %v492
        %v966 = vunpack.c.l.b16 %v493
        %v967 = vunpack.c.l.b16 %v494
        %v968 = vunpack.c.l.b16 %v495
        %v969 = vunpack.c.l.b16 %v496
        %v970 = vunpack.c.l.b16 %v497
        %v971 = vunpack.c.l.b16 %v498
        %v972 = vunpack.c.l.b16 %v499
        %v973 = vunpack.c.l.b16 %v500
        %v974 = vunpack.c.l.b16 %v501
        %v975 = vunpack.c.l.b16 %v502
        %v976 = vunpack.c.l.b16 %v503
        %v977 = vunpack.c.l.b16 %v504
        %v978 = vunpack.c.l.b16 %v505
        %v979 = vpack.c.b16 %v964, %v963
        %v980 = vpack.c.b16 %v966, %v965
        %v981 = vpack.c.b16 %v968, %v967
        %v982 = vpack.c.b16 %v970, %v969
        %v983 = vpack.c.b16 %v972, %v971
        %v984 = vpack.c.b16 %v974, %v973
        %v985 = vpack.c.b16 %v976, %v975
        %v986 = vpack.c.b16 %v978, %v977
        %995 = vmatpush.bf16.msra.mxu0 %v744
        %996 = vmatpush.bf16.msra.mxu0 %v743
        %997 = vmatpush.bf16.msra.mxu0 %v742
        %998 = vmatpush.bf16.msra.mxu0 %v741
        %999 = vmatpush.bf16.msra.mxu0 %v740
        %1000 = vmatpush.bf16.msra.mxu0 %v739
        %1001 = vmatpush.bf16.msra.mxu0 %v738
        %1002 = vmatpush.bf16.msra.mxu0 %v737
        %1003 = vmatmul.bf16.gmra.mxu0 %v979
        %v1004 = vpop.f32.mrf.mxu0
        %v1005 = vadd.f32 %v908, %v1004
        %v1006 = vpop.f32.mrf.mxu0
        %v1007 = vadd.f32 %v910, %v1006
        %1008 = vmatmul.bf16.gmra.mxu0 %v980
        %v1009 = vpop.f32.mrf.mxu0
        %v1010 = vadd.f32 %v913, %v1009
        %v1011 = vpop.f32.mrf.mxu0
        %v1012 = vadd.f32 %v915, %v1011
        %1013 = vmatmul.bf16.gmra.mxu0 %v981
        %v1014 = vpop.f32.mrf.mxu0
        %v1015 = vadd.f32 %v918, %v1014
        %v1016 = vpop.f32.mrf.mxu0
        %v1017 = vadd.f32 %v920, %v1016
        %1018 = vmatmul.bf16.gmra.mxu0 %v982
        %v1019 = vpop.f32.mrf.mxu0
        %v1020 = vadd.f32 %v923, %v1019
        %v1021 = vpop.f32.mrf.mxu0
        %v1022 = vadd.f32 %v925, %v1021
        %1023 = vmatmul.bf16.gmra.mxu0 %v983
        %v1024 = vpop.f32.mrf.mxu0
        %v1025 = vadd.f32 %v928, %v1024
        %v1026 = vpop.f32.mrf.mxu0
        %v1027 = vadd.f32 %v930, %v1026
        %1028 = vmatmul.bf16.gmra.mxu0 %v984
        %v1029 = vpop.f32.mrf.mxu0
        %v1030 = vadd.f32 %v933, %v1029
        %v1031 = vpop.f32.mrf.mxu0
        %v1032 = vadd.f32 %v935, %v1031
        %1033 = vmatmul.bf16.gmra.mxu0 %v985
        %v1034 = vpop.f32.mrf.mxu0
        %v1035 = vadd.f32 %v938, %v1034
        %v1036 = vpop.f32.mrf.mxu0
        %v1037 = vadd.f32 %v940, %v1036
        %1038 = vmatmul.bf16.gmra.mxu0 %v986
        %v1039 = vpop.f32.mrf.mxu0
        %v1040 = vadd.f32 %v943, %v1039
        %v1041 = vpop.f32.mrf.mxu0
        %v1042 = vadd.f32 %v945, %v1041
        %1043 = vdwg.mxu0
        %v1060 = vunpack.c.l.b16 %v556
        %v1061 = vunpack.c.l.b16 %v557
        %v1062 = vunpack.c.l.b16 %v558
        %v1063 = vunpack.c.l.b16 %v559
        %v1064 = vunpack.c.l.b16 %v560
        %v1065 = vunpack.c.l.b16 %v561
        %v1066 = vunpack.c.l.b16 %v562
        %v1067 = vunpack.c.l.b16 %v563
        %v1068 = vunpack.c.l.b16 %v564
        %v1069 = vunpack.c.l.b16 %v565
        %v1070 = vunpack.c.l.b16 %v566
        %v1071 = vunpack.c.l.b16 %v567
        %v1072 = vunpack.c.l.b16 %v568
        %v1073 = vunpack.c.l.b16 %v569
        %v1074 = vunpack.c.l.b16 %v570
        %v1075 = vunpack.c.l.b16 %v571
        %v1076 = vpack.c.b16 %v1061, %v1060
        %v1077 = vpack.c.b16 %v1063, %v1062
        %v1078 = vpack.c.b16 %v1065, %v1064
        %v1079 = vpack.c.b16 %v1067, %v1066
        %v1080 = vpack.c.b16 %v1069, %v1068
        %v1081 = vpack.c.b16 %v1071, %v1070
        %v1082 = vpack.c.b16 %v1073, %v1072
        %v1083 = vpack.c.b16 %v1075, %v1074
        %1092 = vmatpush.bf16.msra.mxu0 %v1083
        %1093 = vmatpush.bf16.msra.mxu0 %v1082
        %1094 = vmatpush.bf16.msra.mxu0 %v1081
        %1095 = vmatpush.bf16.msra.mxu0 %v1080
        %1096 = vmatpush.bf16.msra.mxu0 %v1079
        %1097 = vmatpush.bf16.msra.mxu0 %v1078
        %1098 = vmatpush.bf16.msra.mxu0 %v1077
        %1099 = vmatpush.bf16.msra.mxu0 %v1076
        %1100 = vmatmul.bf16.gmra.mxu0 %v482
        %v1101 = vpop.f32.mrf.mxu0
        %v1102 = vadd.f32 0.0, %v1101
        %v1103 = vpop.f32.mrf.mxu0
        %v1104 = vadd.f32 0.0, %v1103
        %1105 = vmatmul.bf16.gmra.mxu0 %v483
        %v1106 = vpop.f32.mrf.mxu0
        %v1107 = vadd.f32 0.0, %v1106
        %v1108 = vpop.f32.mrf.mxu0
        %v1109 = vadd.f32 0.0, %v1108
        %1110 = vmatmul.bf16.gmra.mxu0 %v484
        %v1111 = vpop.f32.mrf.mxu0
        %v1112 = vadd.f32 0.0, %v1111
        %v1113 = vpop.f32.mrf.mxu0
        %v1114 = vadd.f32 0.0, %v1113
        %1115 = vmatmul.bf16.gmra.mxu0 %v485
        %v1116 = vpop.f32.mrf.mxu0
        %v1117 = vadd.f32 0.0, %v1116
        %v1118 = vpop.f32.mrf.mxu0
        %v1119 = vadd.f32 0.0, %v1118
        %1120 = vmatmul.bf16.gmra.mxu0 %v486
        %v1121 = vpop.f32.mrf.mxu0
        %v1122 = vadd.f32 0.0, %v1121
        %v1123 = vpop.f32.mrf.mxu0
        %v1124 = vadd.f32 0.0, %v1123
        %1125 = vmatmul.bf16.gmra.mxu0 %v487
        %v1126 = vpop.f32.mrf.mxu0
        %v1127 = vadd.f32 0.0, %v1126
        %v1128 = vpop.f32.mrf.mxu0
        %v1129 = vadd.f32 0.0, %v1128
        %1130 = vmatmul.bf16.gmra.mxu0 %v488
        %v1131 = vpop.f32.mrf.mxu0
        %v1132 = vadd.f32 0.0, %v1131
        %v1133 = vpop.f32.mrf.mxu0
        %v1134 = vadd.f32 0.0, %v1133
        %1135 = vmatmul.bf16.gmra.mxu0 %v489
        %v1136 = vpop.f32.mrf.mxu0
        %v1137 = vadd.f32 0.0, %v1136
        %v1138 = vpop.f32.mrf.mxu0
        %v1139 = vadd.f32 0.0, %v1138
        %1140 = vdwg.mxu0
        %v1141 = vadd.f32 %v1005, %v1102
        %v1142 = vadd.f32 %v1007, %v1104
        %v1143 = vadd.f32 %v1010, %v1107
        %v1144 = vadd.f32 %v1012, %v1109
        %v1145 = vadd.f32 %v1015, %v1112
        %v1146 = vadd.f32 %v1017, %v1114
        %v1147 = vadd.f32 %v1020, %v1117
        %v1148 = vadd.f32 %v1022, %v1119
        %v1149 = vadd.f32 %v1025, %v1122
        %v1150 = vadd.f32 %v1027, %v1124
        %v1151 = vadd.f32 %v1030, %v1127
        %v1152 = vadd.f32 %v1032, %v1129
        %v1153 = vadd.f32 %v1035, %v1132
        %v1154 = vadd.f32 %v1037, %v1134
        %v1155 = vadd.f32 %v1040, %v1137
        %v1156 = vadd.f32 %v1042, %v1139
        %v1157 = vld [vmem:[%s368] sm:$0xff]
        %v1158 = vld [vmem:[%s368 + $0x8] sm:$0xff]
        %v1159 = vld [vmem:[%s368 + $0x10] sm:$0xff]
        %v1160 = vld [vmem:[%s368 + $0x18] sm:$0xff]
        %v1161 = vld [vmem:[%s368 + $0x20] sm:$0xff]
        %v1162 = vld [vmem:[%s368 + $0x28] sm:$0xff]
        %v1163 = vld [vmem:[%s368 + $0x30] sm:$0xff]
        %v1164 = vld [vmem:[%s368 + $0x38] sm:$0xff]
        %v1165 = vld [vmem:[%s368 + $0x40] sm:$0xff]
        %v1166 = vld [vmem:[%s368 + $0x48] sm:$0xff]
        %v1167 = vld [vmem:[%s368 + $0x50] sm:$0xff]
        %v1168 = vld [vmem:[%s368 + $0x58] sm:$0xff]
        %v1169 = vld [vmem:[%s368 + $0x60] sm:$0xff]
        %v1170 = vld [vmem:[%s368 + $0x68] sm:$0xff]
        %v1171 = vld [vmem:[%s368 + $0x70] sm:$0xff]
        %v1172 = vld [vmem:[%s368 + $0x78] sm:$0xff]
        %v1173 = vadd.f32 %v1141, %v1157
        %v1174 = vadd.f32 %v1142, %v1158
        %v1175 = vadd.f32 %v1143, %v1159
        %v1176 = vadd.f32 %v1144, %v1160
        %v1177 = vadd.f32 %v1145, %v1161
        %v1178 = vadd.f32 %v1146, %v1162
        %v1179 = vadd.f32 %v1147, %v1163
        %v1180 = vadd.f32 %v1148, %v1164
        %v1181 = vadd.f32 %v1149, %v1165
        %v1182 = vadd.f32 %v1150, %v1166
        %v1183 = vadd.f32 %v1151, %v1167
        %v1184 = vadd.f32 %v1152, %v1168
        %v1185 = vadd.f32 %v1153, %v1169
        %v1186 = vadd.f32 %v1154, %v1170
        %v1187 = vadd.f32 %v1155, %v1171
        %v1188 = vadd.f32 %v1156, %v1172
        %v1189 = vmax.f32 %v1173, 0.0
        %v1190 = vmax.f32 %v1174, 0.0
        %v1191 = vmax.f32 %v1175, 0.0
        %v1192 = vmax.f32 %v1176, 0.0
        %v1193 = vmax.f32 %v1177, 0.0
        %v1194 = vmax.f32 %v1178, 0.0
        %v1195 = vmax.f32 %v1179, 0.0
        %v1196 = vmax.f32 %v1180, 0.0
        %v1197 = vmax.f32 %v1181, 0.0
        %v1198 = vmax.f32 %v1182, 0.0
        %v1199 = vmax.f32 %v1183, 0.0
        %v1200 = vmax.f32 %v1184, 0.0
        %v1201 = vmax.f32 %v1185, 0.0
        %v1202 = vmax.f32 %v1186, 0.0
        %v1203 = vmax.f32 %v1187, 0.0
        %v1204 = vmax.f32 %v1188, 0.0
        %v1205 = vpack.c.bf16 %v1190, %v1189
        %v1206 = vpack.c.bf16 %v1192, %v1191
        %v1207 = vpack.c.bf16 %v1194, %v1193
        %v1208 = vpack.c.bf16 %v1196, %v1195
        %v1209 = vpack.c.bf16 %v1198, %v1197
        %v1210 = vpack.c.bf16 %v1200, %v1199
        %v1211 = vpack.c.bf16 %v1202, %v1201
        %v1212 = vpack.c.bf16 %v1204, %v1203
        %v1213 = vld [vmem:[%s363] sm:$0x1]
        %v1214 = vperm.slane %v1213, 0
        %v1231 = vunpack.c.l.b16 %v573
        %v1232 = vunpack.c.l.b16 %v574
        %v1233 = vunpack.c.l.b16 %v575
        %v1234 = vunpack.c.l.b16 %v576
        %v1235 = vunpack.c.l.b16 %v577
        %v1236 = vunpack.c.l.b16 %v578
        %v1237 = vunpack.c.l.b16 %v579
        %v1238 = vunpack.c.l.b16 %v580
        %v1239 = vunpack.c.l.b16 %v581
        %v1240 = vunpack.c.l.b16 %v582
        %v1241 = vunpack.c.l.b16 %v583
        %v1242 = vunpack.c.l.b16 %v584
        %v1243 = vunpack.c.l.b16 %v585
        %v1244 = vunpack.c.l.b16 %v586
        %v1245 = vunpack.c.l.b16 %v587
        %v1246 = vunpack.c.l.b16 %v588
        %v1247 = vpack.c.b16 %v1232, %v1231
        %v1248 = vpack.c.b16 %v1234, %v1233
        %v1249 = vpack.c.b16 %v1236, %v1235
        %v1250 = vpack.c.b16 %v1238, %v1237
        %v1251 = vpack.c.b16 %v1240, %v1239
        %v1252 = vpack.c.b16 %v1242, %v1241
        %v1253 = vpack.c.b16 %v1244, %v1243
        %v1254 = vpack.c.b16 %v1246, %v1245
        %1263 = vmatpush.bf16.msra.mxu0 %v1254
        %1264 = vmatpush.bf16.msra.mxu0 %v1253
        %1265 = vmatpush.bf16.msra.mxu0 %v1252
        %1266 = vmatpush.bf16.msra.mxu0 %v1251
        %1267 = vmatpush.bf16.msra.mxu0 %v1250
        %1268 = vmatpush.bf16.msra.mxu0 %v1249
        %1269 = vmatpush.bf16.msra.mxu0 %v1248
        %1270 = vmatpush.bf16.msra.mxu0 %v1247
        %1271 = vmatmul.bf16.gmra.mxu0 %v1205
        %v1272 = vpop.f32.mrf.mxu0
        %v1273 = vadd.f32 %v1214, %v1272
        %v1274 = vpop.f32.mrf.mxu0
        %v1275 = vadd.f32 %v1214, %v1274
        %1276 = vmatmul.bf16.gmra.mxu0 %v1206
        %v1277 = vpop.f32.mrf.mxu0
        %v1278 = vadd.f32 %v1214, %v1277
        %v1279 = vpop.f32.mrf.mxu0
        %v1280 = vadd.f32 %v1214, %v1279
        %1281 = vmatmul.bf16.gmra.mxu0 %v1207
        %v1282 = vpop.f32.mrf.mxu0
        %v1283 = vadd.f32 %v1214, %v1282
        %v1284 = vpop.f32.mrf.mxu0
        %v1285 = vadd.f32 %v1214, %v1284
        %1286 = vmatmul.bf16.gmra.mxu0 %v1208
        %v1287 = vpop.f32.mrf.mxu0
        %v1288 = vadd.f32 %v1214, %v1287
        %v1289 = vpop.f32.mrf.mxu0
        %v1290 = vadd.f32 %v1214, %v1289
        %1291 = vmatmul.bf16.gmra.mxu0 %v1209
        %v1292 = vpop.f32.mrf.mxu0
        %v1293 = vadd.f32 %v1214, %v1292
        %v1294 = vpop.f32.mrf.mxu0
        %v1295 = vadd.f32 %v1214, %v1294
        %1296 = vmatmul.bf16.gmra.mxu0 %v1210
        %v1297 = vpop.f32.mrf.mxu0
        %v1298 = vadd.f32 %v1214, %v1297
        %v1299 = vpop.f32.mrf.mxu0
        %v1300 = vadd.f32 %v1214, %v1299
        %1301 = vmatmul.bf16.gmra.mxu0 %v1211
        %v1302 = vpop.f32.mrf.mxu0
        %v1303 = vadd.f32 %v1214, %v1302
        %v1304 = vpop.f32.mrf.mxu0
        %v1305 = vadd.f32 %v1214, %v1304
        %1306 = vmatmul.bf16.gmra.mxu0 %v1212
        %v1307 = vpop.f32.mrf.mxu0
        %v1308 = vadd.f32 %v1214, %v1307
        %v1309 = vpop.f32.mrf.mxu0
        %v1310 = vadd.f32 %v1214, %v1309
        %1311 = vdwg.mxu0
        %1312 = vadd.xlane.f32.xlu0 %v1273
        %v1313 = vpop.xlane.xlu0 %1312
        %1314 = vadd.xlane.f32.xlu0 %v1275
        %v1315 = vpop.xlane.xlu0 %1314
        %1316 = vadd.xlane.f32.xlu0 %v1278
        %v1317 = vpop.xlane.xlu0 %1316
        %1318 = vadd.xlane.f32.xlu0 %v1280
        %v1319 = vpop.xlane.xlu0 %1318
        %1320 = vadd.xlane.f32.xlu0 %v1283
        %v1321 = vpop.xlane.xlu0 %1320
        %1322 = vadd.xlane.f32.xlu0 %v1285
        %v1323 = vpop.xlane.xlu0 %1322
        %1324 = vadd.xlane.f32.xlu0 %v1288
        %v1325 = vpop.xlane.xlu0 %1324
        %1326 = vadd.xlane.f32.xlu0 %v1290
        %v1327 = vpop.xlane.xlu0 %1326
        %1328 = vadd.xlane.f32.xlu0 %v1293
        %v1329 = vpop.xlane.xlu0 %1328
        %1330 = vadd.xlane.f32.xlu0 %v1295
        %v1331 = vpop.xlane.xlu0 %1330
        %1332 = vadd.xlane.f32.xlu0 %v1298
        %v1333 = vpop.xlane.xlu0 %1332
        %1334 = vadd.xlane.f32.xlu0 %v1300
        %v1335 = vpop.xlane.xlu0 %1334
        %1336 = vadd.xlane.f32.xlu0 %v1303
        %v1337 = vpop.xlane.xlu0 %1336
        %1338 = vadd.xlane.f32.xlu0 %v1305
        %v1339 = vpop.xlane.xlu0 %1338
        %1340 = vadd.xlane.f32.xlu0 %v1308
        %v1341 = vpop.xlane.xlu0 %1340
        %1342 = vadd.xlane.f32.xlu0 %v1310
        %v1343 = vpop.xlane.xlu0 %1342
        %v1344 = vrcp.pop 128.0
        %v1345 = vmul.f32 128.0, %v1344
        %v1346 = vsub.f32 1.0, %v1345
        %v1347 = vmul.f32 %v1344, %v1346
        %v1348 = vadd.f32 %v1344, %v1347
        %vm1349 = vweird.f32 %v1344
        %v1350 = vsel %vm1349, %v1344, %v1348
        %v1351 = vmul.f32 %v1313, %v1350
        %v1352 = vmul.f32 %v1315, %v1350
        %v1353 = vmul.f32 %v1317, %v1350
        %v1354 = vmul.f32 %v1319, %v1350
        %v1355 = vmul.f32 %v1321, %v1350
        %v1356 = vmul.f32 %v1323, %v1350
        %v1357 = vmul.f32 %v1325, %v1350
        %v1358 = vmul.f32 %v1327, %v1350
        %v1359 = vmul.f32 %v1329, %v1350
        %v1360 = vmul.f32 %v1331, %v1350
        %v1361 = vmul.f32 %v1333, %v1350
        %v1362 = vmul.f32 %v1335, %v1350
        %v1363 = vmul.f32 %v1337, %v1350
        %v1364 = vmul.f32 %v1339, %v1350
        %v1365 = vmul.f32 %v1341, %v1350
        %v1366 = vmul.f32 %v1343, %v1350
        %v1367 = vsub.f32 %v1273, %v1351
        %v1368 = vsub.f32 %v1275, %v1352
        %v1369 = vsub.f32 %v1278, %v1353
        %v1370 = vsub.f32 %v1280, %v1354
        %v1371 = vsub.f32 %v1283, %v1355
        %v1372 = vsub.f32 %v1285, %v1356
        %v1373 = vsub.f32 %v1288, %v1357
        %v1374 = vsub.f32 %v1290, %v1358
        %v1375 = vsub.f32 %v1293, %v1359
        %v1376 = vsub.f32 %v1295, %v1360
        %v1377 = vsub.f32 %v1298, %v1361
        %v1378 = vsub.f32 %v1300, %v1362
        %v1379 = vsub.f32 %v1303, %v1363
        %v1380 = vsub.f32 %v1305, %v1364
        %v1381 = vsub.f32 %v1308, %v1365
        %v1382 = vsub.f32 %v1310, %v1366
        %v1383 = vmul.f32 %v1367, %v1367
        %v1384 = vmul.f32 %v1368, %v1368
        %v1385 = vmul.f32 %v1369, %v1369
        %v1386 = vmul.f32 %v1370, %v1370
        %v1387 = vmul.f32 %v1371, %v1371
        %v1388 = vmul.f32 %v1372, %v1372
        %v1389 = vmul.f32 %v1373, %v1373
        %v1390 = vmul.f32 %v1374, %v1374
        %v1391 = vmul.f32 %v1375, %v1375
        %v1392 = vmul.f32 %v1376, %v1376
        %v1393 = vmul.f32 %v1377, %v1377
        %v1394 = vmul.f32 %v1378, %v1378
        %v1395 = vmul.f32 %v1379, %v1379
        %v1396 = vmul.f32 %v1380, %v1380
        %v1397 = vmul.f32 %v1381, %v1381
        %v1398 = vmul.f32 %v1382, %v1382
        %1399 = vadd.xlane.f32.xlu0 %v1383
        %v1400 = vpop.xlane.xlu0 %1399
        %1401 = vadd.xlane.f32.xlu0 %v1384
        %v1402 = vpop.xlane.xlu0 %1401
        %1403 = vadd.xlane.f32.xlu0 %v1385
        %v1404 = vpop.xlane.xlu0 %1403
        %1405 = vadd.xlane.f32.xlu0 %v1386
        %v1406 = vpop.xlane.xlu0 %1405
        %1407 = vadd.xlane.f32.xlu0 %v1387
        %v1408 = vpop.xlane.xlu0 %1407
        %1409 = vadd.xlane.f32.xlu0 %v1388
        %v1410 = vpop.xlane.xlu0 %1409
        %1411 = vadd.xlane.f32.xlu0 %v1389
        %v1412 = vpop.xlane.xlu0 %1411
        %1413 = vadd.xlane.f32.xlu0 %v1390
        %v1414 = vpop.xlane.xlu0 %1413
        %1415 = vadd.xlane.f32.xlu0 %v1391
        %v1416 = vpop.xlane.xlu0 %1415
        %1417 = vadd.xlane.f32.xlu0 %v1392
        %v1418 = vpop.xlane.xlu0 %1417
        %1419 = vadd.xlane.f32.xlu0 %v1393
        %v1420 = vpop.xlane.xlu0 %1419
        %1421 = vadd.xlane.f32.xlu0 %v1394
        %v1422 = vpop.xlane.xlu0 %1421
        %1423 = vadd.xlane.f32.xlu0 %v1395
        %v1424 = vpop.xlane.xlu0 %1423
        %1425 = vadd.xlane.f32.xlu0 %v1396
        %v1426 = vpop.xlane.xlu0 %1425
        %1427 = vadd.xlane.f32.xlu0 %v1397
        %v1428 = vpop.xlane.xlu0 %1427
        %1429 = vadd.xlane.f32.xlu0 %v1398
        %v1430 = vpop.xlane.xlu0 %1429
        %v1431 = vmul.f32 %v1400, %v1350
        %v1432 = vmul.f32 %v1402, %v1350
        %v1433 = vmul.f32 %v1404, %v1350
        %v1434 = vmul.f32 %v1406, %v1350
        %v1435 = vmul.f32 %v1408, %v1350
        %v1436 = vmul.f32 %v1410, %v1350
        %v1437 = vmul.f32 %v1412, %v1350
        %v1438 = vmul.f32 %v1414, %v1350
        %v1439 = vmul.f32 %v1416, %v1350
        %v1440 = vmul.f32 %v1418, %v1350
        %v1441 = vmul.f32 %v1420, %v1350
        %v1442 = vmul.f32 %v1422, %v1350
        %v1443 = vmul.f32 %v1424, %v1350
        %v1444 = vmul.f32 %v1426, %v1350
        %v1445 = vmul.f32 %v1428, %v1350
        %v1446 = vmul.f32 %v1430, %v1350
        %v1447 = vadd.f32 %v1431, 1e-05
        %v1448 = vadd.f32 %v1432, 1e-05
        %v1449 = vadd.f32 %v1433, 1e-05
        %v1450 = vadd.f32 %v1434, 1e-05
        %v1451 = vadd.f32 %v1435, 1e-05
        %v1452 = vadd.f32 %v1436, 1e-05
        %v1453 = vadd.f32 %v1437, 1e-05
        %v1454 = vadd.f32 %v1438, 1e-05
        %v1455 = vadd.f32 %v1439, 1e-05
        %v1456 = vadd.f32 %v1440, 1e-05
        %v1457 = vadd.f32 %v1441, 1e-05
        %v1458 = vadd.f32 %v1442, 1e-05
        %v1459 = vadd.f32 %v1443, 1e-05
        %v1460 = vadd.f32 %v1444, 1e-05
        %v1461 = vadd.f32 %v1445, 1e-05
        %v1462 = vadd.f32 %v1446, 1e-05
        %v1463 = vrsqrt.pop %v1447
        %v1464 = vmul.f32 %v1463, %v1447
        %v1465 = vmul.f32 %v1464, %v1463
        %v1466 = vmul.f32 0.5, %v1465
        %v1467 = vsub.f32 1.5, %v1466
        %v1468 = vmul.f32 %v1463, %v1467
        %vm1469 = vweird.f32 %v1447
        %vm1470 = vweird.f32 %v1463
        %vm1471 = vmor %vm1469, %vm1470
        %v1472 = vsel %vm1471, %v1463, %v1468
        %v1473 = vrsqrt.pop %v1448
        %v1474 = vmul.f32 %v1473, %v1448
        %v1475 = vmul.f32 %v1474, %v1473
        %v1476 = vmul.f32 0.5, %v1475
        %v1477 = vsub.f32 1.5, %v1476
        %v1478 = vmul.f32 %v1473, %v1477
        %vm1479 = vweird.f32 %v1448
        %vm1480 = vweird.f32 %v1473
        %vm1481 = vmor %vm1479, %vm1480
        %v1482 = vsel %vm1481, %v1473, %v1478
        %v1483 = vrsqrt.pop %v1449
        %v1484 = vmul.f32 %v1483, %v1449
        %v1485 = vmul.f32 %v1484, %v1483
        %v1486 = vmul.f32 0.5, %v1485
        %v1487 = vsub.f32 1.5, %v1486
        %v1488 = vmul.f32 %v1483, %v1487
        %vm1489 = vweird.f32 %v1449
        %vm1490 = vweird.f32 %v1483
        %vm1491 = vmor %vm1489, %vm1490
        %v1492 = vsel %vm1491, %v1483, %v1488
        %v1493 = vrsqrt.pop %v1450
        %v1494 = vmul.f32 %v1493, %v1450
        %v1495 = vmul.f32 %v1494, %v1493
        %v1496 = vmul.f32 0.5, %v1495
        %v1497 = vsub.f32 1.5, %v1496
        %v1498 = vmul.f32 %v1493, %v1497
        %vm1499 = vweird.f32 %v1450
        %vm1500 = vweird.f32 %v1493
        %vm1501 = vmor %vm1499, %vm1500
        %v1502 = vsel %vm1501, %v1493, %v1498
        %v1503 = vrsqrt.pop %v1451
        %v1504 = vmul.f32 %v1503, %v1451
        %v1505 = vmul.f32 %v1504, %v1503
        %v1506 = vmul.f32 0.5, %v1505
        %v1507 = vsub.f32 1.5, %v1506
        %v1508 = vmul.f32 %v1503, %v1507
        %vm1509 = vweird.f32 %v1451
        %vm1510 = vweird.f32 %v1503
        %vm1511 = vmor %vm1509, %vm1510
        %v1512 = vsel %vm1511, %v1503, %v1508
        %v1513 = vrsqrt.pop %v1452
        %v1514 = vmul.f32 %v1513, %v1452
        %v1515 = vmul.f32 %v1514, %v1513
        %v1516 = vmul.f32 0.5, %v1515
        %v1517 = vsub.f32 1.5, %v1516
        %v1518 = vmul.f32 %v1513, %v1517
        %vm1519 = vweird.f32 %v1452
        %vm1520 = vweird.f32 %v1513
        %vm1521 = vmor %vm1519, %vm1520
        %v1522 = vsel %vm1521, %v1513, %v1518
        %v1523 = vrsqrt.pop %v1453
        %v1524 = vmul.f32 %v1523, %v1453
        %v1525 = vmul.f32 %v1524, %v1523
        %v1526 = vmul.f32 0.5, %v1525
        %v1527 = vsub.f32 1.5, %v1526
        %v1528 = vmul.f32 %v1523, %v1527
        %vm1529 = vweird.f32 %v1453
        %vm1530 = vweird.f32 %v1523
        %vm1531 = vmor %vm1529, %vm1530
        %v1532 = vsel %vm1531, %v1523, %v1528
        %v1533 = vrsqrt.pop %v1454
        %v1534 = vmul.f32 %v1533, %v1454
        %v1535 = vmul.f32 %v1534, %v1533
        %v1536 = vmul.f32 0.5, %v1535
        %v1537 = vsub.f32 1.5, %v1536
        %v1538 = vmul.f32 %v1533, %v1537
        %vm1539 = vweird.f32 %v1454
        %vm1540 = vweird.f32 %v1533
        %vm1541 = vmor %vm1539, %vm1540
        %v1542 = vsel %vm1541, %v1533, %v1538
        %v1543 = vrsqrt.pop %v1455
        %v1544 = vmul.f32 %v1543, %v1455
        %v1545 = vmul.f32 %v1544, %v1543
        %v1546 = vmul.f32 0.5, %v1545
        %v1547 = vsub.f32 1.5, %v1546
        %v1548 = vmul.f32 %v1543, %v1547
        %vm1549 = vweird.f32 %v1455
        %vm1550 = vweird.f32 %v1543
        %vm1551 = vmor %vm1549, %vm1550
        %v1552 = vsel %vm1551, %v1543, %v1548
        %v1553 = vrsqrt.pop %v1456
        %v1554 = vmul.f32 %v1553, %v1456
        %v1555 = vmul.f32 %v1554, %v1553
        %v1556 = vmul.f32 0.5, %v1555
        %v1557 = vsub.f32 1.5, %v1556
        %v1558 = vmul.f32 %v1553, %v1557
        %vm1559 = vweird.f32 %v1456
        %vm1560 = vweird.f32 %v1553
        %vm1561 = vmor %vm1559, %vm1560
        %v1562 = vsel %vm1561, %v1553, %v1558
        %v1563 = vrsqrt.pop %v1457
        %v1564 = vmul.f32 %v1563, %v1457
        %v1565 = vmul.f32 %v1564, %v1563
        %v1566 = vmul.f32 0.5, %v1565
        %v1567 = vsub.f32 1.5, %v1566
        %v1568 = vmul.f32 %v1563, %v1567
        %vm1569 = vweird.f32 %v1457
        %vm1570 = vweird.f32 %v1563
        %vm1571 = vmor %vm1569, %vm1570
        %v1572 = vsel %vm1571, %v1563, %v1568
        %v1573 = vrsqrt.pop %v1458
        %v1574 = vmul.f32 %v1573, %v1458
        %v1575 = vmul.f32 %v1574, %v1573
        %v1576 = vmul.f32 0.5, %v1575
        %v1577 = vsub.f32 1.5, %v1576
        %v1578 = vmul.f32 %v1573, %v1577
        %vm1579 = vweird.f32 %v1458
        %vm1580 = vweird.f32 %v1573
        %vm1581 = vmor %vm1579, %vm1580
        %v1582 = vsel %vm1581, %v1573, %v1578
        %v1583 = vrsqrt.pop %v1459
        %v1584 = vmul.f32 %v1583, %v1459
        %v1585 = vmul.f32 %v1584, %v1583
        %v1586 = vmul.f32 0.5, %v1585
        %v1587 = vsub.f32 1.5, %v1586
        %v1588 = vmul.f32 %v1583, %v1587
        %vm1589 = vweird.f32 %v1459
        %vm1590 = vweird.f32 %v1583
        %vm1591 = vmor %vm1589, %vm1590
        %v1592 = vsel %vm1591, %v1583, %v1588
        %v1593 = vrsqrt.pop %v1460
        %v1594 = vmul.f32 %v1593, %v1460
        %v1595 = vmul.f32 %v1594, %v1593
        %v1596 = vmul.f32 0.5, %v1595
        %v1597 = vsub.f32 1.5, %v1596
        %v1598 = vmul.f32 %v1593, %v1597
        %vm1599 = vweird.f32 %v1460
        %vm1600 = vweird.f32 %v1593
        %vm1601 = vmor %vm1599, %vm1600
        %v1602 = vsel %vm1601, %v1593, %v1598
        %v1603 = vrsqrt.pop %v1461
        %v1604 = vmul.f32 %v1603, %v1461
        %v1605 = vmul.f32 %v1604, %v1603
        %v1606 = vmul.f32 0.5, %v1605
        %v1607 = vsub.f32 1.5, %v1606
        %v1608 = vmul.f32 %v1603, %v1607
        %vm1609 = vweird.f32 %v1461
        %vm1610 = vweird.f32 %v1603
        %vm1611 = vmor %vm1609, %vm1610
        %v1612 = vsel %vm1611, %v1603, %v1608
        %v1613 = vrsqrt.pop %v1462
        %v1614 = vmul.f32 %v1613, %v1462
        %v1615 = vmul.f32 %v1614, %v1613
        %v1616 = vmul.f32 0.5, %v1615
        %v1617 = vsub.f32 1.5, %v1616
        %v1618 = vmul.f32 %v1613, %v1617
        %vm1619 = vweird.f32 %v1462
        %vm1620 = vweird.f32 %v1613
        %vm1621 = vmor %vm1619, %vm1620
        %v1622 = vsel %vm1621, %v1613, %v1618
        %v1623 = vmul.f32 %v1367, %v1472
        %v1624 = vmul.f32 %v1368, %v1482
        %v1625 = vmul.f32 %v1369, %v1492
        %v1626 = vmul.f32 %v1370, %v1502
        %v1627 = vmul.f32 %v1371, %v1512
        %v1628 = vmul.f32 %v1372, %v1522
        %v1629 = vmul.f32 %v1373, %v1532
        %v1630 = vmul.f32 %v1374, %v1542
        %v1631 = vmul.f32 %v1375, %v1552
        %v1632 = vmul.f32 %v1376, %v1562
        %v1633 = vmul.f32 %v1377, %v1572
        %v1634 = vmul.f32 %v1378, %v1582
        %v1635 = vmul.f32 %v1379, %v1592
        %v1636 = vmul.f32 %v1380, %v1602
        %v1637 = vmul.f32 %v1381, %v1612
        %v1638 = vmul.f32 %v1382, %v1622
        %v1639 = vld [vmem:[%s363 + $0x1] sm:$0x1]
        %v1640 = vperm.slane %v1639, 0
        %v1641 = vmul.f32 %v1623, %v1640
        %v1642 = vmul.f32 %v1624, %v1640
        %v1643 = vmul.f32 %v1625, %v1640
        %v1644 = vmul.f32 %v1626, %v1640
        %v1645 = vmul.f32 %v1627, %v1640
        %v1646 = vmul.f32 %v1628, %v1640
        %v1647 = vmul.f32 %v1629, %v1640
        %v1648 = vmul.f32 %v1630, %v1640
        %v1649 = vmul.f32 %v1631, %v1640
        %v1650 = vmul.f32 %v1632, %v1640
        %v1651 = vmul.f32 %v1633, %v1640
        %v1652 = vmul.f32 %v1634, %v1640
        %v1653 = vmul.f32 %v1635, %v1640
        %v1654 = vmul.f32 %v1636, %v1640
        %v1655 = vmul.f32 %v1637, %v1640
        %v1656 = vmul.f32 %v1638, %v1640
        %v1657 = vld [vmem:[%s363 + $0x2] sm:$0x1]
        %v1658 = vperm.slane %v1657, 0
        %v1659 = vadd.f32 %v1641, %v1658
        %v1660 = vadd.f32 %v1642, %v1658
        %v1661 = vadd.f32 %v1643, %v1658
        %v1662 = vadd.f32 %v1644, %v1658
        %v1663 = vadd.f32 %v1645, %v1658
        %v1664 = vadd.f32 %v1646, %v1658
        %v1665 = vadd.f32 %v1647, %v1658
        %v1666 = vadd.f32 %v1648, %v1658
        %v1667 = vadd.f32 %v1649, %v1658
        %v1668 = vadd.f32 %v1650, %v1658
        %v1669 = vadd.f32 %v1651, %v1658
        %v1670 = vadd.f32 %v1652, %v1658
        %v1671 = vadd.f32 %v1653, %v1658
        %v1672 = vadd.f32 %v1654, %v1658
        %v1673 = vadd.f32 %v1655, %v1658
        %v1674 = vadd.f32 %v1656, %v1658
        %v1675 = vadd.f32 %v1659, %v458
        %v1676 = vadd.f32 %v1660, %v459
        %v1677 = vadd.f32 %v1661, %v460
        %v1678 = vadd.f32 %v1662, %v461
        %v1679 = vadd.f32 %v1663, %v462
        %v1680 = vadd.f32 %v1664, %v463
        %v1681 = vadd.f32 %v1665, %v464
        %v1682 = vadd.f32 %v1666, %v465
        %v1683 = vadd.f32 %v1667, %v466
        %v1684 = vadd.f32 %v1668, %v467
        %v1685 = vadd.f32 %v1669, %v468
        %v1686 = vadd.f32 %v1670, %v469
        %v1687 = vadd.f32 %v1671, %v470
        %v1688 = vadd.f32 %v1672, %v471
        %v1689 = vadd.f32 %v1673, %v472
        %v1690 = vadd.f32 %v1674, %v473
        %1691 = vst [vmem:[#allocation2] sm:$0xff] %v1675
        %1692 = vst [vmem:[#allocation2 + $0x8] sm:$0xff] %v1676
        %1693 = vst [vmem:[#allocation2 + $0x10] sm:$0xff] %v1677
        %1694 = vst [vmem:[#allocation2 + $0x18] sm:$0xff] %v1678
        %1695 = vst [vmem:[#allocation2 + $0x20] sm:$0xff] %v1679
        %1696 = vst [vmem:[#allocation2 + $0x28] sm:$0xff] %v1680
        %1697 = vst [vmem:[#allocation2 + $0x30] sm:$0xff] %v1681
        %1698 = vst [vmem:[#allocation2 + $0x38] sm:$0xff] %v1682
        %1699 = vst [vmem:[#allocation2 + $0x40] sm:$0xff] %v1683
        %1700 = vst [vmem:[#allocation2 + $0x48] sm:$0xff] %v1684
        %1701 = vst [vmem:[#allocation2 + $0x50] sm:$0xff] %v1685
        %1702 = vst [vmem:[#allocation2 + $0x58] sm:$0xff] %v1686
        %1703 = vst [vmem:[#allocation2 + $0x60] sm:$0xff] %v1687
        %1704 = vst [vmem:[#allocation2 + $0x68] sm:$0xff] %v1688
        %1705 = vst [vmem:[#allocation2 + $0x70] sm:$0xff] %v1689
        %1706 = vst [vmem:[#allocation2 + $0x78] sm:$0xff] %v1690
        %v1707 = vpack.c.bf16 %v1676, %v1675
        %v1708 = vpack.c.bf16 %v1678, %v1677
        %v1709 = vpack.c.bf16 %v1680, %v1679
        %v1710 = vpack.c.bf16 %v1682, %v1681
        %v1711 = vpack.c.bf16 %v1684, %v1683
        %v1712 = vpack.c.bf16 %v1686, %v1685
        %v1713 = vpack.c.bf16 %v1688, %v1687
        %v1714 = vpack.c.bf16 %v1690, %v1689
        %1715 = vxpose.xlu0.c.b16.start [1/8] %v882, 128
        %1716 = vxpose.xlu0.c.b16.cont [2/8] %v883, 128
        %1717 = vxpose.xlu0.c.b16.cont [3/8] %v884, 128
        %1718 = vxpose.xlu0.c.b16.cont [4/8] %v885, 128
        %1719 = vxpose.xlu0.c.b16.cont [5/8] %v886, 128
        %1720 = vxpose.xlu0.c.b16.cont [6/8] %v887, 128
        %1721 = vxpose.xlu0.c.b16.cont [7/8] %v888, 128
        %1722 = vxpose.xlu0.c.b16.end [8/8] %v889, 128
        %v1723 = vpop.trf.xlu0
        %v1724 = vpop.trf.xlu0
        %v1725 = vpop.trf.xlu0
        %v1726 = vpop.trf.xlu0
        %v1727 = vpop.trf.xlu0
        %v1728 = vpop.trf.xlu0
        %v1729 = vpop.trf.xlu0
        %v1730 = vpop.trf.xlu0
        %1731 = vmatpush.bf16.msra.mxu0 %v1714
        %1732 = vmatpush.bf16.msra.mxu0 %v1713
        %1733 = vmatpush.bf16.msra.mxu0 %v1712
        %1734 = vmatpush.bf16.msra.mxu0 %v1711
        %1735 = vmatpush.bf16.msra.mxu0 %v1710
        %1736 = vmatpush.bf16.msra.mxu0 %v1709
        %1737 = vmatpush.bf16.msra.mxu0 %v1708
        %1738 = vmatpush.bf16.msra.mxu0 %v1707
        %1739 = vmatmul.bf16.gmra.mxu0 %v1723
        %v1740 = vpop.f32.mrf.mxu0
        %v1741 = vadd.f32 0.0, %v1740
        %v1742 = vpop.f32.mrf.mxu0
        %v1743 = vadd.f32 0.0, %v1742
        %1744 = vmatmul.bf16.gmra.mxu0 %v1724
        %v1745 = vpop.f32.mrf.mxu0
        %v1746 = vadd.f32 0.0, %v1745
        %v1747 = vpop.f32.mrf.mxu0
        %v1748 = vadd.f32 0.0, %v1747
        %1749 = vmatmul.bf16.gmra.mxu0 %v1725
        %v1750 = vpop.f32.mrf.mxu0
        %v1751 = vadd.f32 0.0, %v1750
        %v1752 = vpop.f32.mrf.mxu0
        %v1753 = vadd.f32 0.0, %v1752
        %1754 = vmatmul.bf16.gmra.mxu0 %v1726
        %v1755 = vpop.f32.mrf.mxu0
        %v1756 = vadd.f32 0.0, %v1755
        %v1757 = vpop.f32.mrf.mxu0
        %v1758 = vadd.f32 0.0, %v1757
        %1759 = vmatmul.bf16.gmra.mxu0 %v1727
        %v1760 = vpop.f32.mrf.mxu0
        %v1761 = vadd.f32 0.0, %v1760
        %v1762 = vpop.f32.mrf.mxu0
        %v1763 = vadd.f32 0.0, %v1762
        %1764 = vmatmul.bf16.gmra.mxu0 %v1728
        %v1765 = vpop.f32.mrf.mxu0
        %v1766 = vadd.f32 0.0, %v1765
        %v1767 = vpop.f32.mrf.mxu0
        %v1768 = vadd.f32 0.0, %v1767
        %1769 = vmatmul.bf16.gmra.mxu0 %v1729
        %v1770 = vpop.f32.mrf.mxu0
        %v1771 = vadd.f32 0.0, %v1770
        %v1772 = vpop.f32.mrf.mxu0
        %v1773 = vadd.f32 0.0, %v1772
        %1774 = vmatmul.bf16.gmra.mxu0 %v1730
        %v1775 = vpop.f32.mrf.mxu0
        %v1776 = vadd.f32 0.0, %v1775
        %v1777 = vpop.f32.mrf.mxu0
        %v1778 = vadd.f32 0.0, %v1777
        %1779 = vdwg.mxu0
        %v1780 = vpack.c.bf16 %v1743, %v1741
        %v1781 = vpack.c.bf16 %v1748, %v1746
        %v1782 = vpack.c.bf16 %v1753, %v1751
        %v1783 = vpack.c.bf16 %v1758, %v1756
        %v1784 = vpack.c.bf16 %v1763, %v1761
        %v1785 = vpack.c.bf16 %v1768, %v1766
        %v1786 = vpack.c.bf16 %v1773, %v1771
        %v1787 = vpack.c.bf16 %v1778, %v1776
        %v1804 = vunpack.c.l.b16 %v607
        %v1805 = vunpack.c.l.b16 %v608
        %v1806 = vunpack.c.l.b16 %v609
        %v1807 = vunpack.c.l.b16 %v610
        %v1808 = vunpack.c.l.b16 %v611
        %v1809 = vunpack.c.l.b16 %v612
        %v1810 = vunpack.c.l.b16 %v613
        %v1811 = vunpack.c.l.b16 %v614
        %v1812 = vunpack.c.l.b16 %v615
        %v1813 = vunpack.c.l.b16 %v616
        %v1814 = vunpack.c.l.b16 %v617
        %v1815 = vunpack.c.l.b16 %v618
        %v1816 = vunpack.c.l.b16 %v619
        %v1817 = vunpack.c.l.b16 %v620
        %v1818 = vunpack.c.l.b16 %v621
        %v1819 = vunpack.c.l.b16 %v622
        %v1820 = vpack.c.b16 %v1805, %v1804
        %v1821 = vpack.c.b16 %v1807, %v1806
        %v1822 = vpack.c.b16 %v1809, %v1808
        %v1823 = vpack.c.b16 %v1811, %v1810
        %v1824 = vpack.c.b16 %v1813, %v1812
        %v1825 = vpack.c.b16 %v1815, %v1814
        %v1826 = vpack.c.b16 %v1817, %v1816
        %v1827 = vpack.c.b16 %v1819, %v1818
        %1836 = vmatpush.bf16.msra.mxu0 %v1827
        %1837 = vmatpush.bf16.msra.mxu0 %v1826
        %1838 = vmatpush.bf16.msra.mxu0 %v1825
        %1839 = vmatpush.bf16.msra.mxu0 %v1824
        %1840 = vmatpush.bf16.msra.mxu0 %v1823
        %1841 = vmatpush.bf16.msra.mxu0 %v1822
        %1842 = vmatpush.bf16.msra.mxu0 %v1821
        %1843 = vmatpush.bf16.msra.mxu0 %v1820
        %1844 = vmatmul.bf16.gmra.mxu0 %v1780
        %v1845 = vpop.f32.mrf.mxu0
        %v1846 = vadd.f32 0.0, %v1845
        %v1847 = vpop.f32.mrf.mxu0
        %v1848 = vadd.f32 0.0, %v1847
        %1849 = vmatmul.bf16.gmra.mxu0 %v1781
        %v1850 = vpop.f32.mrf.mxu0
        %v1851 = vadd.f32 0.0, %v1850
        %v1852 = vpop.f32.mrf.mxu0
        %v1853 = vadd.f32 0.0, %v1852
        %1854 = vmatmul.bf16.gmra.mxu0 %v1782
        %v1855 = vpop.f32.mrf.mxu0
        %v1856 = vadd.f32 0.0, %v1855
        %v1857 = vpop.f32.mrf.mxu0
        %v1858 = vadd.f32 0.0, %v1857
        %1859 = vmatmul.bf16.gmra.mxu0 %v1783
        %v1860 = vpop.f32.mrf.mxu0
        %v1861 = vadd.f32 0.0, %v1860
        %v1862 = vpop.f32.mrf.mxu0
        %v1863 = vadd.f32 0.0, %v1862
        %1864 = vmatmul.bf16.gmra.mxu0 %v1784
        %v1865 = vpop.f32.mrf.mxu0
        %v1866 = vadd.f32 0.0, %v1865
        %v1867 = vpop.f32.mrf.mxu0
        %v1868 = vadd.f32 0.0, %v1867
        %1869 = vmatmul.bf16.gmra.mxu0 %v1785
        %v1870 = vpop.f32.mrf.mxu0
        %v1871 = vadd.f32 0.0, %v1870
        %v1872 = vpop.f32.mrf.mxu0
        %v1873 = vadd.f32 0.0, %v1872
        %1874 = vmatmul.bf16.gmra.mxu0 %v1786
        %v1875 = vpop.f32.mrf.mxu0
        %v1876 = vadd.f32 0.0, %v1875
        %v1877 = vpop.f32.mrf.mxu0
        %v1878 = vadd.f32 0.0, %v1877
        %1879 = vmatmul.bf16.gmra.mxu0 %v1787
        %v1880 = vpop.f32.mrf.mxu0
        %v1881 = vadd.f32 0.0, %v1880
        %v1882 = vpop.f32.mrf.mxu0
        %v1883 = vadd.f32 0.0, %v1882
        %1884 = vdwg.mxu0
        %v1901 = vunpack.c.l.b16 %v590
        %v1902 = vunpack.c.l.b16 %v591
        %v1903 = vunpack.c.l.b16 %v592
        %v1904 = vunpack.c.l.b16 %v593
        %v1905 = vunpack.c.l.b16 %v594
        %v1906 = vunpack.c.l.b16 %v595
        %v1907 = vunpack.c.l.b16 %v596
        %v1908 = vunpack.c.l.b16 %v597
        %v1909 = vunpack.c.l.b16 %v598
        %v1910 = vunpack.c.l.b16 %v599
        %v1911 = vunpack.c.l.b16 %v600
        %v1912 = vunpack.c.l.b16 %v601
        %v1913 = vunpack.c.l.b16 %v602
        %v1914 = vunpack.c.l.b16 %v603
        %v1915 = vunpack.c.l.b16 %v604
        %v1916 = vunpack.c.l.b16 %v605
        %v1917 = vpack.c.b16 %v1902, %v1901
        %v1918 = vpack.c.b16 %v1904, %v1903
        %v1919 = vpack.c.b16 %v1906, %v1905
        %v1920 = vpack.c.b16 %v1908, %v1907
        %v1921 = vpack.c.b16 %v1910, %v1909
        %v1922 = vpack.c.b16 %v1912, %v1911
        %v1923 = vpack.c.b16 %v1914, %v1913
        %v1924 = vpack.c.b16 %v1916, %v1915
        %1933 = vmatpush.bf16.msra.mxu0 %v1924
        %1934 = vmatpush.bf16.msra.mxu0 %v1923
        %1935 = vmatpush.bf16.msra.mxu0 %v1922
        %1936 = vmatpush.bf16.msra.mxu0 %v1921
        %1937 = vmatpush.bf16.msra.mxu0 %v1920
        %1938 = vmatpush.bf16.msra.mxu0 %v1919
        %1939 = vmatpush.bf16.msra.mxu0 %v1918
        %1940 = vmatpush.bf16.msra.mxu0 %v1917
        %1941 = vmatmul.bf16.gmra.mxu0 %v474
        %v1942 = vpop.f32.mrf.mxu0
        %v1943 = vadd.f32 %v1846, %v1942
        %v1944 = vpop.f32.mrf.mxu0
        %v1945 = vadd.f32 %v1848, %v1944
        %1946 = vmatmul.bf16.gmra.mxu0 %v475
        %v1947 = vpop.f32.mrf.mxu0
        %v1948 = vadd.f32 %v1851, %v1947
        %v1949 = vpop.f32.mrf.mxu0
        %v1950 = vadd.f32 %v1853, %v1949
        %1951 = vmatmul.bf16.gmra.mxu0 %v476
        %v1952 = vpop.f32.mrf.mxu0
        %v1953 = vadd.f32 %v1856, %v1952
        %v1954 = vpop.f32.mrf.mxu0
        %v1955 = vadd.f32 %v1858, %v1954
        %1956 = vmatmul.bf16.gmra.mxu0 %v477
        %v1957 = vpop.f32.mrf.mxu0
        %v1958 = vadd.f32 %v1861, %v1957
        %v1959 = vpop.f32.mrf.mxu0
        %v1960 = vadd.f32 %v1863, %v1959
        %1961 = vmatmul.bf16.gmra.mxu0 %v478
        %v1962 = vpop.f32.mrf.mxu0
        %v1963 = vadd.f32 %v1866, %v1962
        %v1964 = vpop.f32.mrf.mxu0
        %v1965 = vadd.f32 %v1868, %v1964
        %1966 = vmatmul.bf16.gmra.mxu0 %v479
        %v1967 = vpop.f32.mrf.mxu0
        %v1968 = vadd.f32 %v1871, %v1967
        %v1969 = vpop.f32.mrf.mxu0
        %v1970 = vadd.f32 %v1873, %v1969
        %1971 = vmatmul.bf16.gmra.mxu0 %v480
        %v1972 = vpop.f32.mrf.mxu0
        %v1973 = vadd.f32 %v1876, %v1972
        %v1974 = vpop.f32.mrf.mxu0
        %v1975 = vadd.f32 %v1878, %v1974
        %1976 = vmatmul.bf16.gmra.mxu0 %v481
        %v1977 = vpop.f32.mrf.mxu0
        %v1978 = vadd.f32 %v1881, %v1977
        %v1979 = vpop.f32.mrf.mxu0
        %v1980 = vadd.f32 %v1883, %v1979
        %1981 = vdwg.mxu0
        %v1982 = vld [vmem:[%s373] sm:$0xff]
        %v1983 = vld [vmem:[%s373 + $0x8] sm:$0xff]
        %v1984 = vld [vmem:[%s373 + $0x10] sm:$0xff]
        %v1985 = vld [vmem:[%s373 + $0x18] sm:$0xff]
        %v1986 = vld [vmem:[%s373 + $0x20] sm:$0xff]
        %v1987 = vld [vmem:[%s373 + $0x28] sm:$0xff]
        %v1988 = vld [vmem:[%s373 + $0x30] sm:$0xff]
        %v1989 = vld [vmem:[%s373 + $0x38] sm:$0xff]
        %v1990 = vld [vmem:[%s373 + $0x40] sm:$0xff]
        %v1991 = vld [vmem:[%s373 + $0x48] sm:$0xff]
        %v1992 = vld [vmem:[%s373 + $0x50] sm:$0xff]
        %v1993 = vld [vmem:[%s373 + $0x58] sm:$0xff]
        %v1994 = vld [vmem:[%s373 + $0x60] sm:$0xff]
        %v1995 = vld [vmem:[%s373 + $0x68] sm:$0xff]
        %v1996 = vld [vmem:[%s373 + $0x70] sm:$0xff]
        %v1997 = vld [vmem:[%s373 + $0x78] sm:$0xff]
        %v1998 = vadd.f32 %v1943, %v1982
        %v1999 = vadd.f32 %v1945, %v1983
        %v2000 = vadd.f32 %v1948, %v1984
        %v2001 = vadd.f32 %v1950, %v1985
        %v2002 = vadd.f32 %v1953, %v1986
        %v2003 = vadd.f32 %v1955, %v1987
        %v2004 = vadd.f32 %v1958, %v1988
        %v2005 = vadd.f32 %v1960, %v1989
        %v2006 = vadd.f32 %v1963, %v1990
        %v2007 = vadd.f32 %v1965, %v1991
        %v2008 = vadd.f32 %v1968, %v1992
        %v2009 = vadd.f32 %v1970, %v1993
        %v2010 = vadd.f32 %v1973, %v1994
        %v2011 = vadd.f32 %v1975, %v1995
        %v2012 = vadd.f32 %v1978, %v1996
        %v2013 = vadd.f32 %v1980, %v1997
        %v2014 = vmax.f32 %v1998, 0.0
        %v2015 = vmax.f32 %v1999, 0.0
        %v2016 = vmax.f32 %v2000, 0.0
        %v2017 = vmax.f32 %v2001, 0.0
        %v2018 = vmax.f32 %v2002, 0.0
        %v2019 = vmax.f32 %v2003, 0.0
        %v2020 = vmax.f32 %v2004, 0.0
        %v2021 = vmax.f32 %v2005, 0.0
        %v2022 = vmax.f32 %v2006, 0.0
        %v2023 = vmax.f32 %v2007, 0.0
        %v2024 = vmax.f32 %v2008, 0.0
        %v2025 = vmax.f32 %v2009, 0.0
        %v2026 = vmax.f32 %v2010, 0.0
        %v2027 = vmax.f32 %v2011, 0.0
        %v2028 = vmax.f32 %v2012, 0.0
        %v2029 = vmax.f32 %v2013, 0.0
        %v2030 = vpack.c.bf16 %v2015, %v2014
        %v2031 = vpack.c.bf16 %v2017, %v2016
        %v2032 = vpack.c.bf16 %v2019, %v2018
        %v2033 = vpack.c.bf16 %v2021, %v2020
        %v2034 = vpack.c.bf16 %v2023, %v2022
        %v2035 = vpack.c.bf16 %v2025, %v2024
        %v2036 = vpack.c.bf16 %v2027, %v2026
        %v2037 = vpack.c.bf16 %v2029, %v2028
        %v2038 = vld [vmem:[%s363 + $0x3] sm:$0x1]
        %v2039 = vperm.slane %v2038, 0
        %v2056 = vunpack.c.l.b16 %v624
        %v2057 = vunpack.c.l.b16 %v625
        %v2058 = vunpack.c.l.b16 %v626
        %v2059 = vunpack.c.l.b16 %v627
        %v2060 = vunpack.c.l.b16 %v628
        %v2061 = vunpack.c.l.b16 %v629
        %v2062 = vunpack.c.l.b16 %v630
        %v2063 = vunpack.c.l.b16 %v631
        %v2064 = vunpack.c.l.b16 %v632
        %v2065 = vunpack.c.l.b16 %v633
        %v2066 = vunpack.c.l.b16 %v634
        %v2067 = vunpack.c.l.b16 %v635
        %v2068 = vunpack.c.l.b16 %v636
        %v2069 = vunpack.c.l.b16 %v637
        %v2070 = vunpack.c.l.b16 %v638
        %v2071 = vunpack.c.l.b16 %v639
        %v2072 = vpack.c.b16 %v2057, %v2056
        %v2073 = vpack.c.b16 %v2059, %v2058
        %v2074 = vpack.c.b16 %v2061, %v2060
        %v2075 = vpack.c.b16 %v2063, %v2062
        %v2076 = vpack.c.b16 %v2065, %v2064
        %v2077 = vpack.c.b16 %v2067, %v2066
        %v2078 = vpack.c.b16 %v2069, %v2068
        %v2079 = vpack.c.b16 %v2071, %v2070
        %2088 = vmatpush.bf16.msra.mxu0 %v2079
        %2089 = vmatpush.bf16.msra.mxu0 %v2078
        %2090 = vmatpush.bf16.msra.mxu0 %v2077
        %2091 = vmatpush.bf16.msra.mxu0 %v2076
        %2092 = vmatpush.bf16.msra.mxu0 %v2075
        %2093 = vmatpush.bf16.msra.mxu0 %v2074
        %2094 = vmatpush.bf16.msra.mxu0 %v2073
        %2095 = vmatpush.bf16.msra.mxu0 %v2072
        %2096 = vmatmul.bf16.gmra.mxu0 %v2030
        %v2097 = vpop.f32.mrf.mxu0
        %v2098 = vadd.f32 %v2039, %v2097
        %v2099 = vpop.f32.mrf.mxu0
        %v2100 = vadd.f32 %v2039, %v2099
        %2101 = vmatmul.bf16.gmra.mxu0 %v2031
        %v2102 = vpop.f32.mrf.mxu0
        %v2103 = vadd.f32 %v2039, %v2102
        %v2104 = vpop.f32.mrf.mxu0
        %v2105 = vadd.f32 %v2039, %v2104
        %2106 = vmatmul.bf16.gmra.mxu0 %v2032
        %v2107 = vpop.f32.mrf.mxu0
        %v2108 = vadd.f32 %v2039, %v2107
        %v2109 = vpop.f32.mrf.mxu0
        %v2110 = vadd.f32 %v2039, %v2109
        %2111 = vmatmul.bf16.gmra.mxu0 %v2033
        %v2112 = vpop.f32.mrf.mxu0
        %v2113 = vadd.f32 %v2039, %v2112
        %v2114 = vpop.f32.mrf.mxu0
        %v2115 = vadd.f32 %v2039, %v2114
        %2116 = vmatmul.bf16.gmra.mxu0 %v2034
        %v2117 = vpop.f32.mrf.mxu0
        %v2118 = vadd.f32 %v2039, %v2117
        %v2119 = vpop.f32.mrf.mxu0
        %v2120 = vadd.f32 %v2039, %v2119
        %2121 = vmatmul.bf16.gmra.mxu0 %v2035
        %v2122 = vpop.f32.mrf.mxu0
        %v2123 = vadd.f32 %v2039, %v2122
        %v2124 = vpop.f32.mrf.mxu0
        %v2125 = vadd.f32 %v2039, %v2124
        %2126 = vmatmul.bf16.gmra.mxu0 %v2036
        %v2127 = vpop.f32.mrf.mxu0
        %v2128 = vadd.f32 %v2039, %v2127
        %v2129 = vpop.f32.mrf.mxu0
        %v2130 = vadd.f32 %v2039, %v2129
        %2131 = vmatmul.bf16.gmra.mxu0 %v2037
        %v2132 = vpop.f32.mrf.mxu0
        %v2133 = vadd.f32 %v2039, %v2132
        %v2134 = vpop.f32.mrf.mxu0
        %v2135 = vadd.f32 %v2039, %v2134
        %2136 = vdwg.mxu0
        %2137 = vadd.xlane.f32.xlu0 %v2098
        %v2138 = vpop.xlane.xlu0 %2137
        %2139 = vadd.xlane.f32.xlu0 %v2100
        %v2140 = vpop.xlane.xlu0 %2139
        %2141 = vadd.xlane.f32.xlu0 %v2103
        %v2142 = vpop.xlane.xlu0 %2141
        %2143 = vadd.xlane.f32.xlu0 %v2105
        %v2144 = vpop.xlane.xlu0 %2143
        %2145 = vadd.xlane.f32.xlu0 %v2108
        %v2146 = vpop.xlane.xlu0 %2145
        %2147 = vadd.xlane.f32.xlu0 %v2110
        %v2148 = vpop.xlane.xlu0 %2147
        %2149 = vadd.xlane.f32.xlu0 %v2113
        %v2150 = vpop.xlane.xlu0 %2149
        %2151 = vadd.xlane.f32.xlu0 %v2115
        %v2152 = vpop.xlane.xlu0 %2151
        %2153 = vadd.xlane.f32.xlu0 %v2118
        %v2154 = vpop.xlane.xlu0 %2153
        %2155 = vadd.xlane.f32.xlu0 %v2120
        %v2156 = vpop.xlane.xlu0 %2155
        %2157 = vadd.xlane.f32.xlu0 %v2123
        %v2158 = vpop.xlane.xlu0 %2157
        %2159 = vadd.xlane.f32.xlu0 %v2125
        %v2160 = vpop.xlane.xlu0 %2159
        %2161 = vadd.xlane.f32.xlu0 %v2128
        %v2162 = vpop.xlane.xlu0 %2161
        %2163 = vadd.xlane.f32.xlu0 %v2130
        %v2164 = vpop.xlane.xlu0 %2163
        %2165 = vadd.xlane.f32.xlu0 %v2133
        %v2166 = vpop.xlane.xlu0 %2165
        %2167 = vadd.xlane.f32.xlu0 %v2135
        %v2168 = vpop.xlane.xlu0 %2167
        %v2169 = vmul.f32 %v2138, %v1350
        %v2170 = vmul.f32 %v2140, %v1350
        %v2171 = vmul.f32 %v2142, %v1350
        %v2172 = vmul.f32 %v2144, %v1350
        %v2173 = vmul.f32 %v2146, %v1350
        %v2174 = vmul.f32 %v2148, %v1350
        %v2175 = vmul.f32 %v2150, %v1350
        %v2176 = vmul.f32 %v2152, %v1350
        %v2177 = vmul.f32 %v2154, %v1350
        %v2178 = vmul.f32 %v2156, %v1350
        %v2179 = vmul.f32 %v2158, %v1350
        %v2180 = vmul.f32 %v2160, %v1350
        %v2181 = vmul.f32 %v2162, %v1350
        %v2182 = vmul.f32 %v2164, %v1350
        %v2183 = vmul.f32 %v2166, %v1350
        %v2184 = vmul.f32 %v2168, %v1350
        %v2185 = vsub.f32 %v2098, %v2169
        %v2186 = vsub.f32 %v2100, %v2170
        %v2187 = vsub.f32 %v2103, %v2171
        %v2188 = vsub.f32 %v2105, %v2172
        %v2189 = vsub.f32 %v2108, %v2173
        %v2190 = vsub.f32 %v2110, %v2174
        %v2191 = vsub.f32 %v2113, %v2175
        %v2192 = vsub.f32 %v2115, %v2176
        %v2193 = vsub.f32 %v2118, %v2177
        %v2194 = vsub.f32 %v2120, %v2178
        %v2195 = vsub.f32 %v2123, %v2179
        %v2196 = vsub.f32 %v2125, %v2180
        %v2197 = vsub.f32 %v2128, %v2181
        %v2198 = vsub.f32 %v2130, %v2182
        %v2199 = vsub.f32 %v2133, %v2183
        %v2200 = vsub.f32 %v2135, %v2184
        %v2201 = vmul.f32 %v2185, %v2185
        %v2202 = vmul.f32 %v2186, %v2186
        %v2203 = vmul.f32 %v2187, %v2187
        %v2204 = vmul.f32 %v2188, %v2188
        %v2205 = vmul.f32 %v2189, %v2189
        %v2206 = vmul.f32 %v2190, %v2190
        %v2207 = vmul.f32 %v2191, %v2191
        %v2208 = vmul.f32 %v2192, %v2192
        %v2209 = vmul.f32 %v2193, %v2193
        %v2210 = vmul.f32 %v2194, %v2194
        %v2211 = vmul.f32 %v2195, %v2195
        %v2212 = vmul.f32 %v2196, %v2196
        %v2213 = vmul.f32 %v2197, %v2197
        %v2214 = vmul.f32 %v2198, %v2198
        %v2215 = vmul.f32 %v2199, %v2199
        %v2216 = vmul.f32 %v2200, %v2200
        %2217 = vadd.xlane.f32.xlu0 %v2201
        %v2218 = vpop.xlane.xlu0 %2217
        %2219 = vadd.xlane.f32.xlu0 %v2202
        %v2220 = vpop.xlane.xlu0 %2219
        %2221 = vadd.xlane.f32.xlu0 %v2203
        %v2222 = vpop.xlane.xlu0 %2221
        %2223 = vadd.xlane.f32.xlu0 %v2204
        %v2224 = vpop.xlane.xlu0 %2223
        %2225 = vadd.xlane.f32.xlu0 %v2205
        %v2226 = vpop.xlane.xlu0 %2225
        %2227 = vadd.xlane.f32.xlu0 %v2206
        %v2228 = vpop.xlane.xlu0 %2227
        %2229 = vadd.xlane.f32.xlu0 %v2207
        %v2230 = vpop.xlane.xlu0 %2229
        %2231 = vadd.xlane.f32.xlu0 %v2208
        %v2232 = vpop.xlane.xlu0 %2231
        %2233 = vadd.xlane.f32.xlu0 %v2209
        %v2234 = vpop.xlane.xlu0 %2233
        %2235 = vadd.xlane.f32.xlu0 %v2210
        %v2236 = vpop.xlane.xlu0 %2235
        %2237 = vadd.xlane.f32.xlu0 %v2211
        %v2238 = vpop.xlane.xlu0 %2237
        %2239 = vadd.xlane.f32.xlu0 %v2212
        %v2240 = vpop.xlane.xlu0 %2239
        %2241 = vadd.xlane.f32.xlu0 %v2213
        %v2242 = vpop.xlane.xlu0 %2241
        %2243 = vadd.xlane.f32.xlu0 %v2214
        %v2244 = vpop.xlane.xlu0 %2243
        %2245 = vadd.xlane.f32.xlu0 %v2215
        %v2246 = vpop.xlane.xlu0 %2245
        %2247 = vadd.xlane.f32.xlu0 %v2216
        %v2248 = vpop.xlane.xlu0 %2247
        %v2249 = vmul.f32 %v2218, %v1350
        %v2250 = vmul.f32 %v2220, %v1350
        %v2251 = vmul.f32 %v2222, %v1350
        %v2252 = vmul.f32 %v2224, %v1350
        %v2253 = vmul.f32 %v2226, %v1350
        %v2254 = vmul.f32 %v2228, %v1350
        %v2255 = vmul.f32 %v2230, %v1350
        %v2256 = vmul.f32 %v2232, %v1350
        %v2257 = vmul.f32 %v2234, %v1350
        %v2258 = vmul.f32 %v2236, %v1350
        %v2259 = vmul.f32 %v2238, %v1350
        %v2260 = vmul.f32 %v2240, %v1350
        %v2261 = vmul.f32 %v2242, %v1350
        %v2262 = vmul.f32 %v2244, %v1350
        %v2263 = vmul.f32 %v2246, %v1350
        %v2264 = vmul.f32 %v2248, %v1350
        %v2265 = vadd.f32 %v2249, 1e-05
        %v2266 = vadd.f32 %v2250, 1e-05
        %v2267 = vadd.f32 %v2251, 1e-05
        %v2268 = vadd.f32 %v2252, 1e-05
        %v2269 = vadd.f32 %v2253, 1e-05
        %v2270 = vadd.f32 %v2254, 1e-05
        %v2271 = vadd.f32 %v2255, 1e-05
        %v2272 = vadd.f32 %v2256, 1e-05
        %v2273 = vadd.f32 %v2257, 1e-05
        %v2274 = vadd.f32 %v2258, 1e-05
        %v2275 = vadd.f32 %v2259, 1e-05
        %v2276 = vadd.f32 %v2260, 1e-05
        %v2277 = vadd.f32 %v2261, 1e-05
        %v2278 = vadd.f32 %v2262, 1e-05
        %v2279 = vadd.f32 %v2263, 1e-05
        %v2280 = vadd.f32 %v2264, 1e-05
        %v2281 = vrsqrt.pop %v2265
        %v2282 = vmul.f32 %v2281, %v2265
        %v2283 = vmul.f32 %v2282, %v2281
        %v2284 = vmul.f32 0.5, %v2283
        %v2285 = vsub.f32 1.5, %v2284
        %v2286 = vmul.f32 %v2281, %v2285
        %vm2287 = vweird.f32 %v2265
        %vm2288 = vweird.f32 %v2281
        %vm2289 = vmor %vm2287, %vm2288
        %v2290 = vsel %vm2289, %v2281, %v2286
        %v2291 = vrsqrt.pop %v2266
        %v2292 = vmul.f32 %v2291, %v2266
        %v2293 = vmul.f32 %v2292, %v2291
        %v2294 = vmul.f32 0.5, %v2293
        %v2295 = vsub.f32 1.5, %v2294
        %v2296 = vmul.f32 %v2291, %v2295
        %vm2297 = vweird.f32 %v2266
        %vm2298 = vweird.f32 %v2291
        %vm2299 = vmor %vm2297, %vm2298
        %v2300 = vsel %vm2299, %v2291, %v2296
        %v2301 = vrsqrt.pop %v2267
        %v2302 = vmul.f32 %v2301, %v2267
        %v2303 = vmul.f32 %v2302, %v2301
        %v2304 = vmul.f32 0.5, %v2303
        %v2305 = vsub.f32 1.5, %v2304
        %v2306 = vmul.f32 %v2301, %v2305
        %vm2307 = vweird.f32 %v2267
        %vm2308 = vweird.f32 %v2301
        %vm2309 = vmor %vm2307, %vm2308
        %v2310 = vsel %vm2309, %v2301, %v2306
        %v2311 = vrsqrt.pop %v2268
        %v2312 = vmul.f32 %v2311, %v2268
        %v2313 = vmul.f32 %v2312, %v2311
        %v2314 = vmul.f32 0.5, %v2313
        %v2315 = vsub.f32 1.5, %v2314
        %v2316 = vmul.f32 %v2311, %v2315
        %vm2317 = vweird.f32 %v2268
        %vm2318 = vweird.f32 %v2311
        %vm2319 = vmor %vm2317, %vm2318
        %v2320 = vsel %vm2319, %v2311, %v2316
        %v2321 = vrsqrt.pop %v2269
        %v2322 = vmul.f32 %v2321, %v2269
        %v2323 = vmul.f32 %v2322, %v2321
        %v2324 = vmul.f32 0.5, %v2323
        %v2325 = vsub.f32 1.5, %v2324
        %v2326 = vmul.f32 %v2321, %v2325
        %vm2327 = vweird.f32 %v2269
        %vm2328 = vweird.f32 %v2321
        %vm2329 = vmor %vm2327, %vm2328
        %v2330 = vsel %vm2329, %v2321, %v2326
        %v2331 = vrsqrt.pop %v2270
        %v2332 = vmul.f32 %v2331, %v2270
        %v2333 = vmul.f32 %v2332, %v2331
        %v2334 = vmul.f32 0.5, %v2333
        %v2335 = vsub.f32 1.5, %v2334
        %v2336 = vmul.f32 %v2331, %v2335
        %vm2337 = vweird.f32 %v2270
        %vm2338 = vweird.f32 %v2331
        %vm2339 = vmor %vm2337, %vm2338
        %v2340 = vsel %vm2339, %v2331, %v2336
        %v2341 = vrsqrt.pop %v2271
        %v2342 = vmul.f32 %v2341, %v2271
        %v2343 = vmul.f32 %v2342, %v2341
        %v2344 = vmul.f32 0.5, %v2343
        %v2345 = vsub.f32 1.5, %v2344
        %v2346 = vmul.f32 %v2341, %v2345
        %vm2347 = vweird.f32 %v2271
        %vm2348 = vweird.f32 %v2341
        %vm2349 = vmor %vm2347, %vm2348
        %v2350 = vsel %vm2349, %v2341, %v2346
        %v2351 = vrsqrt.pop %v2272
        %v2352 = vmul.f32 %v2351, %v2272
        %v2353 = vmul.f32 %v2352, %v2351
        %v2354 = vmul.f32 0.5, %v2353
        %v2355 = vsub.f32 1.5, %v2354
        %v2356 = vmul.f32 %v2351, %v2355
        %vm2357 = vweird.f32 %v2272
        %vm2358 = vweird.f32 %v2351
        %vm2359 = vmor %vm2357, %vm2358
        %v2360 = vsel %vm2359, %v2351, %v2356
        %v2361 = vrsqrt.pop %v2273
        %v2362 = vmul.f32 %v2361, %v2273
        %v2363 = vmul.f32 %v2362, %v2361
        %v2364 = vmul.f32 0.5, %v2363
        %v2365 = vsub.f32 1.5, %v2364
        %v2366 = vmul.f32 %v2361, %v2365
        %vm2367 = vweird.f32 %v2273
        %vm2368 = vweird.f32 %v2361
        %vm2369 = vmor %vm2367, %vm2368
        %v2370 = vsel %vm2369, %v2361, %v2366
        %v2371 = vrsqrt.pop %v2274
        %v2372 = vmul.f32 %v2371, %v2274
        %v2373 = vmul.f32 %v2372, %v2371
        %v2374 = vmul.f32 0.5, %v2373
        %v2375 = vsub.f32 1.5, %v2374
        %v2376 = vmul.f32 %v2371, %v2375
        %vm2377 = vweird.f32 %v2274
        %vm2378 = vweird.f32 %v2371
        %vm2379 = vmor %vm2377, %vm2378
        %v2380 = vsel %vm2379, %v2371, %v2376
        %v2381 = vrsqrt.pop %v2275
        %v2382 = vmul.f32 %v2381, %v2275
        %v2383 = vmul.f32 %v2382, %v2381
        %v2384 = vmul.f32 0.5, %v2383
        %v2385 = vsub.f32 1.5, %v2384
        %v2386 = vmul.f32 %v2381, %v2385
        %vm2387 = vweird.f32 %v2275
        %vm2388 = vweird.f32 %v2381
        %vm2389 = vmor %vm2387, %vm2388
        %v2390 = vsel %vm2389, %v2381, %v2386
        %v2391 = vrsqrt.pop %v2276
        %v2392 = vmul.f32 %v2391, %v2276
        %v2393 = vmul.f32 %v2392, %v2391
        %v2394 = vmul.f32 0.5, %v2393
        %v2395 = vsub.f32 1.5, %v2394
        %v2396 = vmul.f32 %v2391, %v2395
        %vm2397 = vweird.f32 %v2276
        %vm2398 = vweird.f32 %v2391
        %vm2399 = vmor %vm2397, %vm2398
        %v2400 = vsel %vm2399, %v2391, %v2396
        %v2401 = vrsqrt.pop %v2277
        %v2402 = vmul.f32 %v2401, %v2277
        %v2403 = vmul.f32 %v2402, %v2401
        %v2404 = vmul.f32 0.5, %v2403
        %v2405 = vsub.f32 1.5, %v2404
        %v2406 = vmul.f32 %v2401, %v2405
        %vm2407 = vweird.f32 %v2277
        %vm2408 = vweird.f32 %v2401
        %vm2409 = vmor %vm2407, %vm2408
        %v2410 = vsel %vm2409, %v2401, %v2406
        %v2411 = vrsqrt.pop %v2278
        %v2412 = vmul.f32 %v2411, %v2278
        %v2413 = vmul.f32 %v2412, %v2411
        %v2414 = vmul.f32 0.5, %v2413
        %v2415 = vsub.f32 1.5, %v2414
        %v2416 = vmul.f32 %v2411, %v2415
        %vm2417 = vweird.f32 %v2278
        %vm2418 = vweird.f32 %v2411
        %vm2419 = vmor %vm2417, %vm2418
        %v2420 = vsel %vm2419, %v2411, %v2416
        %v2421 = vrsqrt.pop %v2279
        %v2422 = vmul.f32 %v2421, %v2279
        %v2423 = vmul.f32 %v2422, %v2421
        %v2424 = vmul.f32 0.5, %v2423
        %v2425 = vsub.f32 1.5, %v2424
        %v2426 = vmul.f32 %v2421, %v2425
        %vm2427 = vweird.f32 %v2279
        %vm2428 = vweird.f32 %v2421
        %vm2429 = vmor %vm2427, %vm2428
        %v2430 = vsel %vm2429, %v2421, %v2426
        %v2431 = vrsqrt.pop %v2280
        %v2432 = vmul.f32 %v2431, %v2280
        %v2433 = vmul.f32 %v2432, %v2431
        %v2434 = vmul.f32 0.5, %v2433
        %v2435 = vsub.f32 1.5, %v2434
        %v2436 = vmul.f32 %v2431, %v2435
        %vm2437 = vweird.f32 %v2280
        %vm2438 = vweird.f32 %v2431
        %vm2439 = vmor %vm2437, %vm2438
        %v2440 = vsel %vm2439, %v2431, %v2436
        %v2441 = vmul.f32 %v2185, %v2290
        %v2442 = vmul.f32 %v2186, %v2300
        %v2443 = vmul.f32 %v2187, %v2310
        %v2444 = vmul.f32 %v2188, %v2320
        %v2445 = vmul.f32 %v2189, %v2330
        %v2446 = vmul.f32 %v2190, %v2340
        %v2447 = vmul.f32 %v2191, %v2350
        %v2448 = vmul.f32 %v2192, %v2360
        %v2449 = vmul.f32 %v2193, %v2370
        %v2450 = vmul.f32 %v2194, %v2380
        %v2451 = vmul.f32 %v2195, %v2390
        %v2452 = vmul.f32 %v2196, %v2400
        %v2453 = vmul.f32 %v2197, %v2410
        %v2454 = vmul.f32 %v2198, %v2420
        %v2455 = vmul.f32 %v2199, %v2430
        %v2456 = vmul.f32 %v2200, %v2440
        %v2457 = vld [vmem:[%s363 + $0x4] sm:$0x1]
        %v2458 = vperm.slane %v2457, 0
        %v2459 = vmul.f32 %v2441, %v2458
        %v2460 = vmul.f32 %v2442, %v2458
        %v2461 = vmul.f32 %v2443, %v2458
        %v2462 = vmul.f32 %v2444, %v2458
        %v2463 = vmul.f32 %v2445, %v2458
        %v2464 = vmul.f32 %v2446, %v2458
        %v2465 = vmul.f32 %v2447, %v2458
        %v2466 = vmul.f32 %v2448, %v2458
        %v2467 = vmul.f32 %v2449, %v2458
        %v2468 = vmul.f32 %v2450, %v2458
        %v2469 = vmul.f32 %v2451, %v2458
        %v2470 = vmul.f32 %v2452, %v2458
        %v2471 = vmul.f32 %v2453, %v2458
        %v2472 = vmul.f32 %v2454, %v2458
        %v2473 = vmul.f32 %v2455, %v2458
        %v2474 = vmul.f32 %v2456, %v2458
        %v2475 = vld [vmem:[%s363 + $0x5] sm:$0x1]
        %v2476 = vperm.slane %v2475, 0
        %v2477 = vadd.f32 %v2459, %v2476
        %v2478 = vadd.f32 %v2460, %v2476
        %v2479 = vadd.f32 %v2461, %v2476
        %v2480 = vadd.f32 %v2462, %v2476
        %v2481 = vadd.f32 %v2463, %v2476
        %v2482 = vadd.f32 %v2464, %v2476
        %v2483 = vadd.f32 %v2465, %v2476
        %v2484 = vadd.f32 %v2466, %v2476
        %v2485 = vadd.f32 %v2467, %v2476
        %v2486 = vadd.f32 %v2468, %v2476
        %v2487 = vadd.f32 %v2469, %v2476
        %v2488 = vadd.f32 %v2470, %v2476
        %v2489 = vadd.f32 %v2471, %v2476
        %v2490 = vadd.f32 %v2472, %v2476
        %v2491 = vadd.f32 %v2473, %v2476
        %v2492 = vadd.f32 %v2474, %v2476
        %v2493 = vadd.f32 %v2477, %v442
        %v2494 = vadd.f32 %v2478, %v443
        %v2495 = vadd.f32 %v2479, %v444
        %v2496 = vadd.f32 %v2480, %v445
        %v2497 = vadd.f32 %v2481, %v446
        %v2498 = vadd.f32 %v2482, %v447
        %v2499 = vadd.f32 %v2483, %v448
        %v2500 = vadd.f32 %v2484, %v449
        %v2501 = vadd.f32 %v2485, %v450
        %v2502 = vadd.f32 %v2486, %v451
        %v2503 = vadd.f32 %v2487, %v452
        %v2504 = vadd.f32 %v2488, %v453
        %v2505 = vadd.f32 %v2489, %v454
        %v2506 = vadd.f32 %v2490, %v455
        %v2507 = vadd.f32 %v2491, %v456
        %v2508 = vadd.f32 %v2492, %v457
        %2509 = vst [vmem:[%s8] sm:$0xff] %v2493
        %2510 = vst [vmem:[%s8 + $0x8] sm:$0xff] %v2494
        %2511 = vst [vmem:[%s8 + $0x10] sm:$0xff] %v2495
        %2512 = vst [vmem:[%s8 + $0x18] sm:$0xff] %v2496
        %2513 = vst [vmem:[%s8 + $0x20] sm:$0xff] %v2497
        %2514 = vst [vmem:[%s8 + $0x28] sm:$0xff] %v2498
        %2515 = vst [vmem:[%s8 + $0x30] sm:$0xff] %v2499
        %2516 = vst [vmem:[%s8 + $0x38] sm:$0xff] %v2500
        %2517 = vst [vmem:[%s8 + $0x40] sm:$0xff] %v2501
        %2518 = vst [vmem:[%s8 + $0x48] sm:$0xff] %v2502
        %2519 = vst [vmem:[%s8 + $0x50] sm:$0xff] %v2503
        %2520 = vst [vmem:[%s8 + $0x58] sm:$0xff] %v2504
        %2521 = vst [vmem:[%s8 + $0x60] sm:$0xff] %v2505
        %2522 = vst [vmem:[%s8 + $0x68] sm:$0xff] %v2506
        %2523 = vst [vmem:[%s8 + $0x70] sm:$0xff] %v2507
        %2524 = vst [vmem:[%s8 + $0x78] sm:$0xff] %v2508
        // Predicated region
        $region57: #{fv_mgn_forward.6} parent=51 // pred_check
          %p2525 = pneg %p223
        $region58: #{fv_mgn_forward.6} parent=51 // pred_check_branch
          %2527 = sbr.rel (%p2525) target = $region60
        $region59: #{fv_mgn_forward.6} parent=51 // pred_region
          _
        $region60: #{fv_mgn_forward.6} parent=51 // pred_fallthru
          _
        // Predicated region
        $region61: #{fv_mgn_forward.6} parent=51 // pred_check
          %p2528 = pneg %p244
        $region62: #{fv_mgn_forward.6} parent=51 // pred_check_branch
          %2530 = sbr.rel (%p2528) target = $region64
        $region63: #{fv_mgn_forward.6} parent=51 // pred_region
          %2532 = vsyncadd [#allocation3], 0
          %s2533 = sshll.u32 [#allocation2], 4
          %s2534 = int_to_ptr.vmem [resolvable:$true] %s2533
          %s2535 = sshll.u32 %s9, 4
          %s2536 = int_to_ptr.hbm [resolvable:$true] %s2535
          %2541 = dma.vmem_to_hbm [thread:$0]  %s2534, 2048, %s2536, [#allocation3], 128, 128, 8
        $region64: #{fv_mgn_forward.6} parent=51 // pred_fallthru
          _
        // Predicated region
        $region65: #{fv_mgn_forward.6} parent=51 // pred_check
          %p2542 = pneg %p223
        $region66: #{fv_mgn_forward.6} parent=51 // pred_check_branch
          %2544 = sbr.rel (%p2542) target = $region68
        $region67: #{fv_mgn_forward.6} parent=51 // pred_region
          _
        $region68: #{fv_mgn_forward.6} parent=51 // pred_fallthru
          _
        // Predicated region
        $region69: #{fv_mgn_forward.6} parent=51 // pred_check
          %p2545 = pneg %p244
        $region70: #{fv_mgn_forward.6} parent=51 // pred_check_branch
          %2547 = sbr.rel (%p2545) target = $region72
        $region71: #{fv_mgn_forward.6} parent=51 // pred_region
          %2549 = dma.done [#allocation3], 2048
        $region72: #{fv_mgn_forward.6} parent=51 // pred_fallthru
          _
      $region52: #{fv_mgn_forward.6} parent=5 // pred_fallthru
        _
      %p2550 = scmp.le.s32.totalorder 2, %s17
      // Predicated region
      $region73: #{fv_mgn_forward.6} parent=5 // pred_check
        %p2551 = pneg %p2550
      $region74: #{fv_mgn_forward.6} parent=5 // pred_check_branch
        %2553 = sbr.rel (%p2551) target = $region76
      $region75: #{fv_mgn_forward.6} parent=5 // pred_region
        %s2554 = ssub.s32 %s17, 2
      $region76: #{fv_mgn_forward.6} parent=5 // pred_fallthru
        _
    $region6: #{fv_mgn_forward.6} parent=1 // loop_footer
      %s21 = sadd.s32 1, %s17
    $region7: #{fv_mgn_forward.6} parent=1 // loop_footer_branch
      %16 = sbr.rel target = $region3
    $region8: #{fv_mgn_forward.6} parent=1 // loop_exit
      _
    %2555 = vsyncpa [#allocation3], 1
    %s2556 = scalar_lea.sflag [#allocation3], 1
    %2557 = vsyncpa %s2556, 1

</llo_original>
